<compile_context>
chip_gen: v5e
topology: v5e:2x2
jax: 0.10.0
libtpu: 0.0.40
codegen_flags: <defaults>
</compile_context>

<pallas_src>
import functools

import numpy as np
import jax
import jax.numpy as jnp
from jax import lax
from jax.experimental import pallas as pl
from jax.experimental.pallas import tpu as pltpu

NUM_CLASSES = 2          # len(INSTRUMENT_MAP)
BN_EPS = 1e-5


# ----------------------------- Pallas kernel ------------------------------- #

def simple_cnn_kernel(x_ref, w1_ref, s1_ref, b1_ref,
                      w2_ref, s2_ref, b2_ref,
                      w3_ref, s3_ref, b3_ref,
                      p2_ref, p3_ref, gap_ref, fcw_ref, fcb_ref,
                      o_ref, *,
                      wp1, n_y1, n_pool1,
                      wp2, n_y2, n_pool2,
                      wp3, n_y3):
    """Full SimpleCNN forward for one image; everything stays in VMEM.

    Activations use the flat padded layout: row r = h_pad*(W+2) + w_pad of the
    zero-padded image.  The conv output for pixel (h, w) lands at flat row
    h*(W+2) + w and reads input rows r + kh*(W+2) + kw for the 9 taps.
    """
    f32 = jnp.float32

    def conv_taps_fma(x, w_ref_, wp, n_y):
        # Cin == 1: 9 VPU broadcast FMAs, (n_y,1) slice * (1,Cout) tap.
        acc = jnp.zeros((n_y, w_ref_.shape[-1]), f32)
        for kh in range(3):
            for kw in range(3):
                d = kh * wp + kw
                acc = acc + x[d:d + n_y, :] * w_ref_[kh * 3 + kw]
        return acc

    def conv_taps_mxu(x, w_ref_, wp, n_y):
        # 9 accumulated MXU matmuls with f32 accumulation.
        acc = jnp.zeros((n_y, w_ref_.shape[-1]), f32)
        for kh in range(3):
            for kw in range(3):
                d = kh * wp + kw
                acc = acc + jnp.dot(x[d:d + n_y, :], w_ref_[kh * 3 + kw],
                                    preferred_element_type=f32)
        return acc

    def bn_relu(acc, s_ref, b_ref):
        return jnp.maximum(acc * s_ref[...] + b_ref[...], 0.0)

    def maxpool(y, wp, n_pool):
        # 2x2/2 pool in flat coords: window of row r is {r, r+1, r+wp, r+wp+1}.
        return jnp.maximum(
            jnp.maximum(y[0:n_pool, :], y[1:n_pool + 1, :]),
            jnp.maximum(y[wp:wp + n_pool, :], y[wp + 1:wp + 1 + n_pool, :]))

    # Stage 1: conv1(1->16) + BN + ReLU + maxpool; compact + re-pad via P2.
    x1 = x_ref[0]                                    # (hp1*wp1, 1) zero-padded
    y1 = bn_relu(conv_taps_fma(x1, w1_ref, wp1, n_y1), s1_ref, b1_ref)
    x2 = jnp.dot(p2_ref[...], maxpool(y1, wp1, n_pool1),
                 preferred_element_type=f32)         # (hp2*wp2, 16) zero-padded

    # Stage 2: conv2(16->32) + BN + ReLU + maxpool; compact + re-pad via P3.
    y2 = bn_relu(conv_taps_mxu(x2, w2_ref, wp2, n_y2), s2_ref, b2_ref)
    x3 = jnp.dot(p3_ref[...], maxpool(y2, wp2, n_pool2),
                 preferred_element_type=f32)         # (hp3*wp3, 32) zero-padded

    # Stage 3: conv3(32->64) + BN + ReLU + masked global-avg-pool + fc.
    y3 = bn_relu(conv_taps_mxu(x3, w3_ref, wp3, n_y3), s3_ref, b3_ref)
    mean = jnp.dot(gap_ref[...], y3, preferred_element_type=f32)    # (1, 64)
    o_ref[0] = jnp.dot(mean, fcw_ref[...],
                       preferred_element_type=f32) + fcb_ref[...]   # (1, NC)


# ------------------------------ JAX glue ----------------------------------- #

def _fold_conv_bn(conv_w, conv_b, gamma, beta, mean, var, eps=BN_EPS):
    """Fold conv bias + inference BN into per-channel scale/bias and reshape
    the conv weight (Cout,Cin,3,3) -> (9, Cin, Cout) per-tap matrices."""
    cout, cin = conv_w.shape[0], conv_w.shape[1]
    scale = gamma / jnp.sqrt(var + eps)
    bias = beta + scale * (conv_b - mean)
    w_taps = jnp.transpose(conv_w, (2, 3, 1, 0)).reshape(9, cin, cout)
    return w_taps, scale.reshape(1, cout), bias.reshape(1, cout)


def _pool_scatter(h_out, w_out, wp_in, wp_out):
    """0/1 matrix taking pooled values (living at flat rows 2*ph*wp_in + 2*pw)
    to the next stage's zero-padded flat row (ph+1)*wp_out + (pw+1)."""
    n_in = 2 * (h_out - 1) * wp_in + 2 * (w_out - 1) + 1
    p = np.zeros(((h_out + 2) * wp_out, n_in), np.float32)
    for ph in range(h_out):
        for pw in range(w_out):
            p[(ph + 1) * wp_out + (pw + 1), 2 * ph * wp_in + 2 * pw] = 1.0
    return jnp.asarray(p)


def _gap_mask(h, w, wp, scale):
    """(1, n_y) row vector with `scale` at the valid conv-output rows h*wp+w."""
    n_y = (h - 1) * wp + w
    g = np.zeros((1, n_y), np.float32)
    for hh in range(h):
        for ww in range(w):
            g[0, hh * wp + ww] = scale
    return jnp.asarray(g)


def simple_cnn_forward(x, params):
    """x: (B, H, W) float32 -> (B, NUM_CLASSES) logits (SimpleCNN.forward).
    H and W must be multiples of 4 (two fused MaxPool2d(2, 2) stages)."""
    B, H, W = x.shape
    assert H % 4 == 0 and W % 4 == 0, "H, W must be multiples of 4"

    H2, W2 = H // 2, W // 2
    H3, W3 = H2 // 2, W2 // 2
    wp1, wp2, wp3 = W + 2, W2 + 2, W3 + 2
    n1 = (H + 2) * wp1                          # padded stage-1 rows per image
    n_y1 = (2 * H2 - 1) * wp1 + 2 * W2          # conv1 rows needed by pool1
    n_pool1 = 2 * (H2 - 1) * wp1 + 2 * (W2 - 1) + 1
    n_y2 = (2 * H3 - 1) * wp2 + 2 * W3
    n_pool2 = 2 * (H3 - 1) * wp2 + 2 * (W3 - 1) + 1
    n_y3 = (H3 - 1) * wp3 + W3

    # Fold inference BatchNorm + conv bias; (Cout,Cin,3,3) -> (9,Cin,Cout).
    w1, s1, b1 = _fold_conv_bn(*params['conv1'], *params['bn1'])
    w2, s2, b2 = _fold_conv_bn(*params['conv2'], *params['bn2'])
    w3, s3, b3 = _fold_conv_bn(*params['conv3'], *params['bn3'])

    # Constant pooling-compaction / GAP-mask matrices (tiny, fetched once).
    p2 = _pool_scatter(H2, W2, wp1, wp2)               # (hp2*wp2, n_pool1)
    p3 = _pool_scatter(H3, W3, wp2, wp3)               # (hp3*wp3, n_pool2)
    gap = _gap_mask(H3, W3, wp3, 1.0 / (H3 * W3))      # (1, n_y3)
    fcw = params['fc_w'].T                             # (64, NUM_CLASSES)
    fcb = params['fc_b'].reshape(1, NUM_CLASSES)

    # Zero-pad the network input by 1 and flatten to (B, (H+2)*(W+2), 1).
    x_flat = jnp.pad(x.astype(jnp.float32)[..., None],
                     ((0, 0), (1, 1), (1, 1), (0, 0))).reshape(B, n1, 1)

    kernel = functools.partial(
        simple_cnn_kernel,
        wp1=wp1, n_y1=n_y1, n_pool1=n_pool1,
        wp2=wp2, n_y2=n_y2, n_pool2=n_pool2,
        wp3=wp3, n_y3=n_y3)

    const2 = lambda b: (0, 0)
    const3 = lambda b: (0, 0, 0)
    out = pl.pallas_call(
        kernel,
        out_shape=jax.ShapeDtypeStruct((B, 1, NUM_CLASSES), jnp.float32),
        grid=(B,),
        in_specs=[
            pl.BlockSpec((1, n1, 1), lambda b: (b, 0, 0)),    # image b
            pl.BlockSpec(w1.shape, const3),                   # conv1 taps
            pl.BlockSpec(s1.shape, const2), pl.BlockSpec(b1.shape, const2),
            pl.BlockSpec(w2.shape, const3),                   # conv2 taps
            pl.BlockSpec(s2.shape, const2), pl.BlockSpec(b2.shape, const2),
            pl.BlockSpec(w3.shape, const3),                   # conv3 taps
            pl.BlockSpec(s3.shape, const2), pl.BlockSpec(b3.shape, const2),
            pl.BlockSpec(p2.shape, const2),                   # pool1 scatter
            pl.BlockSpec(p3.shape, const2),                   # pool2 scatter
            pl.BlockSpec(gap.shape, const2),                  # GAP mask row
            pl.BlockSpec(fcw.shape, const2),                  # fc weight^T
            pl.BlockSpec(fcb.shape, const2),                  # fc bias
        ],
        out_specs=pl.BlockSpec((1, 1, NUM_CLASSES), lambda b: (b, 0, 0)),
        compiler_params=pltpu.CompilerParams(
            dimension_semantics=("parallel",)),
    )(x_flat, w1, s1, b1, w2, s2, b2, w3, s3, b3, p2, p3, gap, fcw, fcb)
    return out[:, 0, :]


# --------------------------- parameters & reference ------------------------ #

def init_params(key):
    def conv_p(k, cin, cout):
        k1, k2 = jax.random.split(k)
        w = jax.random.normal(k1, (cout, cin, 3, 3), jnp.float32) / jnp.sqrt(9.0 * cin)
        b = 0.1 * jax.random.normal(k2, (cout,), jnp.float32)
        return w, b

    def bn_p(k, c):
        k1, k2, k3, k4 = jax.random.split(k, 4)
        gamma = 1.0 + 0.1 * jax.random.normal(k1, (c,), jnp.float32)
        beta = 0.1 * jax.random.normal(k2, (c,), jnp.float32)
        mean = 0.1 * jax.random.normal(k3, (c,), jnp.float32)
        var = 0.5 + jax.random.uniform(k4, (c,), jnp.float32)
        return gamma, beta, mean, var

    ks = jax.random.split(key, 8)
    return {
        'conv1': conv_p(ks[0], 1, 16),  'bn1': bn_p(ks[1], 16),
        'conv2': conv_p(ks[2], 16, 32), 'bn2': bn_p(ks[3], 32),
        'conv3': conv_p(ks[4], 32, 64), 'bn3': bn_p(ks[5], 64),
        'fc_w': jax.random.normal(ks[6], (NUM_CLASSES, 64), jnp.float32) / 8.0,
        'fc_b': 0.1 * jax.random.normal(ks[7], (NUM_CLASSES,), jnp.float32),
    }


def reference_forward(x, params):
    """Pure-JAX reference with lax.conv for correctness checking."""
    hi = lax.Precision.HIGHEST
    h = x[..., None].astype(jnp.float32)

    def block(h, conv, bn, pool):
        cw, cb = conv
        g, bt, m, v = bn
        w_hwio = jnp.transpose(cw, (2, 3, 1, 0))
        y = lax.conv_general_dilated(h, w_hwio, (1, 1), 'SAME',
                                     dimension_numbers=('NHWC', 'HWIO', 'NHWC'),
                                     precision=hi)
        y = y + cb
        y = (y - m) / jnp.sqrt(v + BN_EPS) * g + bt
        y = jnp.maximum(y, 0.0)
        if pool:
            B, H, W, C = y.shape
            y = y.reshape(B, H // 2, 2, W // 2, 2, C).max(axis=(2, 4))
        return y

    h = block(h, params['conv1'], params['bn1'], True)
    h = block(h, params['conv2'], params['bn2'], True)
    h = block(h, params['conv3'], params['bn3'], False)
    h = h.mean(axis=(1, 2))
    return jnp.dot(h, params['fc_w'].T, precision=hi) + params['fc_b']


if __name__ == "__main__":
    key = jax.random.PRNGKey(0)
    kx, kp = jax.random.split(key)
    B, H, W = 2, 16, 16
    x = jax.random.normal(kx, (B, H, W), jnp.float32)
    params = init_params(kp)

    out = jax.jit(simple_cnn_forward)(x, params)
    out = jax.block_until_ready(out)

    ref = reference_forward(x, params)
    assert out.shape == (B, NUM_CLASSES), out.shape
    # f32 everywhere; tolerance leaves headroom for MXU f32-pass rounding.
    assert jnp.allclose(out, ref, atol=5e-3, rtol=5e-3), (out, ref)
    print("KERNEL_OK")
</pallas_src>

<mosaic_0001>
module attributes {stable_mosaic.version = 11 : i64} {
  func.func @simple_cnn_kernel(%arg0: i32, %arg1: memref<1x324x1xf32, #tpu.memory_space<vmem>>, %arg2: memref<9x1x16xf32, #tpu.memory_space<vmem>>, %arg3: memref<1x16xf32, #tpu.memory_space<vmem>>, %arg4: memref<1x16xf32, #tpu.memory_space<vmem>>, %arg5: memref<9x16x32xf32, #tpu.memory_space<vmem>>, %arg6: memref<1x32xf32, #tpu.memory_space<vmem>>, %arg7: memref<1x32xf32, #tpu.memory_space<vmem>>, %arg8: memref<9x32x64xf32, #tpu.memory_space<vmem>>, %arg9: memref<1x64xf32, #tpu.memory_space<vmem>>, %arg10: memref<1x64xf32, #tpu.memory_space<vmem>>, %arg11: memref<100x267xf32, #tpu.memory_space<vmem>>, %arg12: memref<36x67xf32, #tpu.memory_space<vmem>>, %arg13: memref<1x22xf32, #tpu.memory_space<vmem>>, %arg14: memref<64x2xf32, #tpu.memory_space<vmem>>, %arg15: memref<1x2xf32, #tpu.memory_space<vmem>>, %arg16: memref<1x1x2xf32, #tpu.memory_space<vmem>>) attributes {dimension_semantics = [#tpu.dimension_semantics<parallel>], iteration_bounds = array<i64: 2>, scalar_prefetch = 0 : i64, scratch_operands = 0 : i64, tpu.core_type = #tpu.core_type<tc>, window_params = [{transform_indices = @transform_0, window_bounds = array<i64: 1, 324, 1>}, {pipeline_mode = #tpu.pipeline_mode<synchronous>, transform_indices = @transform_1, window_bounds = array<i64: 9, 1, 16>}, {pipeline_mode = #tpu.pipeline_mode<synchronous>, transform_indices = @transform_2, window_bounds = array<i64: 1, 16>}, {pipeline_mode = #tpu.pipeline_mode<synchronous>, transform_indices = @transform_3, window_bounds = array<i64: 1, 16>}, {pipeline_mode = #tpu.pipeline_mode<synchronous>, transform_indices = @transform_4, window_bounds = array<i64: 9, 16, 32>}, {pipeline_mode = #tpu.pipeline_mode<synchronous>, transform_indices = @transform_5, window_bounds = array<i64: 1, 32>}, {pipeline_mode = #tpu.pipeline_mode<synchronous>, transform_indices = @transform_6, window_bounds = array<i64: 1, 32>}, {pipeline_mode = #tpu.pipeline_mode<synchronous>, transform_indices = @transform_7, window_bounds = array<i64: 9, 32, 64>}, {pipeline_mode = #tpu.pipeline_mode<synchronous>, transform_indices = @transform_8, window_bounds = array<i64: 1, 64>}, {pipeline_mode = #tpu.pipeline_mode<synchronous>, transform_indices = @transform_9, window_bounds = array<i64: 1, 64>}, {pipeline_mode = #tpu.pipeline_mode<synchronous>, transform_indices = @transform_10, window_bounds = array<i64: 100, 267>}, {pipeline_mode = #tpu.pipeline_mode<synchronous>, transform_indices = @transform_11, window_bounds = array<i64: 36, 67>}, {pipeline_mode = #tpu.pipeline_mode<synchronous>, transform_indices = @transform_12, window_bounds = array<i64: 1, 22>}, {pipeline_mode = #tpu.pipeline_mode<synchronous>, transform_indices = @transform_13, window_bounds = array<i64: 64, 2>}, {pipeline_mode = #tpu.pipeline_mode<synchronous>, transform_indices = @transform_14, window_bounds = array<i64: 1, 2>}, {transform_indices = @transform_15, window_bounds = array<i64: 1, 1, 2>}]} {
    %c0 = arith.constant 0 : index
    %c0_0 = arith.constant 0 : index
    %c0_1 = arith.constant 0 : index
    %0 = vector.load %arg1[%c0, %c0_0, %c0_1] : memref<1x324x1xf32, #tpu.memory_space<vmem>>, vector<1x324x1xf32>
    %1 = vector.shape_cast %0 : vector<1x324x1xf32> to vector<324x1xf32>
    %cst = arith.constant 0.000000e+00 : f32
    %2 = vector.broadcast %cst : f32 to vector<286x16xf32>
    %3 = vector.extract_strided_slice %1 {offsets = [0, 0], sizes = [286, 1], strides = [1, 1]} : vector<324x1xf32> to vector<286x1xf32>
    %c0_2 = arith.constant 0 : index
    %c0_3 = arith.constant 0 : index
    %c0_4 = arith.constant 0 : index
    %4 = vector.load %arg2[%c0_2, %c0_3, %c0_4] : memref<9x1x16xf32, #tpu.memory_space<vmem>>, vector<1x1x16xf32>
    %5 = vector.shape_cast %4 : vector<1x1x16xf32> to vector<1x16xf32>
    %6 = vector.broadcast %3 : vector<286x1xf32> to vector<286x16xf32>
    %7 = vector.broadcast %5 : vector<1x16xf32> to vector<286x16xf32>
    %8 = arith.mulf %6, %7 : vector<286x16xf32>
    %9 = arith.addf %2, %8 : vector<286x16xf32>
    %10 = vector.extract_strided_slice %1 {offsets = [1, 0], sizes = [286, 1], strides = [1, 1]} : vector<324x1xf32> to vector<286x1xf32>
    %c1 = arith.constant 1 : index
    %c0_5 = arith.constant 0 : index
    %c0_6 = arith.constant 0 : index
    %11 = vector.load %arg2[%c1, %c0_5, %c0_6] : memref<9x1x16xf32, #tpu.memory_space<vmem>>, vector<1x1x16xf32>
    %12 = vector.shape_cast %11 : vector<1x1x16xf32> to vector<1x16xf32>
    %13 = vector.broadcast %10 : vector<286x1xf32> to vector<286x16xf32>
    %14 = vector.broadcast %12 : vector<1x16xf32> to vector<286x16xf32>
    %15 = arith.mulf %13, %14 : vector<286x16xf32>
    %16 = arith.addf %9, %15 : vector<286x16xf32>
    %17 = vector.extract_strided_slice %1 {offsets = [2, 0], sizes = [286, 1], strides = [1, 1]} : vector<324x1xf32> to vector<286x1xf32>
    %c2 = arith.constant 2 : index
    %c0_7 = arith.constant 0 : index
    %c0_8 = arith.constant 0 : index
    %18 = vector.load %arg2[%c2, %c0_7, %c0_8] : memref<9x1x16xf32, #tpu.memory_space<vmem>>, vector<1x1x16xf32>
    %19 = vector.shape_cast %18 : vector<1x1x16xf32> to vector<1x16xf32>
    %20 = vector.broadcast %17 : vector<286x1xf32> to vector<286x16xf32>
    %21 = vector.broadcast %19 : vector<1x16xf32> to vector<286x16xf32>
    %22 = arith.mulf %20, %21 : vector<286x16xf32>
    %23 = arith.addf %16, %22 : vector<286x16xf32>
    %24 = vector.extract_strided_slice %1 {offsets = [18, 0], sizes = [286, 1], strides = [1, 1]} : vector<324x1xf32> to vector<286x1xf32>
    %c3 = arith.constant 3 : index
    %c0_9 = arith.constant 0 : index
    %c0_10 = arith.constant 0 : index
    %25 = vector.load %arg2[%c3, %c0_9, %c0_10] : memref<9x1x16xf32, #tpu.memory_space<vmem>>, vector<1x1x16xf32>
    %26 = vector.shape_cast %25 : vector<1x1x16xf32> to vector<1x16xf32>
    %27 = vector.broadcast %24 : vector<286x1xf32> to vector<286x16xf32>
    %28 = vector.broadcast %26 : vector<1x16xf32> to vector<286x16xf32>
    %29 = arith.mulf %27, %28 : vector<286x16xf32>
    %30 = arith.addf %23, %29 : vector<286x16xf32>
    %31 = vector.extract_strided_slice %1 {offsets = [19, 0], sizes = [286, 1], strides = [1, 1]} : vector<324x1xf32> to vector<286x1xf32>
    %c4 = arith.constant 4 : index
    %c0_11 = arith.constant 0 : index
    %c0_12 = arith.constant 0 : index
    %32 = vector.load %arg2[%c4, %c0_11, %c0_12] : memref<9x1x16xf32, #tpu.memory_space<vmem>>, vector<1x1x16xf32>
    %33 = vector.shape_cast %32 : vector<1x1x16xf32> to vector<1x16xf32>
    %34 = vector.broadcast %31 : vector<286x1xf32> to vector<286x16xf32>
    %35 = vector.broadcast %33 : vector<1x16xf32> to vector<286x16xf32>
    %36 = arith.mulf %34, %35 : vector<286x16xf32>
    %37 = arith.addf %30, %36 : vector<286x16xf32>
    %38 = vector.extract_strided_slice %1 {offsets = [20, 0], sizes = [286, 1], strides = [1, 1]} : vector<324x1xf32> to vector<286x1xf32>
    %c5 = arith.constant 5 : index
    %c0_13 = arith.constant 0 : index
    %c0_14 = arith.constant 0 : index
    %39 = vector.load %arg2[%c5, %c0_13, %c0_14] : memref<9x1x16xf32, #tpu.memory_space<vmem>>, vector<1x1x16xf32>
    %40 = vector.shape_cast %39 : vector<1x1x16xf32> to vector<1x16xf32>
    %41 = vector.broadcast %38 : vector<286x1xf32> to vector<286x16xf32>
    %42 = vector.broadcast %40 : vector<1x16xf32> to vector<286x16xf32>
    %43 = arith.mulf %41, %42 : vector<286x16xf32>
    %44 = arith.addf %37, %43 : vector<286x16xf32>
    %45 = vector.extract_strided_slice %1 {offsets = [36, 0], sizes = [286, 1], strides = [1, 1]} : vector<324x1xf32> to vector<286x1xf32>
    %c6 = arith.constant 6 : index
    %c0_15 = arith.constant 0 : index
    %c0_16 = arith.constant 0 : index
    %46 = vector.load %arg2[%c6, %c0_15, %c0_16] : memref<9x1x16xf32, #tpu.memory_space<vmem>>, vector<1x1x16xf32>
    %47 = vector.shape_cast %46 : vector<1x1x16xf32> to vector<1x16xf32>
    %48 = vector.broadcast %45 : vector<286x1xf32> to vector<286x16xf32>
    %49 = vector.broadcast %47 : vector<1x16xf32> to vector<286x16xf32>
    %50 = arith.mulf %48, %49 : vector<286x16xf32>
    %51 = arith.addf %44, %50 : vector<286x16xf32>
    %52 = vector.extract_strided_slice %1 {offsets = [37, 0], sizes = [286, 1], strides = [1, 1]} : vector<324x1xf32> to vector<286x1xf32>
    %c7 = arith.constant 7 : index
    %c0_17 = arith.constant 0 : index
    %c0_18 = arith.constant 0 : index
    %53 = vector.load %arg2[%c7, %c0_17, %c0_18] : memref<9x1x16xf32, #tpu.memory_space<vmem>>, vector<1x1x16xf32>
    %54 = vector.shape_cast %53 : vector<1x1x16xf32> to vector<1x16xf32>
    %55 = vector.broadcast %52 : vector<286x1xf32> to vector<286x16xf32>
    %56 = vector.broadcast %54 : vector<1x16xf32> to vector<286x16xf32>
    %57 = arith.mulf %55, %56 : vector<286x16xf32>
    %58 = arith.addf %51, %57 : vector<286x16xf32>
    %59 = vector.extract_strided_slice %1 {offsets = [38, 0], sizes = [286, 1], strides = [1, 1]} : vector<324x1xf32> to vector<286x1xf32>
    %c8 = arith.constant 8 : index
    %c0_19 = arith.constant 0 : index
    %c0_20 = arith.constant 0 : index
    %60 = vector.load %arg2[%c8, %c0_19, %c0_20] : memref<9x1x16xf32, #tpu.memory_space<vmem>>, vector<1x1x16xf32>
    %61 = vector.shape_cast %60 : vector<1x1x16xf32> to vector<1x16xf32>
    %62 = vector.broadcast %59 : vector<286x1xf32> to vector<286x16xf32>
    %63 = vector.broadcast %61 : vector<1x16xf32> to vector<286x16xf32>
    %64 = arith.mulf %62, %63 : vector<286x16xf32>
    %65 = arith.addf %58, %64 : vector<286x16xf32>
    %c0_21 = arith.constant 0 : index
    %c0_22 = arith.constant 0 : index
    %66 = vector.load %arg3[%c0_21, %c0_22] : memref<1x16xf32, #tpu.memory_space<vmem>>, vector<1x16xf32>
    %67 = vector.broadcast %66 : vector<1x16xf32> to vector<286x16xf32>
    %68 = arith.mulf %65, %67 : vector<286x16xf32>
    %c0_23 = arith.constant 0 : index
    %c0_24 = arith.constant 0 : index
    %69 = vector.load %arg4[%c0_23, %c0_24] : memref<1x16xf32, #tpu.memory_space<vmem>>, vector<1x16xf32>
    %70 = vector.broadcast %69 : vector<1x16xf32> to vector<286x16xf32>
    %71 = arith.addf %68, %70 : vector<286x16xf32>
    %cst_25 = arith.constant 0.000000e+00 : f32
    %72 = vector.broadcast %cst_25 : f32 to vector<286x16xf32>
    %73 = arith.maximumf %71, %72 : vector<286x16xf32>
    %c0_26 = arith.constant 0 : index
    %c0_27 = arith.constant 0 : index
    %74 = vector.load %arg11[%c0_26, %c0_27] : memref<100x267xf32, #tpu.memory_space<vmem>>, vector<100x267xf32>
    %75 = vector.extract_strided_slice %73 {offsets = [0, 0], sizes = [267, 16], strides = [1, 1]} : vector<286x16xf32> to vector<267x16xf32>
    %76 = vector.extract_strided_slice %73 {offsets = [1, 0], sizes = [267, 16], strides = [1, 1]} : vector<286x16xf32> to vector<267x16xf32>
    %77 = arith.maximumf %75, %76 : vector<267x16xf32>
    %78 = vector.extract_strided_slice %73 {offsets = [18, 0], sizes = [267, 16], strides = [1, 1]} : vector<286x16xf32> to vector<267x16xf32>
    %79 = vector.extract_strided_slice %73 {offsets = [19, 0], sizes = [267, 16], strides = [1, 1]} : vector<286x16xf32> to vector<267x16xf32>
    %80 = arith.maximumf %78, %79 : vector<267x16xf32>
    %81 = arith.maximumf %77, %80 : vector<267x16xf32>
    %cst_28 = arith.constant dense<0.000000e+00> : vector<100x16xf32>
    %82 = tpu.matmul %74, %81, %cst_28 {dimension_numbers = #tpu.dot_dimension_numbers<[1], [0], [0], [1], [0, 0, 1, 1], [], []>} : vector<100x267xf32>, vector<267x16xf32>, vector<100x16xf32> -> vector<100x16xf32>
    %cst_29 = arith.constant 0.000000e+00 : f32
    %83 = vector.broadcast %cst_29 : f32 to vector<78x32xf32>
    %84 = vector.extract_strided_slice %82 {offsets = [0, 0], sizes = [78, 16], strides = [1, 1]} : vector<100x16xf32> to vector<78x16xf32>
    %c0_30 = arith.constant 0 : index
    %c0_31 = arith.constant 0 : index
    %c0_32 = arith.constant 0 : index
    %85 = vector.load %arg5[%c0_30, %c0_31, %c0_32] : memref<9x16x32xf32, #tpu.memory_space<vmem>>, vector<1x16x32xf32>
    %86 = vector.shape_cast %85 : vector<1x16x32xf32> to vector<16x32xf32>
    %cst_33 = arith.constant dense<0.000000e+00> : vector<78x32xf32>
    %87 = tpu.matmul %84, %86, %cst_33 {dimension_numbers = #tpu.dot_dimension_numbers<[1], [0], [0], [1], [0, 0, 1, 1], [], []>} : vector<78x16xf32>, vector<16x32xf32>, vector<78x32xf32> -> vector<78x32xf32>
    %88 = arith.addf %83, %87 : vector<78x32xf32>
    %89 = vector.extract_strided_slice %82 {offsets = [1, 0], sizes = [78, 16], strides = [1, 1]} : vector<100x16xf32> to vector<78x16xf32>
    %c1_34 = arith.constant 1 : index
    %c0_35 = arith.constant 0 : index
    %c0_36 = arith.constant 0 : index
    %90 = vector.load %arg5[%c1_34, %c0_35, %c0_36] : memref<9x16x32xf32, #tpu.memory_space<vmem>>, vector<1x16x32xf32>
    %91 = vector.shape_cast %90 : vector<1x16x32xf32> to vector<16x32xf32>
    %cst_37 = arith.constant dense<0.000000e+00> : vector<78x32xf32>
    %92 = tpu.matmul %89, %91, %cst_37 {dimension_numbers = #tpu.dot_dimension_numbers<[1], [0], [0], [1], [0, 0, 1, 1], [], []>} : vector<78x16xf32>, vector<16x32xf32>, vector<78x32xf32> -> vector<78x32xf32>
    %93 = arith.addf %88, %92 : vector<78x32xf32>
    %94 = vector.extract_strided_slice %82 {offsets = [2, 0], sizes = [78, 16], strides = [1, 1]} : vector<100x16xf32> to vector<78x16xf32>
    %c2_38 = arith.constant 2 : index
    %c0_39 = arith.constant 0 : index
    %c0_40 = arith.constant 0 : index
    %95 = vector.load %arg5[%c2_38, %c0_39, %c0_40] : memref<9x16x32xf32, #tpu.memory_space<vmem>>, vector<1x16x32xf32>
    %96 = vector.shape_cast %95 : vector<1x16x32xf32> to vector<16x32xf32>
    %cst_41 = arith.constant dense<0.000000e+00> : vector<78x32xf32>
    %97 = tpu.matmul %94, %96, %cst_41 {dimension_numbers = #tpu.dot_dimension_numbers<[1], [0], [0], [1], [0, 0, 1, 1], [], []>} : vector<78x16xf32>, vector<16x32xf32>, vector<78x32xf32> -> vector<78x32xf32>
    %98 = arith.addf %93, %97 : vector<78x32xf32>
    %99 = vector.extract_strided_slice %82 {offsets = [10, 0], sizes = [78, 16], strides = [1, 1]} : vector<100x16xf32> to vector<78x16xf32>
    %c3_42 = arith.constant 3 : index
    %c0_43 = arith.constant 0 : index
    %c0_44 = arith.constant 0 : index
    %100 = vector.load %arg5[%c3_42, %c0_43, %c0_44] : memref<9x16x32xf32, #tpu.memory_space<vmem>>, vector<1x16x32xf32>
    %101 = vector.shape_cast %100 : vector<1x16x32xf32> to vector<16x32xf32>
    %cst_45 = arith.constant dense<0.000000e+00> : vector<78x32xf32>
    %102 = tpu.matmul %99, %101, %cst_45 {dimension_numbers = #tpu.dot_dimension_numbers<[1], [0], [0], [1], [0, 0, 1, 1], [], []>} : vector<78x16xf32>, vector<16x32xf32>, vector<78x32xf32> -> vector<78x32xf32>
    %103 = arith.addf %98, %102 : vector<78x32xf32>
    %104 = vector.extract_strided_slice %82 {offsets = [11, 0], sizes = [78, 16], strides = [1, 1]} : vector<100x16xf32> to vector<78x16xf32>
    %c4_46 = arith.constant 4 : index
    %c0_47 = arith.constant 0 : index
    %c0_48 = arith.constant 0 : index
    %105 = vector.load %arg5[%c4_46, %c0_47, %c0_48] : memref<9x16x32xf32, #tpu.memory_space<vmem>>, vector<1x16x32xf32>
    %106 = vector.shape_cast %105 : vector<1x16x32xf32> to vector<16x32xf32>
    %cst_49 = arith.constant dense<0.000000e+00> : vector<78x32xf32>
    %107 = tpu.matmul %104, %106, %cst_49 {dimension_numbers = #tpu.dot_dimension_numbers<[1], [0], [0], [1], [0, 0, 1, 1], [], []>} : vector<78x16xf32>, vector<16x32xf32>, vector<78x32xf32> -> vector<78x32xf32>
    %108 = arith.addf %103, %107 : vector<78x32xf32>
    %109 = vector.extract_strided_slice %82 {offsets = [12, 0], sizes = [78, 16], strides = [1, 1]} : vector<100x16xf32> to vector<78x16xf32>
    %c5_50 = arith.constant 5 : index
    %c0_51 = arith.constant 0 : index
    %c0_52 = arith.constant 0 : index
    %110 = vector.load %arg5[%c5_50, %c0_51, %c0_52] : memref<9x16x32xf32, #tpu.memory_space<vmem>>, vector<1x16x32xf32>
    %111 = vector.shape_cast %110 : vector<1x16x32xf32> to vector<16x32xf32>
    %cst_53 = arith.constant dense<0.000000e+00> : vector<78x32xf32>
    %112 = tpu.matmul %109, %111, %cst_53 {dimension_numbers = #tpu.dot_dimension_numbers<[1], [0], [0], [1], [0, 0, 1, 1], [], []>} : vector<78x16xf32>, vector<16x32xf32>, vector<78x32xf32> -> vector<78x32xf32>
    %113 = arith.addf %108, %112 : vector<78x32xf32>
    %114 = vector.extract_strided_slice %82 {offsets = [20, 0], sizes = [78, 16], strides = [1, 1]} : vector<100x16xf32> to vector<78x16xf32>
    %c6_54 = arith.constant 6 : index
    %c0_55 = arith.constant 0 : index
    %c0_56 = arith.constant 0 : index
    %115 = vector.load %arg5[%c6_54, %c0_55, %c0_56] : memref<9x16x32xf32, #tpu.memory_space<vmem>>, vector<1x16x32xf32>
    %116 = vector.shape_cast %115 : vector<1x16x32xf32> to vector<16x32xf32>
    %cst_57 = arith.constant dense<0.000000e+00> : vector<78x32xf32>
    %117 = tpu.matmul %114, %116, %cst_57 {dimension_numbers = #tpu.dot_dimension_numbers<[1], [0], [0], [1], [0, 0, 1, 1], [], []>} : vector<78x16xf32>, vector<16x32xf32>, vector<78x32xf32> -> vector<78x32xf32>
    %118 = arith.addf %113, %117 : vector<78x32xf32>
    %119 = vector.extract_strided_slice %82 {offsets = [21, 0], sizes = [78, 16], strides = [1, 1]} : vector<100x16xf32> to vector<78x16xf32>
    %c7_58 = arith.constant 7 : index
    %c0_59 = arith.constant 0 : index
    %c0_60 = arith.constant 0 : index
    %120 = vector.load %arg5[%c7_58, %c0_59, %c0_60] : memref<9x16x32xf32, #tpu.memory_space<vmem>>, vector<1x16x32xf32>
    %121 = vector.shape_cast %120 : vector<1x16x32xf32> to vector<16x32xf32>
    %cst_61 = arith.constant dense<0.000000e+00> : vector<78x32xf32>
    %122 = tpu.matmul %119, %121, %cst_61 {dimension_numbers = #tpu.dot_dimension_numbers<[1], [0], [0], [1], [0, 0, 1, 1], [], []>} : vector<78x16xf32>, vector<16x32xf32>, vector<78x32xf32> -> vector<78x32xf32>
    %123 = arith.addf %118, %122 : vector<78x32xf32>
    %124 = vector.extract_strided_slice %82 {offsets = [22, 0], sizes = [78, 16], strides = [1, 1]} : vector<100x16xf32> to vector<78x16xf32>
    %c8_62 = arith.constant 8 : index
    %c0_63 = arith.constant 0 : index
    %c0_64 = arith.constant 0 : index
    %125 = vector.load %arg5[%c8_62, %c0_63, %c0_64] : memref<9x16x32xf32, #tpu.memory_space<vmem>>, vector<1x16x32xf32>
    %126 = vector.shape_cast %125 : vector<1x16x32xf32> to vector<16x32xf32>
    %cst_65 = arith.constant dense<0.000000e+00> : vector<78x32xf32>
    %127 = tpu.matmul %124, %126, %cst_65 {dimension_numbers = #tpu.dot_dimension_numbers<[1], [0], [0], [1], [0, 0, 1, 1], [], []>} : vector<78x16xf32>, vector<16x32xf32>, vector<78x32xf32> -> vector<78x32xf32>
    %128 = arith.addf %123, %127 : vector<78x32xf32>
    %c0_66 = arith.constant 0 : index
    %c0_67 = arith.constant 0 : index
    %129 = vector.load %arg6[%c0_66, %c0_67] : memref<1x32xf32, #tpu.memory_space<vmem>>, vector<1x32xf32>
    %130 = vector.broadcast %129 : vector<1x32xf32> to vector<78x32xf32>
    %131 = arith.mulf %128, %130 : vector<78x32xf32>
    %c0_68 = arith.constant 0 : index
    %c0_69 = arith.constant 0 : index
    %132 = vector.load %arg7[%c0_68, %c0_69] : memref<1x32xf32, #tpu.memory_space<vmem>>, vector<1x32xf32>
    %133 = vector.broadcast %132 : vector<1x32xf32> to vector<78x32xf32>
    %134 = arith.addf %131, %133 : vector<78x32xf32>
    %cst_70 = arith.constant 0.000000e+00 : f32
    %135 = vector.broadcast %cst_70 : f32 to vector<78x32xf32>
    %136 = arith.maximumf %134, %135 : vector<78x32xf32>
    %c0_71 = arith.constant 0 : index
    %c0_72 = arith.constant 0 : index
    %137 = vector.load %arg12[%c0_71, %c0_72] : memref<36x67xf32, #tpu.memory_space<vmem>>, vector<36x67xf32>
    %138 = vector.extract_strided_slice %136 {offsets = [0, 0], sizes = [67, 32], strides = [1, 1]} : vector<78x32xf32> to vector<67x32xf32>
    %139 = vector.extract_strided_slice %136 {offsets = [1, 0], sizes = [67, 32], strides = [1, 1]} : vector<78x32xf32> to vector<67x32xf32>
    %140 = arith.maximumf %138, %139 : vector<67x32xf32>
    %141 = vector.extract_strided_slice %136 {offsets = [10, 0], sizes = [67, 32], strides = [1, 1]} : vector<78x32xf32> to vector<67x32xf32>
    %142 = vector.extract_strided_slice %136 {offsets = [11, 0], sizes = [67, 32], strides = [1, 1]} : vector<78x32xf32> to vector<67x32xf32>
    %143 = arith.maximumf %141, %142 : vector<67x32xf32>
    %144 = arith.maximumf %140, %143 : vector<67x32xf32>
    %cst_73 = arith.constant dense<0.000000e+00> : vector<36x32xf32>
    %145 = tpu.matmul %137, %144, %cst_73 {dimension_numbers = #tpu.dot_dimension_numbers<[1], [0], [0], [1], [0, 0, 1, 1], [], []>} : vector<36x67xf32>, vector<67x32xf32>, vector<36x32xf32> -> vector<36x32xf32>
    %cst_74 = arith.constant 0.000000e+00 : f32
    %146 = vector.broadcast %cst_74 : f32 to vector<22x64xf32>
    %147 = vector.extract_strided_slice %145 {offsets = [0, 0], sizes = [22, 32], strides = [1, 1]} : vector<36x32xf32> to vector<22x32xf32>
    %c0_75 = arith.constant 0 : index
    %c0_76 = arith.constant 0 : index
    %c0_77 = arith.constant 0 : index
    %148 = vector.load %arg8[%c0_75, %c0_76, %c0_77] : memref<9x32x64xf32, #tpu.memory_space<vmem>>, vector<1x32x64xf32>
    %149 = vector.shape_cast %148 : vector<1x32x64xf32> to vector<32x64xf32>
    %cst_78 = arith.constant dense<0.000000e+00> : vector<22x64xf32>
    %150 = tpu.matmul %147, %149, %cst_78 {dimension_numbers = #tpu.dot_dimension_numbers<[1], [0], [0], [1], [0, 0, 1, 1], [], []>} : vector<22x32xf32>, vector<32x64xf32>, vector<22x64xf32> -> vector<22x64xf32>
    %151 = arith.addf %146, %150 : vector<22x64xf32>
    %152 = vector.extract_strided_slice %145 {offsets = [1, 0], sizes = [22, 32], strides = [1, 1]} : vector<36x32xf32> to vector<22x32xf32>
    %c1_79 = arith.constant 1 : index
    %c0_80 = arith.constant 0 : index
    %c0_81 = arith.constant 0 : index
    %153 = vector.load %arg8[%c1_79, %c0_80, %c0_81] : memref<9x32x64xf32, #tpu.memory_space<vmem>>, vector<1x32x64xf32>
    %154 = vector.shape_cast %153 : vector<1x32x64xf32> to vector<32x64xf32>
    %cst_82 = arith.constant dense<0.000000e+00> : vector<22x64xf32>
    %155 = tpu.matmul %152, %154, %cst_82 {dimension_numbers = #tpu.dot_dimension_numbers<[1], [0], [0], [1], [0, 0, 1, 1], [], []>} : vector<22x32xf32>, vector<32x64xf32>, vector<22x64xf32> -> vector<22x64xf32>
    %156 = arith.addf %151, %155 : vector<22x64xf32>
    %157 = vector.extract_strided_slice %145 {offsets = [2, 0], sizes = [22, 32], strides = [1, 1]} : vector<36x32xf32> to vector<22x32xf32>
    %c2_83 = arith.constant 2 : index
    %c0_84 = arith.constant 0 : index
    %c0_85 = arith.constant 0 : index
    %158 = vector.load %arg8[%c2_83, %c0_84, %c0_85] : memref<9x32x64xf32, #tpu.memory_space<vmem>>, vector<1x32x64xf32>
    %159 = vector.shape_cast %158 : vector<1x32x64xf32> to vector<32x64xf32>
    %cst_86 = arith.constant dense<0.000000e+00> : vector<22x64xf32>
    %160 = tpu.matmul %157, %159, %cst_86 {dimension_numbers = #tpu.dot_dimension_numbers<[1], [0], [0], [1], [0, 0, 1, 1], [], []>} : vector<22x32xf32>, vector<32x64xf32>, vector<22x64xf32> -> vector<22x64xf32>
    %161 = arith.addf %156, %160 : vector<22x64xf32>
    %162 = vector.extract_strided_slice %145 {offsets = [6, 0], sizes = [22, 32], strides = [1, 1]} : vector<36x32xf32> to vector<22x32xf32>
    %c3_87 = arith.constant 3 : index
    %c0_88 = arith.constant 0 : index
    %c0_89 = arith.constant 0 : index
    %163 = vector.load %arg8[%c3_87, %c0_88, %c0_89] : memref<9x32x64xf32, #tpu.memory_space<vmem>>, vector<1x32x64xf32>
    %164 = vector.shape_cast %163 : vector<1x32x64xf32> to vector<32x64xf32>
    %cst_90 = arith.constant dense<0.000000e+00> : vector<22x64xf32>
    %165 = tpu.matmul %162, %164, %cst_90 {dimension_numbers = #tpu.dot_dimension_numbers<[1], [0], [0], [1], [0, 0, 1, 1], [], []>} : vector<22x32xf32>, vector<32x64xf32>, vector<22x64xf32> -> vector<22x64xf32>
    %166 = arith.addf %161, %165 : vector<22x64xf32>
    %167 = vector.extract_strided_slice %145 {offsets = [7, 0], sizes = [22, 32], strides = [1, 1]} : vector<36x32xf32> to vector<22x32xf32>
    %c4_91 = arith.constant 4 : index
    %c0_92 = arith.constant 0 : index
    %c0_93 = arith.constant 0 : index
    %168 = vector.load %arg8[%c4_91, %c0_92, %c0_93] : memref<9x32x64xf32, #tpu.memory_space<vmem>>, vector<1x32x64xf32>
    %169 = vector.shape_cast %168 : vector<1x32x64xf32> to vector<32x64xf32>
    %cst_94 = arith.constant dense<0.000000e+00> : vector<22x64xf32>
    %170 = tpu.matmul %167, %169, %cst_94 {dimension_numbers = #tpu.dot_dimension_numbers<[1], [0], [0], [1], [0, 0, 1, 1], [], []>} : vector<22x32xf32>, vector<32x64xf32>, vector<22x64xf32> -> vector<22x64xf32>
    %171 = arith.addf %166, %170 : vector<22x64xf32>
    %172 = vector.extract_strided_slice %145 {offsets = [8, 0], sizes = [22, 32], strides = [1, 1]} : vector<36x32xf32> to vector<22x32xf32>
    %c5_95 = arith.constant 5 : index
    %c0_96 = arith.constant 0 : index
    %c0_97 = arith.constant 0 : index
    %173 = vector.load %arg8[%c5_95, %c0_96, %c0_97] : memref<9x32x64xf32, #tpu.memory_space<vmem>>, vector<1x32x64xf32>
    %174 = vector.shape_cast %173 : vector<1x32x64xf32> to vector<32x64xf32>
    %cst_98 = arith.constant dense<0.000000e+00> : vector<22x64xf32>
    %175 = tpu.matmul %172, %174, %cst_98 {dimension_numbers = #tpu.dot_dimension_numbers<[1], [0], [0], [1], [0, 0, 1, 1], [], []>} : vector<22x32xf32>, vector<32x64xf32>, vector<22x64xf32> -> vector<22x64xf32>
    %176 = arith.addf %171, %175 : vector<22x64xf32>
    %177 = vector.extract_strided_slice %145 {offsets = [12, 0], sizes = [22, 32], strides = [1, 1]} : vector<36x32xf32> to vector<22x32xf32>
    %c6_99 = arith.constant 6 : index
    %c0_100 = arith.constant 0 : index
    %c0_101 = arith.constant 0 : index
    %178 = vector.load %arg8[%c6_99, %c0_100, %c0_101] : memref<9x32x64xf32, #tpu.memory_space<vmem>>, vector<1x32x64xf32>
    %179 = vector.shape_cast %178 : vector<1x32x64xf32> to vector<32x64xf32>
    %cst_102 = arith.constant dense<0.000000e+00> : vector<22x64xf32>
    %180 = tpu.matmul %177, %179, %cst_102 {dimension_numbers = #tpu.dot_dimension_numbers<[1], [0], [0], [1], [0, 0, 1, 1], [], []>} : vector<22x32xf32>, vector<32x64xf32>, vector<22x64xf32> -> vector<22x64xf32>
    %181 = arith.addf %176, %180 : vector<22x64xf32>
    %182 = vector.extract_strided_slice %145 {offsets = [13, 0], sizes = [22, 32], strides = [1, 1]} : vector<36x32xf32> to vector<22x32xf32>
    %c7_103 = arith.constant 7 : index
    %c0_104 = arith.constant 0 : index
    %c0_105 = arith.constant 0 : index
    %183 = vector.load %arg8[%c7_103, %c0_104, %c0_105] : memref<9x32x64xf32, #tpu.memory_space<vmem>>, vector<1x32x64xf32>
    %184 = vector.shape_cast %183 : vector<1x32x64xf32> to vector<32x64xf32>
    %cst_106 = arith.constant dense<0.000000e+00> : vector<22x64xf32>
    %185 = tpu.matmul %182, %184, %cst_106 {dimension_numbers = #tpu.dot_dimension_numbers<[1], [0], [0], [1], [0, 0, 1, 1], [], []>} : vector<22x32xf32>, vector<32x64xf32>, vector<22x64xf32> -> vector<22x64xf32>
    %186 = arith.addf %181, %185 : vector<22x64xf32>
    %187 = vector.extract_strided_slice %145 {offsets = [14, 0], sizes = [22, 32], strides = [1, 1]} : vector<36x32xf32> to vector<22x32xf32>
    %c8_107 = arith.constant 8 : index
    %c0_108 = arith.constant 0 : index
    %c0_109 = arith.constant 0 : index
    %188 = vector.load %arg8[%c8_107, %c0_108, %c0_109] : memref<9x32x64xf32, #tpu.memory_space<vmem>>, vector<1x32x64xf32>
    %189 = vector.shape_cast %188 : vector<1x32x64xf32> to vector<32x64xf32>
    %cst_110 = arith.constant dense<0.000000e+00> : vector<22x64xf32>
    %190 = tpu.matmul %187, %189, %cst_110 {dimension_numbers = #tpu.dot_dimension_numbers<[1], [0], [0], [1], [0, 0, 1, 1], [], []>} : vector<22x32xf32>, vector<32x64xf32>, vector<22x64xf32> -> vector<22x64xf32>
    %191 = arith.addf %186, %190 : vector<22x64xf32>
    %c0_111 = arith.constant 0 : index
    %c0_112 = arith.constant 0 : index
    %192 = vector.load %arg9[%c0_111, %c0_112] : memref<1x64xf32, #tpu.memory_space<vmem>>, vector<1x64xf32>
    %193 = vector.broadcast %192 : vector<1x64xf32> to vector<22x64xf32>
    %194 = arith.mulf %191, %193 : vector<22x64xf32>
    %c0_113 = arith.constant 0 : index
    %c0_114 = arith.constant 0 : index
    %195 = vector.load %arg10[%c0_113, %c0_114] : memref<1x64xf32, #tpu.memory_space<vmem>>, vector<1x64xf32>
    %196 = vector.broadcast %195 : vector<1x64xf32> to vector<22x64xf32>
    %197 = arith.addf %194, %196 : vector<22x64xf32>
    %cst_115 = arith.constant 0.000000e+00 : f32
    %198 = vector.broadcast %cst_115 : f32 to vector<22x64xf32>
    %199 = arith.maximumf %197, %198 : vector<22x64xf32>
    %c0_116 = arith.constant 0 : index
    %c0_117 = arith.constant 0 : index
    %200 = vector.load %arg13[%c0_116, %c0_117] : memref<1x22xf32, #tpu.memory_space<vmem>>, vector<1x22xf32>
    %cst_118 = arith.constant dense<0.000000e+00> : vector<1x64xf32>
    %201 = tpu.matmul %200, %199, %cst_118 {dimension_numbers = #tpu.dot_dimension_numbers<[1], [0], [0], [1], [0, 0, 1, 1], [], []>} : vector<1x22xf32>, vector<22x64xf32>, vector<1x64xf32> -> vector<1x64xf32>
    %c0_119 = arith.constant 0 : index
    %c0_120 = arith.constant 0 : index
    %202 = vector.load %arg14[%c0_119, %c0_120] : memref<64x2xf32, #tpu.memory_space<vmem>>, vector<64x2xf32>
    %cst_121 = arith.constant dense<0.000000e+00> : vector<1x2xf32>
    %203 = tpu.matmul %201, %202, %cst_121 {dimension_numbers = #tpu.dot_dimension_numbers<[1], [0], [0], [1], [0, 0, 1, 1], [], []>} : vector<1x64xf32>, vector<64x2xf32>, vector<1x2xf32> -> vector<1x2xf32>
    %c0_122 = arith.constant 0 : index
    %c0_123 = arith.constant 0 : index
    %204 = vector.load %arg15[%c0_122, %c0_123] : memref<1x2xf32, #tpu.memory_space<vmem>>, vector<1x2xf32>
    %205 = arith.addf %203, %204 : vector<1x2xf32>
    %c0_124 = arith.constant 0 : index
    %c0_125 = arith.constant 0 : index
    %c0_126 = arith.constant 0 : index
    %206 = vector.load %arg16[%c0_124, %c0_125, %c0_126] : memref<1x1x2xf32, #tpu.memory_space<vmem>>, vector<1x1x2xf32>
    %207 = vector.shape_cast %206 : vector<1x1x2xf32> to vector<1x2xf32>
    %208 = vector.shape_cast %205 : vector<1x2xf32> to vector<1x1x2xf32>
    tpu.vector_store %arg16[%c0_124, %c0_125, %c0_126], %208 {strides = array<i32>} : memref<1x1x2xf32, #tpu.memory_space<vmem>>, vector<1x1x2xf32>,
    return
  }
  func.func @transform_0(%arg0: i32) -> (i32, i32, i32) {
    %c0_i32 = arith.constant 0 : i32
    %c0_i32_0 = arith.constant 0 : i32
    %c0_i32_1 = arith.constant 0 : i32
    return %arg0, %c0_i32, %c0_i32_0 : i32, i32, i32
  }
  func.func @transform_1(%arg0: i32) -> (i32, i32, i32) {
    %c0_i32 = arith.constant 0 : i32
    %c0_i32_0 = arith.constant 0 : i32
    %c0_i32_1 = arith.constant 0 : i32
    %c0_i32_2 = arith.constant 0 : i32
    return %c0_i32, %c0_i32_0, %c0_i32_1 : i32, i32, i32
  }
  func.func @transform_2(%arg0: i32) -> (i32, i32) {
    %c0_i32 = arith.constant 0 : i32
    %c0_i32_0 = arith.constant 0 : i32
    %c0_i32_1 = arith.constant 0 : i32
    return %c0_i32, %c0_i32_0 : i32, i32
  }
  func.func @transform_3(%arg0: i32) -> (i32, i32) {
    %c0_i32 = arith.constant 0 : i32
    %c0_i32_0 = arith.constant 0 : i32
    %c0_i32_1 = arith.constant 0 : i32
    return %c0_i32, %c0_i32_0 : i32, i32
  }
  func.func @transform_4(%arg0: i32) -> (i32, i32, i32) {
    %c0_i32 = arith.constant 0 : i32
    %c0_i32_0 = arith.constant 0 : i32
    %c0_i32_1 = arith.constant 0 : i32
    %c0_i32_2 = arith.constant 0 : i32
    return %c0_i32, %c0_i32_0, %c0_i32_1 : i32, i32, i32
  }
  func.func @transform_5(%arg0: i32) -> (i32, i32) {
    %c0_i32 = arith.constant 0 : i32
    %c0_i32_0 = arith.constant 0 : i32
    %c0_i32_1 = arith.constant 0 : i32
    return %c0_i32, %c0_i32_0 : i32, i32
  }
  func.func @transform_6(%arg0: i32) -> (i32, i32) {
    %c0_i32 = arith.constant 0 : i32
    %c0_i32_0 = arith.constant 0 : i32
    %c0_i32_1 = arith.constant 0 : i32
    return %c0_i32, %c0_i32_0 : i32, i32
  }
  func.func @transform_7(%arg0: i32) -> (i32, i32, i32) {
    %c0_i32 = arith.constant 0 : i32
    %c0_i32_0 = arith.constant 0 : i32
    %c0_i32_1 = arith.constant 0 : i32
    %c0_i32_2 = arith.constant 0 : i32
    return %c0_i32, %c0_i32_0, %c0_i32_1 : i32, i32, i32
  }
  func.func @transform_8(%arg0: i32) -> (i32, i32) {
    %c0_i32 = arith.constant 0 : i32
    %c0_i32_0 = arith.constant 0 : i32
    %c0_i32_1 = arith.constant 0 : i32
    return %c0_i32, %c0_i32_0 : i32, i32
  }
  func.func @transform_9(%arg0: i32) -> (i32, i32) {
    %c0_i32 = arith.constant 0 : i32
    %c0_i32_0 = arith.constant 0 : i32
    %c0_i32_1 = arith.constant 0 : i32
    return %c0_i32, %c0_i32_0 : i32, i32
  }
  func.func @transform_10(%arg0: i32) -> (i32, i32) {
    %c0_i32 = arith.constant 0 : i32
    %c0_i32_0 = arith.constant 0 : i32
    %c0_i32_1 = arith.constant 0 : i32
    return %c0_i32, %c0_i32_0 : i32, i32
  }
  func.func @transform_11(%arg0: i32) -> (i32, i32) {
    %c0_i32 = arith.constant 0 : i32
    %c0_i32_0 = arith.constant 0 : i32
    %c0_i32_1 = arith.constant 0 : i32
    return %c0_i32, %c0_i32_0 : i32, i32
  }
  func.func @transform_12(%arg0: i32) -> (i32, i32) {
    %c0_i32 = arith.constant 0 : i32
    %c0_i32_0 = arith.constant 0 : i32
    %c0_i32_1 = arith.constant 0 : i32
    return %c0_i32, %c0_i32_0 : i32, i32
  }
  func.func @transform_13(%arg0: i32) -> (i32, i32) {
    %c0_i32 = arith.constant 0 : i32
    %c0_i32_0 = arith.constant 0 : i32
    %c0_i32_1 = arith.constant 0 : i32
    return %c0_i32, %c0_i32_0 : i32, i32
  }
  func.func @transform_14(%arg0: i32) -> (i32, i32) {
    %c0_i32 = arith.constant 0 : i32
    %c0_i32_0 = arith.constant 0 : i32
    %c0_i32_1 = arith.constant 0 : i32
    return %c0_i32, %c0_i32_0 : i32, i32
  }
  func.func @transform_15(%arg0: i32) -> (i32, i32, i32) {
    %c0_i32 = arith.constant 0 : i32
    %c0_i32_0 = arith.constant 0 : i32
    %c0_i32_1 = arith.constant 0 : i32
    return %arg0, %c0_i32, %c0_i32_0 : i32, i32, i32
  }
}

</mosaic_0001>

<llo_original>
// kernel: simple_cnn_forward.1
$region0: #{simple_cnn_forward.1}
  #allocation0 [shape = 'u32[]', space=smem, size = 0x4, offset = 0x4, fixed_abs, tag = 'smem constant byte address 0x4 - core index']
  #allocation1 [shape = 'u32[72,128]{1,0:T(1,128)}', space=vmem, size = 0x9000, scoped, tag = 'internal scratch']
  %s0 = inlined_call_operand.vmem [shape: f32[2,324,1], index: 0, kind: input, shape index: {}]
  %s1 = inlined_call_operand.vmem [shape: f32[9,1,16], index: 1, kind: input, shape index: {}]
  %s2 = inlined_call_operand.vmem [shape: f32[1,16], index: 2, kind: input, shape index: {}]
  %s3 = inlined_call_operand.vmem [shape: f32[1,16], index: 3, kind: input, shape index: {}]
  %s4 = inlined_call_operand.vmem [shape: f32[9,16,32], index: 4, kind: input, shape index: {}]
  %s5 = inlined_call_operand.vmem [shape: f32[1,32], index: 5, kind: input, shape index: {}]
  %s6 = inlined_call_operand.vmem [shape: f32[1,32], index: 6, kind: input, shape index: {}]
  %s7 = inlined_call_operand.vmem [shape: f32[9,32,64], index: 7, kind: input, shape index: {}]
  %s8 = inlined_call_operand.vmem [shape: f32[1,64], index: 8, kind: input, shape index: {}]
  %s9 = inlined_call_operand.vmem [shape: f32[1,64], index: 9, kind: input, shape index: {}]
  %s10 = inlined_call_operand.vmem [shape: f32[100,267], index: 10, kind: input, shape index: {}]
  %s11 = inlined_call_operand.vmem [shape: f32[36,67], index: 11, kind: input, shape index: {}]
  %s12 = inlined_call_operand.vmem [shape: f32[1,22], index: 12, kind: input, shape index: {}]
  %s13 = inlined_call_operand.vmem [shape: f32[64,2], index: 13, kind: input, shape index: {}]
  %s14 = inlined_call_operand.vmem [shape: f32[1,2], index: 14, kind: input, shape index: {}]
  %s15 = inlined_call_operand.hbm [shape: f32[2,1,2], index: 15, kind: output, shape index: {}]
  %s16 = sld [smem:[#allocation0]]
  $region93: #{simple_cnn_forward.1} parent=0
    _
  %s18 = ssub.s32 1, %s16
  %s19 = scalar_select 0, %s18, %s16
  $region1: #{simple_cnn_forward.1} parent=0
    #allocation2 [shape = 'u8[1024]{0}', space=vmem, size = 0x400, scoped, tag = 'output window, operand 0']
    #allocation3 [shape = 's32[2]{0}', space=sflag, size = 0x8, scoped, tag = 'scoped memory for simple_cnn_forward.1']
    %20 = vsyncpa [#allocation3], 0
    %s21 = scalar_lea.sflag [#allocation3], 1
    %22 = vsyncpa %s21, 0
    loop: start=0, step=1, limit=4
    $region2: #{simple_cnn_forward.1} parent=1 // loop_pre_header
      _
    $region3: #{simple_cnn_forward.1} parent=1 // loop_header
      %s24 = sphi 0, %s28
      %p25 = scmp.ge.s32.totalorder %s24, 4
      %s34 = sphi 0, %s36
      %s37 = sphi 0, %s34
      %s38 = sphi 0, %s37
      %s54 = sphi 0, %s38
      %s58 = sphi 0, %s58
      %s60 = sphi 0, %s58
      %s61 = sphi 0, %s60
      %s75 = sphi 0, %s61
      %s79 = sphi 0, %s79
      %s81 = sphi 0, %s79
      %s82 = sphi 0, %s81
      %s96 = sphi 0, %s82
      %s100 = sphi 0, %s100
      %s102 = sphi 0, %s100
      %s103 = sphi 0, %s102
      %s117 = sphi 0, %s103
      %s121 = sphi 0, %s121
      %s123 = sphi 0, %s121
      %s124 = sphi 0, %s123
      %s138 = sphi 0, %s124
      %s142 = sphi 0, %s142
      %s144 = sphi 0, %s142
      %s145 = sphi 0, %s144
      %s159 = sphi 0, %s145
      %s163 = sphi 0, %s163
      %s165 = sphi 0, %s163
      %s166 = sphi 0, %s165
      %s180 = sphi 0, %s166
      %s184 = sphi 0, %s184
      %s186 = sphi 0, %s184
      %s187 = sphi 0, %s186
      %s201 = sphi 0, %s187
      %s205 = sphi 0, %s205
      %s207 = sphi 0, %s205
      %s208 = sphi 0, %s207
      %s222 = sphi 0, %s208
      %s226 = sphi 0, %s226
      %s228 = sphi 0, %s226
      %s229 = sphi 0, %s228
      %s243 = sphi 0, %s229
      %s247 = sphi 0, %s247
      %s249 = sphi 0, %s247
      %s250 = sphi 0, %s249
      %s264 = sphi 0, %s250
      %s268 = sphi 0, %s268
      %s270 = sphi 0, %s268
      %s271 = sphi 0, %s270
      %s285 = sphi 0, %s271
      %s289 = sphi 0, %s289
      %s291 = sphi 0, %s289
      %s292 = sphi 0, %s291
      %s306 = sphi 0, %s292
      %s310 = sphi 0, %s310
      %s312 = sphi 0, %s310
      %s313 = sphi 0, %s312
      %s327 = sphi 0, %s313
      %s331 = sphi 0, %s331
      %s333 = sphi 0, %s331
      %s334 = sphi 0, %s333
      %s348 = sphi 0, %s334
      %s354 = sphi 0, %s356
      %s357 = sphi 0, %s354
      %s358 = sphi 0, %s357
      %s374 = sphi 0, %s358
    $region4: #{simple_cnn_forward.1} parent=1 // loop_header_branch
      %27 = sbr.rel (%p25) target = $region8
    $region5: #{simple_cnn_forward.1} parent=1 // loop_body
      %s29 = ssub.s32 %s24, 1
      %s30 = ssub.s32 %s24, 2
      %s31 = sadd.s32 %s24, 1
      %s32 = ssub.s32 %s24, %s31
      %p33 = scmp.eq.s32.totalorder %s32, 0
      %s35 = sadd.s32 %s34, 1
      %s36 = scalar_select %p33, %s34, %s35
      %p39 = pneg %p33
      %p40 = scmp.eq.s32.totalorder %s24, 1
      %p41 = por %p39, %p40
      %p42 = scmp.ne.s32.totalorder %s34, %s37
      %p43 = scmp.eq.s32.totalorder %s24, 0
      %p44 = por %p42, %p43
      %p45 = scmp.ne.s32.totalorder %s34, %s37
      %p46 = scmp.eq.s32.totalorder %s29, 1
      %p47 = por %p45, %p46
      %p48 = scmp.ne.s32.totalorder %s37, %s38
      %p49 = scmp.eq.s32.totalorder %s29, 0
      %p50 = por %p48, %p49
      %p51 = scmp.ne.s32.totalorder %s37, %s38
      %p52 = scmp.eq.s32.totalorder %s30, 1
      %p53 = por %p51, %p52
      %p55 = scmp.ne.s32.totalorder %s38, %s54
      %p56 = scmp.eq.s32.totalorder %s30, 0
      %p57 = por %p55, %p56
      %s59 = sadd.s32 %s58, 1
      %p62 = scmp.eq.s32.totalorder %s24, 1
      %p63 = scmp.ne.s32.totalorder %s58, %s60
      %p64 = scmp.eq.s32.totalorder %s24, 0
      %p65 = por %p63, %p64
      %p66 = scmp.ne.s32.totalorder %s58, %s60
      %p67 = scmp.eq.s32.totalorder %s29, 1
      %p68 = por %p66, %p67
      %p69 = scmp.ne.s32.totalorder %s60, %s61
      %p70 = scmp.eq.s32.totalorder %s29, 0
      %p71 = por %p69, %p70
      %p72 = scmp.ne.s32.totalorder %s60, %s61
      %p73 = scmp.eq.s32.totalorder %s30, 1
      %p74 = por %p72, %p73
      %p76 = scmp.ne.s32.totalorder %s61, %s75
      %p77 = scmp.eq.s32.totalorder %s30, 0
      %p78 = por %p76, %p77
      %s80 = sadd.s32 %s79, 1
      %p83 = scmp.eq.s32.totalorder %s24, 1
      %p84 = scmp.ne.s32.totalorder %s79, %s81
      %p85 = scmp.eq.s32.totalorder %s24, 0
      %p86 = por %p84, %p85
      %p87 = scmp.ne.s32.totalorder %s79, %s81
      %p88 = scmp.eq.s32.totalorder %s29, 1
      %p89 = por %p87, %p88
      %p90 = scmp.ne.s32.totalorder %s81, %s82
      %p91 = scmp.eq.s32.totalorder %s29, 0
      %p92 = por %p90, %p91
      %p93 = scmp.ne.s32.totalorder %s81, %s82
      %p94 = scmp.eq.s32.totalorder %s30, 1
      %p95 = por %p93, %p94
      %p97 = scmp.ne.s32.totalorder %s82, %s96
      %p98 = scmp.eq.s32.totalorder %s30, 0
      %p99 = por %p97, %p98
      %s101 = sadd.s32 %s100, 1
      %p104 = scmp.eq.s32.totalorder %s24, 1
      %p105 = scmp.ne.s32.totalorder %s100, %s102
      %p106 = scmp.eq.s32.totalorder %s24, 0
      %p107 = por %p105, %p106
      %p108 = scmp.ne.s32.totalorder %s100, %s102
      %p109 = scmp.eq.s32.totalorder %s29, 1
      %p110 = por %p108, %p109
      %p111 = scmp.ne.s32.totalorder %s102, %s103
      %p112 = scmp.eq.s32.totalorder %s29, 0
      %p113 = por %p111, %p112
      %p114 = scmp.ne.s32.totalorder %s102, %s103
      %p115 = scmp.eq.s32.totalorder %s30, 1
      %p116 = por %p114, %p115
      %p118 = scmp.ne.s32.totalorder %s103, %s117
      %p119 = scmp.eq.s32.totalorder %s30, 0
      %p120 = por %p118, %p119
      %s122 = sadd.s32 %s121, 1
      %p125 = scmp.eq.s32.totalorder %s24, 1
      %p126 = scmp.ne.s32.totalorder %s121, %s123
      %p127 = scmp.eq.s32.totalorder %s24, 0
      %p128 = por %p126, %p127
      %p129 = scmp.ne.s32.totalorder %s121, %s123
      %p130 = scmp.eq.s32.totalorder %s29, 1
      %p131 = por %p129, %p130
      %p132 = scmp.ne.s32.totalorder %s123, %s124
      %p133 = scmp.eq.s32.totalorder %s29, 0
      %p134 = por %p132, %p133
      %p135 = scmp.ne.s32.totalorder %s123, %s124
      %p136 = scmp.eq.s32.totalorder %s30, 1
      %p137 = por %p135, %p136
      %p139 = scmp.ne.s32.totalorder %s124, %s138
      %p140 = scmp.eq.s32.totalorder %s30, 0
      %p141 = por %p139, %p140
      %s143 = sadd.s32 %s142, 1
      %p146 = scmp.eq.s32.totalorder %s24, 1
      %p147 = scmp.ne.s32.totalorder %s142, %s144
      %p148 = scmp.eq.s32.totalorder %s24, 0
      %p149 = por %p147, %p148
      %p150 = scmp.ne.s32.totalorder %s142, %s144
      %p151 = scmp.eq.s32.totalorder %s29, 1
      %p152 = por %p150, %p151
      %p153 = scmp.ne.s32.totalorder %s144, %s145
      %p154 = scmp.eq.s32.totalorder %s29, 0
      %p155 = por %p153, %p154
      %p156 = scmp.ne.s32.totalorder %s144, %s145
      %p157 = scmp.eq.s32.totalorder %s30, 1
      %p158 = por %p156, %p157
      %p160 = scmp.ne.s32.totalorder %s145, %s159
      %p161 = scmp.eq.s32.totalorder %s30, 0
      %p162 = por %p160, %p161
      %s164 = sadd.s32 %s163, 1
      %p167 = scmp.eq.s32.totalorder %s24, 1
      %p168 = scmp.ne.s32.totalorder %s163, %s165
      %p169 = scmp.eq.s32.totalorder %s24, 0
      %p170 = por %p168, %p169
      %p171 = scmp.ne.s32.totalorder %s163, %s165
      %p172 = scmp.eq.s32.totalorder %s29, 1
      %p173 = por %p171, %p172
      %p174 = scmp.ne.s32.totalorder %s165, %s166
      %p175 = scmp.eq.s32.totalorder %s29, 0
      %p176 = por %p174, %p175
      %p177 = scmp.ne.s32.totalorder %s165, %s166
      %p178 = scmp.eq.s32.totalorder %s30, 1
      %p179 = por %p177, %p178
      %p181 = scmp.ne.s32.totalorder %s166, %s180
      %p182 = scmp.eq.s32.totalorder %s30, 0
      %p183 = por %p181, %p182
      %s185 = sadd.s32 %s184, 1
      %p188 = scmp.eq.s32.totalorder %s24, 1
      %p189 = scmp.ne.s32.totalorder %s184, %s186
      %p190 = scmp.eq.s32.totalorder %s24, 0
      %p191 = por %p189, %p190
      %p192 = scmp.ne.s32.totalorder %s184, %s186
      %p193 = scmp.eq.s32.totalorder %s29, 1
      %p194 = por %p192, %p193
      %p195 = scmp.ne.s32.totalorder %s186, %s187
      %p196 = scmp.eq.s32.totalorder %s29, 0
      %p197 = por %p195, %p196
      %p198 = scmp.ne.s32.totalorder %s186, %s187
      %p199 = scmp.eq.s32.totalorder %s30, 1
      %p200 = por %p198, %p199
      %p202 = scmp.ne.s32.totalorder %s187, %s201
      %p203 = scmp.eq.s32.totalorder %s30, 0
      %p204 = por %p202, %p203
      %s206 = sadd.s32 %s205, 1
      %p209 = scmp.eq.s32.totalorder %s24, 1
      %p210 = scmp.ne.s32.totalorder %s205, %s207
      %p211 = scmp.eq.s32.totalorder %s24, 0
      %p212 = por %p210, %p211
      %p213 = scmp.ne.s32.totalorder %s205, %s207
      %p214 = scmp.eq.s32.totalorder %s29, 1
      %p215 = por %p213, %p214
      %p216 = scmp.ne.s32.totalorder %s207, %s208
      %p217 = scmp.eq.s32.totalorder %s29, 0
      %p218 = por %p216, %p217
      %p219 = scmp.ne.s32.totalorder %s207, %s208
      %p220 = scmp.eq.s32.totalorder %s30, 1
      %p221 = por %p219, %p220
      %p223 = scmp.ne.s32.totalorder %s208, %s222
      %p224 = scmp.eq.s32.totalorder %s30, 0
      %p225 = por %p223, %p224
      %s227 = sadd.s32 %s226, 1
      %p230 = scmp.eq.s32.totalorder %s24, 1
      %p231 = scmp.ne.s32.totalorder %s226, %s228
      %p232 = scmp.eq.s32.totalorder %s24, 0
      %p233 = por %p231, %p232
      %p234 = scmp.ne.s32.totalorder %s226, %s228
      %p235 = scmp.eq.s32.totalorder %s29, 1
      %p236 = por %p234, %p235
      %p237 = scmp.ne.s32.totalorder %s228, %s229
      %p238 = scmp.eq.s32.totalorder %s29, 0
      %p239 = por %p237, %p238
      %p240 = scmp.ne.s32.totalorder %s228, %s229
      %p241 = scmp.eq.s32.totalorder %s30, 1
      %p242 = por %p240, %p241
      %p244 = scmp.ne.s32.totalorder %s229, %s243
      %p245 = scmp.eq.s32.totalorder %s30, 0
      %p246 = por %p244, %p245
      %s248 = sadd.s32 %s247, 1
      %p251 = scmp.eq.s32.totalorder %s24, 1
      %p252 = scmp.ne.s32.totalorder %s247, %s249
      %p253 = scmp.eq.s32.totalorder %s24, 0
      %p254 = por %p252, %p253
      %p255 = scmp.ne.s32.totalorder %s247, %s249
      %p256 = scmp.eq.s32.totalorder %s29, 1
      %p257 = por %p255, %p256
      %p258 = scmp.ne.s32.totalorder %s249, %s250
      %p259 = scmp.eq.s32.totalorder %s29, 0
      %p260 = por %p258, %p259
      %p261 = scmp.ne.s32.totalorder %s249, %s250
      %p262 = scmp.eq.s32.totalorder %s30, 1
      %p263 = por %p261, %p262
      %p265 = scmp.ne.s32.totalorder %s250, %s264
      %p266 = scmp.eq.s32.totalorder %s30, 0
      %p267 = por %p265, %p266
      %s269 = sadd.s32 %s268, 1
      %p272 = scmp.eq.s32.totalorder %s24, 1
      %p273 = scmp.ne.s32.totalorder %s268, %s270
      %p274 = scmp.eq.s32.totalorder %s24, 0
      %p275 = por %p273, %p274
      %p276 = scmp.ne.s32.totalorder %s268, %s270
      %p277 = scmp.eq.s32.totalorder %s29, 1
      %p278 = por %p276, %p277
      %p279 = scmp.ne.s32.totalorder %s270, %s271
      %p280 = scmp.eq.s32.totalorder %s29, 0
      %p281 = por %p279, %p280
      %p282 = scmp.ne.s32.totalorder %s270, %s271
      %p283 = scmp.eq.s32.totalorder %s30, 1
      %p284 = por %p282, %p283
      %p286 = scmp.ne.s32.totalorder %s271, %s285
      %p287 = scmp.eq.s32.totalorder %s30, 0
      %p288 = por %p286, %p287
      %s290 = sadd.s32 %s289, 1
      %p293 = scmp.eq.s32.totalorder %s24, 1
      %p294 = scmp.ne.s32.totalorder %s289, %s291
      %p295 = scmp.eq.s32.totalorder %s24, 0
      %p296 = por %p294, %p295
      %p297 = scmp.ne.s32.totalorder %s289, %s291
      %p298 = scmp.eq.s32.totalorder %s29, 1
      %p299 = por %p297, %p298
      %p300 = scmp.ne.s32.totalorder %s291, %s292
      %p301 = scmp.eq.s32.totalorder %s29, 0
      %p302 = por %p300, %p301
      %p303 = scmp.ne.s32.totalorder %s291, %s292
      %p304 = scmp.eq.s32.totalorder %s30, 1
      %p305 = por %p303, %p304
      %p307 = scmp.ne.s32.totalorder %s292, %s306
      %p308 = scmp.eq.s32.totalorder %s30, 0
      %p309 = por %p307, %p308
      %s311 = sadd.s32 %s310, 1
      %p314 = scmp.eq.s32.totalorder %s24, 1
      %p315 = scmp.ne.s32.totalorder %s310, %s312
      %p316 = scmp.eq.s32.totalorder %s24, 0
      %p317 = por %p315, %p316
      %p318 = scmp.ne.s32.totalorder %s310, %s312
      %p319 = scmp.eq.s32.totalorder %s29, 1
      %p320 = por %p318, %p319
      %p321 = scmp.ne.s32.totalorder %s312, %s313
      %p322 = scmp.eq.s32.totalorder %s29, 0
      %p323 = por %p321, %p322
      %p324 = scmp.ne.s32.totalorder %s312, %s313
      %p325 = scmp.eq.s32.totalorder %s30, 1
      %p326 = por %p324, %p325
      %p328 = scmp.ne.s32.totalorder %s313, %s327
      %p329 = scmp.eq.s32.totalorder %s30, 0
      %p330 = por %p328, %p329
      %s332 = sadd.s32 %s331, 1
      %p335 = scmp.eq.s32.totalorder %s24, 1
      %p336 = scmp.ne.s32.totalorder %s331, %s333
      %p337 = scmp.eq.s32.totalorder %s24, 0
      %p338 = por %p336, %p337
      %p339 = scmp.ne.s32.totalorder %s331, %s333
      %p340 = scmp.eq.s32.totalorder %s29, 1
      %p341 = por %p339, %p340
      %p342 = scmp.ne.s32.totalorder %s333, %s334
      %p343 = scmp.eq.s32.totalorder %s29, 0
      %p344 = por %p342, %p343
      %p345 = scmp.ne.s32.totalorder %s333, %s334
      %p346 = scmp.eq.s32.totalorder %s30, 1
      %p347 = por %p345, %p346
      %p349 = scmp.ne.s32.totalorder %s334, %s348
      %p350 = scmp.eq.s32.totalorder %s30, 0
      %p351 = por %p349, %p350
      %s352 = ssub.s32 %s24, %s31
      %p353 = scmp.eq.s32.totalorder %s352, 0
      %s355 = sadd.s32 %s354, 1
      %s356 = scalar_select %p353, %s354, %s355
      %p359 = pneg %p353
      %p360 = scmp.eq.s32.totalorder %s24, 1
      %p361 = por %p359, %p360
      %p362 = scmp.ne.s32.totalorder %s354, %s357
      %p363 = scmp.eq.s32.totalorder %s24, 0
      %p364 = por %p362, %p363
      %p365 = scmp.ne.s32.totalorder %s354, %s357
      %p366 = scmp.eq.s32.totalorder %s29, 1
      %p367 = por %p365, %p366
      %p368 = scmp.ne.s32.totalorder %s357, %s358
      %p369 = scmp.eq.s32.totalorder %s29, 0
      %p370 = por %p368, %p369
      %p371 = scmp.ne.s32.totalorder %s357, %s358
      %p372 = scmp.eq.s32.totalorder %s30, 1
      %p373 = por %p371, %p372
      %p375 = scmp.ne.s32.totalorder %s358, %s374
      %p376 = scmp.eq.s32.totalorder %s30, 0
      %p377 = por %p375, %p376
      %p378 = scmp.le.s32.totalorder 1, %s24
      %p379 = scmp.lt.s32.totalorder %s24, 3
      %p380 = pnand %p378, %p379
      %p381 = pneg %p380
      // Predicated region
      $region9: #{simple_cnn_forward.1} parent=5 // pred_check
        _
      $region10: #{simple_cnn_forward.1} parent=5 // pred_check_branch
        %383 = sbr.rel (%p380) target = $region12
      $region11: #{simple_cnn_forward.1} parent=5 // pred_region
        %s384 = ssub.s32 %s24, 1
        // Predicated region
        $region13: #{simple_cnn_forward.1} parent=11 // pred_check
          %p385 = pneg %p71
        $region14: #{simple_cnn_forward.1} parent=11 // pred_check_branch
          %387 = sbr.rel (%p385) target = $region16
        $region15: #{simple_cnn_forward.1} parent=11 // pred_region
          _
        $region16: #{simple_cnn_forward.1} parent=11 // pred_fallthru
          _
        // Predicated region
        $region17: #{simple_cnn_forward.1} parent=11 // pred_check
          %p388 = pneg %p92
        $region18: #{simple_cnn_forward.1} parent=11 // pred_check_branch
          %390 = sbr.rel (%p388) target = $region20
        $region19: #{simple_cnn_forward.1} parent=11 // pred_region
          _
        $region20: #{simple_cnn_forward.1} parent=11 // pred_fallthru
          _
        // Predicated region
        $region21: #{simple_cnn_forward.1} parent=11 // pred_check
          %p391 = pneg %p113
        $region22: #{simple_cnn_forward.1} parent=11 // pred_check_branch
          %393 = sbr.rel (%p391) target = $region24
        $region23: #{simple_cnn_forward.1} parent=11 // pred_region
          _
        $region24: #{simple_cnn_forward.1} parent=11 // pred_fallthru
          _
        // Predicated region
        $region25: #{simple_cnn_forward.1} parent=11 // pred_check
          %p394 = pneg %p134
        $region26: #{simple_cnn_forward.1} parent=11 // pred_check_branch
          %396 = sbr.rel (%p394) target = $region28
        $region27: #{simple_cnn_forward.1} parent=11 // pred_region
          _
        $region28: #{simple_cnn_forward.1} parent=11 // pred_fallthru
          _
        // Predicated region
        $region29: #{simple_cnn_forward.1} parent=11 // pred_check
          %p397 = pneg %p155
        $region30: #{simple_cnn_forward.1} parent=11 // pred_check_branch
          %399 = sbr.rel (%p397) target = $region32
        $region31: #{simple_cnn_forward.1} parent=11 // pred_region
          _
        $region32: #{simple_cnn_forward.1} parent=11 // pred_fallthru
          _
        // Predicated region
        $region33: #{simple_cnn_forward.1} parent=11 // pred_check
          %p400 = pneg %p176
        $region34: #{simple_cnn_forward.1} parent=11 // pred_check_branch
          %402 = sbr.rel (%p400) target = $region36
        $region35: #{simple_cnn_forward.1} parent=11 // pred_region
          _
        $region36: #{simple_cnn_forward.1} parent=11 // pred_fallthru
          _
        // Predicated region
        $region37: #{simple_cnn_forward.1} parent=11 // pred_check
          %p403 = pneg %p197
        $region38: #{simple_cnn_forward.1} parent=11 // pred_check_branch
          %405 = sbr.rel (%p403) target = $region40
        $region39: #{simple_cnn_forward.1} parent=11 // pred_region
          _
        $region40: #{simple_cnn_forward.1} parent=11 // pred_fallthru
          _
        // Predicated region
        $region41: #{simple_cnn_forward.1} parent=11 // pred_check
          %p406 = pneg %p218
        $region42: #{simple_cnn_forward.1} parent=11 // pred_check_branch
          %408 = sbr.rel (%p406) target = $region44
        $region43: #{simple_cnn_forward.1} parent=11 // pred_region
          _
        $region44: #{simple_cnn_forward.1} parent=11 // pred_fallthru
          _
        // Predicated region
        $region45: #{simple_cnn_forward.1} parent=11 // pred_check
          %p409 = pneg %p239
        $region46: #{simple_cnn_forward.1} parent=11 // pred_check_branch
          %411 = sbr.rel (%p409) target = $region48
        $region47: #{simple_cnn_forward.1} parent=11 // pred_region
          _
        $region48: #{simple_cnn_forward.1} parent=11 // pred_fallthru
          _
        // Predicated region
        $region49: #{simple_cnn_forward.1} parent=11 // pred_check
          %p412 = pneg %p260
        $region50: #{simple_cnn_forward.1} parent=11 // pred_check_branch
          %414 = sbr.rel (%p412) target = $region52
        $region51: #{simple_cnn_forward.1} parent=11 // pred_region
          _
        $region52: #{simple_cnn_forward.1} parent=11 // pred_fallthru
          _
        // Predicated region
        $region53: #{simple_cnn_forward.1} parent=11 // pred_check
          %p415 = pneg %p281
        $region54: #{simple_cnn_forward.1} parent=11 // pred_check_branch
          %417 = sbr.rel (%p415) target = $region56
        $region55: #{simple_cnn_forward.1} parent=11 // pred_region
          _
        $region56: #{simple_cnn_forward.1} parent=11 // pred_fallthru
          _
        // Predicated region
        $region57: #{simple_cnn_forward.1} parent=11 // pred_check
          %p418 = pneg %p302
        $region58: #{simple_cnn_forward.1} parent=11 // pred_check_branch
          %420 = sbr.rel (%p418) target = $region60
        $region59: #{simple_cnn_forward.1} parent=11 // pred_region
          _
        $region60: #{simple_cnn_forward.1} parent=11 // pred_fallthru
          _
        // Predicated region
        $region61: #{simple_cnn_forward.1} parent=11 // pred_check
          %p421 = pneg %p323
        $region62: #{simple_cnn_forward.1} parent=11 // pred_check_branch
          %423 = sbr.rel (%p421) target = $region64
        $region63: #{simple_cnn_forward.1} parent=11 // pred_region
          _
        $region64: #{simple_cnn_forward.1} parent=11 // pred_fallthru
          _
        // Predicated region
        $region65: #{simple_cnn_forward.1} parent=11 // pred_check
          %p424 = pneg %p344
        $region66: #{simple_cnn_forward.1} parent=11 // pred_check_branch
          %426 = sbr.rel (%p424) target = $region68
        $region67: #{simple_cnn_forward.1} parent=11 // pred_region
          _
        $region68: #{simple_cnn_forward.1} parent=11 // pred_fallthru
          _
      $region12: #{simple_cnn_forward.1} parent=5 // pred_fallthru
        _
      %p427 = scmp.lt.s32.totalorder %s24, 2
      // Predicated region
      $region69: #{simple_cnn_forward.1} parent=5 // pred_check
        %p428 = pneg %p427
      $region70: #{simple_cnn_forward.1} parent=5 // pred_check_branch
        %430 = sbr.rel (%p428) target = $region72
      $region71: #{simple_cnn_forward.1} parent=5 // pred_region
        // Predicated region
        $region73: #{simple_cnn_forward.1} parent=71 // pred_check
          %p431 = pneg %p44
        $region74: #{simple_cnn_forward.1} parent=71 // pred_check_branch
          %433 = sbr.rel (%p431) target = $region76
        $region75: #{simple_cnn_forward.1} parent=71 // pred_region
          %p434 = scmp.lt.s32.totalorder %s24, 1
          %s435 = scalar_select %p434, %s24, 1
          %s436 = smul.addr %s435, 41
          %s437 = smul.addr %s436, 8
          %s438 = scalar_lea.vmem %s0, %s437
        $region76: #{simple_cnn_forward.1} parent=71 // pred_fallthru
          _
      $region72: #{simple_cnn_forward.1} parent=5 // pred_fallthru
        _
      %p439 = scmp.le.s32.totalorder 1, %s24
      %p440 = scmp.lt.s32.totalorder %s24, 3
      %p441 = pnand %p439, %p440
      %p442 = pneg %p441
      // Predicated region
      $region77: #{simple_cnn_forward.1} parent=5 // pred_check
        _
      $region78: #{simple_cnn_forward.1} parent=5 // pred_check_branch
        %444 = sbr.rel (%p441) target = $region80
      $region79: #{simple_cnn_forward.1} parent=5 // pred_region
        %s445 = ssub.s32 %s24, 1
        %p446 = scmp.lt.s32.totalorder %s29, 1
        %s447 = scalar_select %p446, %s29, 1
        %s448 = smul.addr %s447, 41
        %s449 = smul.addr %s448, 8
        %s450 = scalar_lea.vmem %s0, %s449
        %p451 = pneg %p50
        %p452 = pneg %p47
        %p453 = pneg %p71
        %p454 = pneg %p68
        %p455 = pneg %p92
        %p456 = pneg %p89
        %p457 = pneg %p113
        %p458 = pneg %p110
        %p459 = pneg %p134
        %p460 = pneg %p131
        %p461 = pneg %p155
        %p462 = pneg %p152
        %p463 = pneg %p176
        %p464 = pneg %p173
        %p465 = pneg %p197
        %p466 = pneg %p194
        %p467 = pneg %p218
        %p468 = pneg %p215
        %p469 = pneg %p239
        %p470 = pneg %p236
        %p471 = pneg %p260
        %p472 = pneg %p257
        %p473 = pneg %p281
        %p474 = pneg %p278
        %p475 = pneg %p302
        %p476 = pneg %p299
        %p477 = pneg %p323
        %p478 = pneg %p320
        %p479 = pneg %p344
        %p480 = pneg %p341
        %p481 = pneg %p370
        %p482 = pneg %p367
        %s483 = sand.u32 %s357, 1
        %s484 = scalar_lea.sflag [#allocation3], %s483
        %s485 = sand.u32 %s357, 1
        %s486 = scalar_lea.vmem [#allocation2], %s485
        %p487 = scmp.lt.s32.totalorder %s29, 1
        %s488 = scalar_select %p487, %s29, 1
        %s489 = smul.addr %s488, 41
        %s490 = smul.addr %s489, 8
        %s491 = scalar_lea.vmem %s0, %s490
        %v492 = vld [vmem:[%s491] sm:$0xff]
        %v493 = vld [vmem:[%s491 + $0x8] sm:$0xff]
        %v494 = vld [vmem:[%s491 + $0x10] sm:$0xff]
        %v495 = vld [vmem:[%s491 + $0x18] sm:$0xff]
        %v496 = vld [vmem:[%s491 + $0x20] sm:$0xff]
        %v497 = vld [vmem:[%s491 + $0x28] sm:$0xff]
        %v498 = vld [vmem:[%s491 + $0x30] sm:$0xff]
        %v499 = vld [vmem:[%s491 + $0x38] sm:$0xff]
        %v500 = vld [vmem:[%s491 + $0x40] sm:$0xff]
        %v501 = vld [vmem:[%s491 + $0x48] sm:$0xff]
        %v502 = vld [vmem:[%s491 + $0x50] sm:$0xff]
        %v503 = vld [vmem:[%s491 + $0x58] sm:$0xff]
        %v504 = vld [vmem:[%s491 + $0x60] sm:$0xff]
        %v505 = vld [vmem:[%s491 + $0x68] sm:$0xff]
        %v506 = vld [vmem:[%s491 + $0x70] sm:$0xff]
        %v507 = vld [vmem:[%s491 + $0x78] sm:$0xff]
        %v508 = vld [vmem:[%s491 + $0x80] sm:$0xff]
        %v509 = vld [vmem:[%s491 + $0x88] sm:$0xff]
        %v510 = vld [vmem:[%s491 + $0x90] sm:$0xff]
        %v511 = vld [vmem:[%s491 + $0x98] sm:$0xff]
        %v512 = vld [vmem:[%s491 + $0xa0] sm:$0xff]
        %v513 = vld [vmem:[%s491 + $0xa8] sm:$0xff]
        %v514 = vld [vmem:[%s491 + $0xb0] sm:$0xff]
        %v515 = vld [vmem:[%s491 + $0xb8] sm:$0xff]
        %v516 = vld [vmem:[%s491 + $0xc0] sm:$0xff]
        %v517 = vld [vmem:[%s491 + $0xc8] sm:$0xff]
        %v518 = vld [vmem:[%s491 + $0xd0] sm:$0xff]
        %v519 = vld [vmem:[%s491 + $0xd8] sm:$0xff]
        %v520 = vld [vmem:[%s491 + $0xe0] sm:$0xff]
        %v521 = vld [vmem:[%s491 + $0xe8] sm:$0xff]
        %v522 = vld [vmem:[%s491 + $0xf0] sm:$0xff]
        %v523 = vld [vmem:[%s491 + $0xf8] sm:$0xff]
        %v524 = vld [vmem:[%s491 + $0x100] sm:$0xff]
        %v525 = vld [vmem:[%s491 + $0x108] sm:$0xff]
        %v526 = vld [vmem:[%s491 + $0x110] sm:$0xff]
        %v527 = vld [vmem:[%s491 + $0x118] sm:$0xff]
        %v528 = vld [vmem:[%s491 + $0x120] sm:$0xff]
        %v529 = vld [vmem:[%s491 + $0x128] sm:$0xff]
        %v530 = vld [vmem:[%s491 + $0x130] sm:$0xff]
        %v531 = vld [vmem:[%s491 + $0x138] sm:$0xff]
        %v532 = vld [vmem:[%s491 + $0x140] sm:$0xf]
        %v533 = vld [vmem:[%s1] sm:$0x1]
        %535 = vset.pattern.permute.xlu0 0
        %536 = vperm.xlu0 %535, %v492
        %v537 = vpop.permute.xlu0 %536
        %540 = vset.pattern.permute.xlu0 0
        %541 = vperm.xlu0 %540, %v493
        %v542 = vpop.permute.xlu0 %541
        %545 = vset.pattern.permute.xlu0 0
        %546 = vperm.xlu0 %545, %v494
        %v547 = vpop.permute.xlu0 %546
        %550 = vset.pattern.permute.xlu0 0
        %551 = vperm.xlu0 %550, %v495
        %v552 = vpop.permute.xlu0 %551
        %555 = vset.pattern.permute.xlu0 0
        %556 = vperm.xlu0 %555, %v496
        %v557 = vpop.permute.xlu0 %556
        %560 = vset.pattern.permute.xlu0 0
        %561 = vperm.xlu0 %560, %v497
        %v562 = vpop.permute.xlu0 %561
        %565 = vset.pattern.permute.xlu0 0
        %566 = vperm.xlu0 %565, %v498
        %v567 = vpop.permute.xlu0 %566
        %570 = vset.pattern.permute.xlu0 0
        %571 = vperm.xlu0 %570, %v499
        %v572 = vpop.permute.xlu0 %571
        %575 = vset.pattern.permute.xlu0 0
        %576 = vperm.xlu0 %575, %v500
        %v577 = vpop.permute.xlu0 %576
        %580 = vset.pattern.permute.xlu0 0
        %581 = vperm.xlu0 %580, %v501
        %v582 = vpop.permute.xlu0 %581
        %585 = vset.pattern.permute.xlu0 0
        %586 = vperm.xlu0 %585, %v502
        %v587 = vpop.permute.xlu0 %586
        %590 = vset.pattern.permute.xlu0 0
        %591 = vperm.xlu0 %590, %v503
        %v592 = vpop.permute.xlu0 %591
        %595 = vset.pattern.permute.xlu0 0
        %596 = vperm.xlu0 %595, %v504
        %v597 = vpop.permute.xlu0 %596
        %600 = vset.pattern.permute.xlu0 0
        %601 = vperm.xlu0 %600, %v505
        %v602 = vpop.permute.xlu0 %601
        %605 = vset.pattern.permute.xlu0 0
        %606 = vperm.xlu0 %605, %v506
        %v607 = vpop.permute.xlu0 %606
        %610 = vset.pattern.permute.xlu0 0
        %611 = vperm.xlu0 %610, %v507
        %v612 = vpop.permute.xlu0 %611
        %615 = vset.pattern.permute.xlu0 0
        %616 = vperm.xlu0 %615, %v508
        %v617 = vpop.permute.xlu0 %616
        %620 = vset.pattern.permute.xlu0 0
        %621 = vperm.xlu0 %620, %v509
        %v622 = vpop.permute.xlu0 %621
        %625 = vset.pattern.permute.xlu0 0
        %626 = vperm.xlu0 %625, %v510
        %v627 = vpop.permute.xlu0 %626
        %630 = vset.pattern.permute.xlu0 0
        %631 = vperm.xlu0 %630, %v511
        %v632 = vpop.permute.xlu0 %631
        %635 = vset.pattern.permute.xlu0 0
        %636 = vperm.xlu0 %635, %v512
        %v637 = vpop.permute.xlu0 %636
        %640 = vset.pattern.permute.xlu0 0
        %641 = vperm.xlu0 %640, %v513
        %v642 = vpop.permute.xlu0 %641
        %645 = vset.pattern.permute.xlu0 0
        %646 = vperm.xlu0 %645, %v514
        %v647 = vpop.permute.xlu0 %646
        %650 = vset.pattern.permute.xlu0 0
        %651 = vperm.xlu0 %650, %v515
        %v652 = vpop.permute.xlu0 %651
        %655 = vset.pattern.permute.xlu0 0
        %656 = vperm.xlu0 %655, %v516
        %v657 = vpop.permute.xlu0 %656
        %660 = vset.pattern.permute.xlu0 0
        %661 = vperm.xlu0 %660, %v517
        %v662 = vpop.permute.xlu0 %661
        %665 = vset.pattern.permute.xlu0 0
        %666 = vperm.xlu0 %665, %v518
        %v667 = vpop.permute.xlu0 %666
        %670 = vset.pattern.permute.xlu0 0
        %671 = vperm.xlu0 %670, %v519
        %v672 = vpop.permute.xlu0 %671
        %675 = vset.pattern.permute.xlu0 0
        %676 = vperm.xlu0 %675, %v520
        %v677 = vpop.permute.xlu0 %676
        %680 = vset.pattern.permute.xlu0 0
        %681 = vperm.xlu0 %680, %v521
        %v682 = vpop.permute.xlu0 %681
        %685 = vset.pattern.permute.xlu0 0
        %686 = vperm.xlu0 %685, %v522
        %v687 = vpop.permute.xlu0 %686
        %690 = vset.pattern.permute.xlu0 0
        %691 = vperm.xlu0 %690, %v523
        %v692 = vpop.permute.xlu0 %691
        %695 = vset.pattern.permute.xlu0 0
        %696 = vperm.xlu0 %695, %v524
        %v697 = vpop.permute.xlu0 %696
        %700 = vset.pattern.permute.xlu0 0
        %701 = vperm.xlu0 %700, %v525
        %v702 = vpop.permute.xlu0 %701
        %705 = vset.pattern.permute.xlu0 0
        %706 = vperm.xlu0 %705, %v526
        %v707 = vpop.permute.xlu0 %706
        %710 = vset.pattern.permute.xlu0 0
        %711 = vperm.xlu0 %710, %v527
        %v712 = vpop.permute.xlu0 %711
        %v715 = vperm.slane %v533, 0
        %v717 = vmul.f32 %v537, %v715
        %v718 = vmul.f32 %v542, %v715
        %v719 = vmul.f32 %v547, %v715
        %v720 = vmul.f32 %v552, %v715
        %v721 = vmul.f32 %v557, %v715
        %v722 = vmul.f32 %v562, %v715
        %v723 = vmul.f32 %v567, %v715
        %v724 = vmul.f32 %v572, %v715
        %v725 = vmul.f32 %v577, %v715
        %v726 = vmul.f32 %v582, %v715
        %v727 = vmul.f32 %v587, %v715
        %v728 = vmul.f32 %v592, %v715
        %v729 = vmul.f32 %v597, %v715
        %v730 = vmul.f32 %v602, %v715
        %v731 = vmul.f32 %v607, %v715
        %v732 = vmul.f32 %v612, %v715
        %v733 = vmul.f32 %v617, %v715
        %v734 = vmul.f32 %v622, %v715
        %v735 = vmul.f32 %v627, %v715
        %v736 = vmul.f32 %v632, %v715
        %v737 = vmul.f32 %v637, %v715
        %v738 = vmul.f32 %v642, %v715
        %v739 = vmul.f32 %v647, %v715
        %v740 = vmul.f32 %v652, %v715
        %v741 = vmul.f32 %v657, %v715
        %v742 = vmul.f32 %v662, %v715
        %v743 = vmul.f32 %v667, %v715
        %v744 = vmul.f32 %v672, %v715
        %v745 = vmul.f32 %v677, %v715
        %v746 = vmul.f32 %v682, %v715
        %v747 = vmul.f32 %v687, %v715
        %v748 = vmul.f32 %v692, %v715
        %v749 = vmul.f32 %v697, %v715
        %v750 = vmul.f32 %v702, %v715
        %v751 = vmul.f32 %v707, %v715
        %v752 = vmul.f32 %v712, %v715
        %v753 = vadd.f32 %v717, 0.0
        %v754 = vadd.f32 %v718, 0.0
        %v755 = vadd.f32 %v719, 0.0
        %v756 = vadd.f32 %v720, 0.0
        %v757 = vadd.f32 %v721, 0.0
        %v758 = vadd.f32 %v722, 0.0
        %v759 = vadd.f32 %v723, 0.0
        %v760 = vadd.f32 %v724, 0.0
        %v761 = vadd.f32 %v725, 0.0
        %v762 = vadd.f32 %v726, 0.0
        %v763 = vadd.f32 %v727, 0.0
        %v764 = vadd.f32 %v728, 0.0
        %v765 = vadd.f32 %v729, 0.0
        %v766 = vadd.f32 %v730, 0.0
        %v767 = vadd.f32 %v731, 0.0
        %v768 = vadd.f32 %v732, 0.0
        %v769 = vadd.f32 %v733, 0.0
        %v770 = vadd.f32 %v734, 0.0
        %v771 = vadd.f32 %v735, 0.0
        %v772 = vadd.f32 %v736, 0.0
        %v773 = vadd.f32 %v737, 0.0
        %v774 = vadd.f32 %v738, 0.0
        %v775 = vadd.f32 %v739, 0.0
        %v776 = vadd.f32 %v740, 0.0
        %v777 = vadd.f32 %v741, 0.0
        %v778 = vadd.f32 %v742, 0.0
        %v779 = vadd.f32 %v743, 0.0
        %v780 = vadd.f32 %v744, 0.0
        %v781 = vadd.f32 %v745, 0.0
        %v782 = vadd.f32 %v746, 0.0
        %v783 = vadd.f32 %v747, 0.0
        %v784 = vadd.f32 %v748, 0.0
        %v785 = vadd.f32 %v749, 0.0
        %v786 = vadd.f32 %v750, 0.0
        %v787 = vadd.f32 %v751, 0.0
        %v788 = vadd.f32 %v752, 0.0
        %s789 = scalar_lea.vmem %s1, 1
        %v790 = vld [vmem:[%s789] sm:$0x1]
        %v792 = vperm.slane %v790, 0
        %v794 = vmul.f32 %v537, %v792
        %v795 = vmul.f32 %v542, %v792
        %v796 = vmul.f32 %v547, %v792
        %v797 = vmul.f32 %v552, %v792
        %v798 = vmul.f32 %v557, %v792
        %v799 = vmul.f32 %v562, %v792
        %v800 = vmul.f32 %v567, %v792
        %v801 = vmul.f32 %v572, %v792
        %v802 = vmul.f32 %v577, %v792
        %v803 = vmul.f32 %v582, %v792
        %v804 = vmul.f32 %v587, %v792
        %v805 = vmul.f32 %v592, %v792
        %v806 = vmul.f32 %v597, %v792
        %v807 = vmul.f32 %v602, %v792
        %v808 = vmul.f32 %v607, %v792
        %v809 = vmul.f32 %v612, %v792
        %v810 = vmul.f32 %v617, %v792
        %v811 = vmul.f32 %v622, %v792
        %v812 = vmul.f32 %v627, %v792
        %v813 = vmul.f32 %v632, %v792
        %v814 = vmul.f32 %v637, %v792
        %v815 = vmul.f32 %v642, %v792
        %v816 = vmul.f32 %v647, %v792
        %v817 = vmul.f32 %v652, %v792
        %v818 = vmul.f32 %v657, %v792
        %v819 = vmul.f32 %v662, %v792
        %v820 = vmul.f32 %v667, %v792
        %v821 = vmul.f32 %v672, %v792
        %v822 = vmul.f32 %v677, %v792
        %v823 = vmul.f32 %v682, %v792
        %v824 = vmul.f32 %v687, %v792
        %v825 = vmul.f32 %v692, %v792
        %v826 = vmul.f32 %v697, %v792
        %v827 = vmul.f32 %v702, %v792
        %v828 = vmul.f32 %v707, %v792
        %v829 = vmul.f32 %v712, %v792
        %vm866 = vcmask 1046528
        %v867 = vrot.slane %v794, 1
        %v868 = vrot.slane %v795, 1
        %v869 = vsel %vm866, %v867, %v868
        %v870 = vrot.slane %v796, 1
        %v871 = vsel %vm866, %v868, %v870
        %v872 = vrot.slane %v797, 1
        %v873 = vsel %vm866, %v870, %v872
        %v874 = vrot.slane %v798, 1
        %v875 = vsel %vm866, %v872, %v874
        %v876 = vrot.slane %v799, 1
        %v877 = vsel %vm866, %v874, %v876
        %v878 = vrot.slane %v800, 1
        %v879 = vsel %vm866, %v876, %v878
        %v880 = vrot.slane %v801, 1
        %v881 = vsel %vm866, %v878, %v880
        %v882 = vrot.slane %v802, 1
        %v883 = vsel %vm866, %v880, %v882
        %v884 = vrot.slane %v803, 1
        %v885 = vsel %vm866, %v882, %v884
        %v886 = vrot.slane %v804, 1
        %v887 = vsel %vm866, %v884, %v886
        %v888 = vrot.slane %v805, 1
        %v889 = vsel %vm866, %v886, %v888
        %v890 = vrot.slane %v806, 1
        %v891 = vsel %vm866, %v888, %v890
        %v892 = vrot.slane %v807, 1
        %v893 = vsel %vm866, %v890, %v892
        %v894 = vrot.slane %v808, 1
        %v895 = vsel %vm866, %v892, %v894
        %v896 = vrot.slane %v809, 1
        %v897 = vsel %vm866, %v894, %v896
        %v898 = vrot.slane %v810, 1
        %v899 = vsel %vm866, %v896, %v898
        %v900 = vrot.slane %v811, 1
        %v901 = vsel %vm866, %v898, %v900
        %v902 = vrot.slane %v812, 1
        %v903 = vsel %vm866, %v900, %v902
        %v904 = vrot.slane %v813, 1
        %v905 = vsel %vm866, %v902, %v904
        %v906 = vrot.slane %v814, 1
        %v907 = vsel %vm866, %v904, %v906
        %v908 = vrot.slane %v815, 1
        %v909 = vsel %vm866, %v906, %v908
        %v910 = vrot.slane %v816, 1
        %v911 = vsel %vm866, %v908, %v910
        %v912 = vrot.slane %v817, 1
        %v913 = vsel %vm866, %v910, %v912
        %v914 = vrot.slane %v818, 1
        %v915 = vsel %vm866, %v912, %v914
        %v916 = vrot.slane %v819, 1
        %v917 = vsel %vm866, %v914, %v916
        %v918 = vrot.slane %v820, 1
        %v919 = vsel %vm866, %v916, %v918
        %v920 = vrot.slane %v821, 1
        %v921 = vsel %vm866, %v918, %v920
        %v922 = vrot.slane %v822, 1
        %v923 = vsel %vm866, %v920, %v922
        %v924 = vrot.slane %v823, 1
        %v925 = vsel %vm866, %v922, %v924
        %v926 = vrot.slane %v824, 1
        %v927 = vsel %vm866, %v924, %v926
        %v928 = vrot.slane %v825, 1
        %v929 = vsel %vm866, %v926, %v928
        %v930 = vrot.slane %v826, 1
        %v931 = vsel %vm866, %v928, %v930
        %v932 = vrot.slane %v827, 1
        %v933 = vsel %vm866, %v930, %v932
        %v934 = vrot.slane %v828, 1
        %v935 = vsel %vm866, %v932, %v934
        %v936 = vrot.slane %v829, 1
        %v937 = vsel %vm866, %v934, %v936
        %v974 = vadd.f32 %v753, %v869
        %v975 = vadd.f32 %v754, %v871
        %v976 = vadd.f32 %v755, %v873
        %v977 = vadd.f32 %v756, %v875
        %v978 = vadd.f32 %v757, %v877
        %v979 = vadd.f32 %v758, %v879
        %v980 = vadd.f32 %v759, %v881
        %v981 = vadd.f32 %v760, %v883
        %v982 = vadd.f32 %v761, %v885
        %v983 = vadd.f32 %v762, %v887
        %v984 = vadd.f32 %v763, %v889
        %v985 = vadd.f32 %v764, %v891
        %v986 = vadd.f32 %v765, %v893
        %v987 = vadd.f32 %v766, %v895
        %v988 = vadd.f32 %v767, %v897
        %v989 = vadd.f32 %v768, %v899
        %v990 = vadd.f32 %v769, %v901
        %v991 = vadd.f32 %v770, %v903
        %v992 = vadd.f32 %v771, %v905
        %v993 = vadd.f32 %v772, %v907
        %v994 = vadd.f32 %v773, %v909
        %v995 = vadd.f32 %v774, %v911
        %v996 = vadd.f32 %v775, %v913
        %v997 = vadd.f32 %v776, %v915
        %v998 = vadd.f32 %v777, %v917
        %v999 = vadd.f32 %v778, %v919
        %v1000 = vadd.f32 %v779, %v921
        %v1001 = vadd.f32 %v780, %v923
        %v1002 = vadd.f32 %v781, %v925
        %v1003 = vadd.f32 %v782, %v927
        %v1004 = vadd.f32 %v783, %v929
        %v1005 = vadd.f32 %v784, %v931
        %v1006 = vadd.f32 %v785, %v933
        %v1007 = vadd.f32 %v786, %v935
        %v1008 = vadd.f32 %v787, %v937
        %v1009 = vadd.f32 %v788, %v936
        %s1010 = scalar_lea.vmem %s1, 2
        %v1011 = vld [vmem:[%s1010] sm:$0x1]
        %v1013 = vperm.slane %v1011, 0
        %v1015 = vmul.f32 %v537, %v1013
        %v1016 = vmul.f32 %v542, %v1013
        %v1017 = vmul.f32 %v547, %v1013
        %v1018 = vmul.f32 %v552, %v1013
        %v1019 = vmul.f32 %v557, %v1013
        %v1020 = vmul.f32 %v562, %v1013
        %v1021 = vmul.f32 %v567, %v1013
        %v1022 = vmul.f32 %v572, %v1013
        %v1023 = vmul.f32 %v577, %v1013
        %v1024 = vmul.f32 %v582, %v1013
        %v1025 = vmul.f32 %v587, %v1013
        %v1026 = vmul.f32 %v592, %v1013
        %v1027 = vmul.f32 %v597, %v1013
        %v1028 = vmul.f32 %v602, %v1013
        %v1029 = vmul.f32 %v607, %v1013
        %v1030 = vmul.f32 %v612, %v1013
        %v1031 = vmul.f32 %v617, %v1013
        %v1032 = vmul.f32 %v622, %v1013
        %v1033 = vmul.f32 %v627, %v1013
        %v1034 = vmul.f32 %v632, %v1013
        %v1035 = vmul.f32 %v637, %v1013
        %v1036 = vmul.f32 %v642, %v1013
        %v1037 = vmul.f32 %v647, %v1013
        %v1038 = vmul.f32 %v652, %v1013
        %v1039 = vmul.f32 %v657, %v1013
        %v1040 = vmul.f32 %v662, %v1013
        %v1041 = vmul.f32 %v667, %v1013
        %v1042 = vmul.f32 %v672, %v1013
        %v1043 = vmul.f32 %v677, %v1013
        %v1044 = vmul.f32 %v682, %v1013
        %v1045 = vmul.f32 %v687, %v1013
        %v1046 = vmul.f32 %v692, %v1013
        %v1047 = vmul.f32 %v697, %v1013
        %v1048 = vmul.f32 %v702, %v1013
        %v1049 = vmul.f32 %v707, %v1013
        %v1050 = vmul.f32 %v712, %v1013
        %vm1087 = vcmask 1045504
        %v1088 = vrot.slane %v1015, 2
        %v1089 = vrot.slane %v1016, 2
        %v1090 = vsel %vm1087, %v1088, %v1089
        %v1091 = vrot.slane %v1017, 2
        %v1092 = vsel %vm1087, %v1089, %v1091
        %v1093 = vrot.slane %v1018, 2
        %v1094 = vsel %vm1087, %v1091, %v1093
        %v1095 = vrot.slane %v1019, 2
        %v1096 = vsel %vm1087, %v1093, %v1095
        %v1097 = vrot.slane %v1020, 2
        %v1098 = vsel %vm1087, %v1095, %v1097
        %v1099 = vrot.slane %v1021, 2
        %v1100 = vsel %vm1087, %v1097, %v1099
        %v1101 = vrot.slane %v1022, 2
        %v1102 = vsel %vm1087, %v1099, %v1101
        %v1103 = vrot.slane %v1023, 2
        %v1104 = vsel %vm1087, %v1101, %v1103
        %v1105 = vrot.slane %v1024, 2
        %v1106 = vsel %vm1087, %v1103, %v1105
        %v1107 = vrot.slane %v1025, 2
        %v1108 = vsel %vm1087, %v1105, %v1107
        %v1109 = vrot.slane %v1026, 2
        %v1110 = vsel %vm1087, %v1107, %v1109
        %v1111 = vrot.slane %v1027, 2
        %v1112 = vsel %vm1087, %v1109, %v1111
        %v1113 = vrot.slane %v1028, 2
        %v1114 = vsel %vm1087, %v1111, %v1113
        %v1115 = vrot.slane %v1029, 2
        %v1116 = vsel %vm1087, %v1113, %v1115
        %v1117 = vrot.slane %v1030, 2
        %v1118 = vsel %vm1087, %v1115, %v1117
        %v1119 = vrot.slane %v1031, 2
        %v1120 = vsel %vm1087, %v1117, %v1119
        %v1121 = vrot.slane %v1032, 2
        %v1122 = vsel %vm1087, %v1119, %v1121
        %v1123 = vrot.slane %v1033, 2
        %v1124 = vsel %vm1087, %v1121, %v1123
        %v1125 = vrot.slane %v1034, 2
        %v1126 = vsel %vm1087, %v1123, %v1125
        %v1127 = vrot.slane %v1035, 2
        %v1128 = vsel %vm1087, %v1125, %v1127
        %v1129 = vrot.slane %v1036, 2
        %v1130 = vsel %vm1087, %v1127, %v1129
        %v1131 = vrot.slane %v1037, 2
        %v1132 = vsel %vm1087, %v1129, %v1131
        %v1133 = vrot.slane %v1038, 2
        %v1134 = vsel %vm1087, %v1131, %v1133
        %v1135 = vrot.slane %v1039, 2
        %v1136 = vsel %vm1087, %v1133, %v1135
        %v1137 = vrot.slane %v1040, 2
        %v1138 = vsel %vm1087, %v1135, %v1137
        %v1139 = vrot.slane %v1041, 2
        %v1140 = vsel %vm1087, %v1137, %v1139
        %v1141 = vrot.slane %v1042, 2
        %v1142 = vsel %vm1087, %v1139, %v1141
        %v1143 = vrot.slane %v1043, 2
        %v1144 = vsel %vm1087, %v1141, %v1143
        %v1145 = vrot.slane %v1044, 2
        %v1146 = vsel %vm1087, %v1143, %v1145
        %v1147 = vrot.slane %v1045, 2
        %v1148 = vsel %vm1087, %v1145, %v1147
        %v1149 = vrot.slane %v1046, 2
        %v1150 = vsel %vm1087, %v1147, %v1149
        %v1151 = vrot.slane %v1047, 2
        %v1152 = vsel %vm1087, %v1149, %v1151
        %v1153 = vrot.slane %v1048, 2
        %v1154 = vsel %vm1087, %v1151, %v1153
        %v1155 = vrot.slane %v1049, 2
        %v1156 = vsel %vm1087, %v1153, %v1155
        %v1157 = vrot.slane %v1050, 2
        %v1158 = vsel %vm1087, %v1155, %v1157
        %v1195 = vadd.f32 %v974, %v1090
        %v1196 = vadd.f32 %v975, %v1092
        %v1197 = vadd.f32 %v976, %v1094
        %v1198 = vadd.f32 %v977, %v1096
        %v1199 = vadd.f32 %v978, %v1098
        %v1200 = vadd.f32 %v979, %v1100
        %v1201 = vadd.f32 %v980, %v1102
        %v1202 = vadd.f32 %v981, %v1104
        %v1203 = vadd.f32 %v982, %v1106
        %v1204 = vadd.f32 %v983, %v1108
        %v1205 = vadd.f32 %v984, %v1110
        %v1206 = vadd.f32 %v985, %v1112
        %v1207 = vadd.f32 %v986, %v1114
        %v1208 = vadd.f32 %v987, %v1116
        %v1209 = vadd.f32 %v988, %v1118
        %v1210 = vadd.f32 %v989, %v1120
        %v1211 = vadd.f32 %v990, %v1122
        %v1212 = vadd.f32 %v991, %v1124
        %v1213 = vadd.f32 %v992, %v1126
        %v1214 = vadd.f32 %v993, %v1128
        %v1215 = vadd.f32 %v994, %v1130
        %v1216 = vadd.f32 %v995, %v1132
        %v1217 = vadd.f32 %v996, %v1134
        %v1218 = vadd.f32 %v997, %v1136
        %v1219 = vadd.f32 %v998, %v1138
        %v1220 = vadd.f32 %v999, %v1140
        %v1221 = vadd.f32 %v1000, %v1142
        %v1222 = vadd.f32 %v1001, %v1144
        %v1223 = vadd.f32 %v1002, %v1146
        %v1224 = vadd.f32 %v1003, %v1148
        %v1225 = vadd.f32 %v1004, %v1150
        %v1226 = vadd.f32 %v1005, %v1152
        %v1227 = vadd.f32 %v1006, %v1154
        %v1228 = vadd.f32 %v1007, %v1156
        %v1229 = vadd.f32 %v1008, %v1158
        %v1230 = vadd.f32 %v1009, %v1157
        %s1231 = scalar_lea.vmem %s1, 3
        %v1232 = vld [vmem:[%s1231] sm:$0x1]
        %1234 = vset.pattern.permute.xlu0 0
        %1235 = vperm.xlu0 %1234, %v528
        %v1236 = vpop.permute.xlu0 %1235
        %1239 = vset.pattern.permute.xlu0 0
        %1240 = vperm.xlu0 %1239, %v529
        %v1241 = vpop.permute.xlu0 %1240
        %v1244 = vperm.slane %v1232, 0
        %v1246 = vmul.f32 %v547, %v1244
        %v1247 = vmul.f32 %v552, %v1244
        %v1248 = vmul.f32 %v557, %v1244
        %v1249 = vmul.f32 %v562, %v1244
        %v1250 = vmul.f32 %v567, %v1244
        %v1251 = vmul.f32 %v572, %v1244
        %v1252 = vmul.f32 %v577, %v1244
        %v1253 = vmul.f32 %v582, %v1244
        %v1254 = vmul.f32 %v587, %v1244
        %v1255 = vmul.f32 %v592, %v1244
        %v1256 = vmul.f32 %v597, %v1244
        %v1257 = vmul.f32 %v602, %v1244
        %v1258 = vmul.f32 %v607, %v1244
        %v1259 = vmul.f32 %v612, %v1244
        %v1260 = vmul.f32 %v617, %v1244
        %v1261 = vmul.f32 %v622, %v1244
        %v1262 = vmul.f32 %v627, %v1244
        %v1263 = vmul.f32 %v632, %v1244
        %v1264 = vmul.f32 %v637, %v1244
        %v1265 = vmul.f32 %v642, %v1244
        %v1266 = vmul.f32 %v647, %v1244
        %v1267 = vmul.f32 %v652, %v1244
        %v1268 = vmul.f32 %v657, %v1244
        %v1269 = vmul.f32 %v662, %v1244
        %v1270 = vmul.f32 %v667, %v1244
        %v1271 = vmul.f32 %v672, %v1244
        %v1272 = vmul.f32 %v677, %v1244
        %v1273 = vmul.f32 %v682, %v1244
        %v1274 = vmul.f32 %v687, %v1244
        %v1275 = vmul.f32 %v692, %v1244
        %v1276 = vmul.f32 %v697, %v1244
        %v1277 = vmul.f32 %v702, %v1244
        %v1278 = vmul.f32 %v707, %v1244
        %v1279 = vmul.f32 %v712, %v1244
        %v1280 = vmul.f32 %v1236, %v1244
        %v1281 = vmul.f32 %v1241, %v1244
        %v1318 = vrot.slane %v1246, 2
        %v1319 = vrot.slane %v1247, 2
        %v1320 = vsel %vm1087, %v1318, %v1319
        %v1321 = vrot.slane %v1248, 2
        %v1322 = vsel %vm1087, %v1319, %v1321
        %v1323 = vrot.slane %v1249, 2
        %v1324 = vsel %vm1087, %v1321, %v1323
        %v1325 = vrot.slane %v1250, 2
        %v1326 = vsel %vm1087, %v1323, %v1325
        %v1327 = vrot.slane %v1251, 2
        %v1328 = vsel %vm1087, %v1325, %v1327
        %v1329 = vrot.slane %v1252, 2
        %v1330 = vsel %vm1087, %v1327, %v1329
        %v1331 = vrot.slane %v1253, 2
        %v1332 = vsel %vm1087, %v1329, %v1331
        %v1333 = vrot.slane %v1254, 2
        %v1334 = vsel %vm1087, %v1331, %v1333
        %v1335 = vrot.slane %v1255, 2
        %v1336 = vsel %vm1087, %v1333, %v1335
        %v1337 = vrot.slane %v1256, 2
        %v1338 = vsel %vm1087, %v1335, %v1337
        %v1339 = vrot.slane %v1257, 2
        %v1340 = vsel %vm1087, %v1337, %v1339
        %v1341 = vrot.slane %v1258, 2
        %v1342 = vsel %vm1087, %v1339, %v1341
        %v1343 = vrot.slane %v1259, 2
        %v1344 = vsel %vm1087, %v1341, %v1343
        %v1345 = vrot.slane %v1260, 2
        %v1346 = vsel %vm1087, %v1343, %v1345
        %v1347 = vrot.slane %v1261, 2
        %v1348 = vsel %vm1087, %v1345, %v1347
        %v1349 = vrot.slane %v1262, 2
        %v1350 = vsel %vm1087, %v1347, %v1349
        %v1351 = vrot.slane %v1263, 2
        %v1352 = vsel %vm1087, %v1349, %v1351
        %v1353 = vrot.slane %v1264, 2
        %v1354 = vsel %vm1087, %v1351, %v1353
        %v1355 = vrot.slane %v1265, 2
        %v1356 = vsel %vm1087, %v1353, %v1355
        %v1357 = vrot.slane %v1266, 2
        %v1358 = vsel %vm1087, %v1355, %v1357
        %v1359 = vrot.slane %v1267, 2
        %v1360 = vsel %vm1087, %v1357, %v1359
        %v1361 = vrot.slane %v1268, 2
        %v1362 = vsel %vm1087, %v1359, %v1361
        %v1363 = vrot.slane %v1269, 2
        %v1364 = vsel %vm1087, %v1361, %v1363
        %v1365 = vrot.slane %v1270, 2
        %v1366 = vsel %vm1087, %v1363, %v1365
        %v1367 = vrot.slane %v1271, 2
        %v1368 = vsel %vm1087, %v1365, %v1367
        %v1369 = vrot.slane %v1272, 2
        %v1370 = vsel %vm1087, %v1367, %v1369
        %v1371 = vrot.slane %v1273, 2
        %v1372 = vsel %vm1087, %v1369, %v1371
        %v1373 = vrot.slane %v1274, 2
        %v1374 = vsel %vm1087, %v1371, %v1373
        %v1375 = vrot.slane %v1275, 2
        %v1376 = vsel %vm1087, %v1373, %v1375
        %v1377 = vrot.slane %v1276, 2
        %v1378 = vsel %vm1087, %v1375, %v1377
        %v1379 = vrot.slane %v1277, 2
        %v1380 = vsel %vm1087, %v1377, %v1379
        %v1381 = vrot.slane %v1278, 2
        %v1382 = vsel %vm1087, %v1379, %v1381
        %v1383 = vrot.slane %v1279, 2
        %v1384 = vsel %vm1087, %v1381, %v1383
        %v1385 = vrot.slane %v1280, 2
        %v1386 = vsel %vm1087, %v1383, %v1385
        %v1387 = vrot.slane %v1281, 2
        %v1388 = vsel %vm1087, %v1385, %v1387
        %v1425 = vadd.f32 %v1195, %v1320
        %v1426 = vadd.f32 %v1196, %v1322
        %v1427 = vadd.f32 %v1197, %v1324
        %v1428 = vadd.f32 %v1198, %v1326
        %v1429 = vadd.f32 %v1199, %v1328
        %v1430 = vadd.f32 %v1200, %v1330
        %v1431 = vadd.f32 %v1201, %v1332
        %v1432 = vadd.f32 %v1202, %v1334
        %v1433 = vadd.f32 %v1203, %v1336
        %v1434 = vadd.f32 %v1204, %v1338
        %v1435 = vadd.f32 %v1205, %v1340
        %v1436 = vadd.f32 %v1206, %v1342
        %v1437 = vadd.f32 %v1207, %v1344
        %v1438 = vadd.f32 %v1208, %v1346
        %v1439 = vadd.f32 %v1209, %v1348
        %v1440 = vadd.f32 %v1210, %v1350
        %v1441 = vadd.f32 %v1211, %v1352
        %v1442 = vadd.f32 %v1212, %v1354
        %v1443 = vadd.f32 %v1213, %v1356
        %v1444 = vadd.f32 %v1214, %v1358
        %v1445 = vadd.f32 %v1215, %v1360
        %v1446 = vadd.f32 %v1216, %v1362
        %v1447 = vadd.f32 %v1217, %v1364
        %v1448 = vadd.f32 %v1218, %v1366
        %v1449 = vadd.f32 %v1219, %v1368
        %v1450 = vadd.f32 %v1220, %v1370
        %v1451 = vadd.f32 %v1221, %v1372
        %v1452 = vadd.f32 %v1222, %v1374
        %v1453 = vadd.f32 %v1223, %v1376
        %v1454 = vadd.f32 %v1224, %v1378
        %v1455 = vadd.f32 %v1225, %v1380
        %v1456 = vadd.f32 %v1226, %v1382
        %v1457 = vadd.f32 %v1227, %v1384
        %v1458 = vadd.f32 %v1228, %v1386
        %v1459 = vadd.f32 %v1229, %v1388
        %v1460 = vadd.f32 %v1230, %v1387
        %s1461 = scalar_lea.vmem %s1, 4
        %v1462 = vld [vmem:[%s1461] sm:$0x1]
        %1464 = vset.pattern.permute.xlu0 0
        %1465 = vperm.xlu0 %1464, %v530
        %v1466 = vpop.permute.xlu0 %1465
        %v1469 = vperm.slane %v1462, 0
        %v1471 = vmul.f32 %v547, %v1469
        %v1472 = vmul.f32 %v552, %v1469
        %v1473 = vmul.f32 %v557, %v1469
        %v1474 = vmul.f32 %v562, %v1469
        %v1475 = vmul.f32 %v567, %v1469
        %v1476 = vmul.f32 %v572, %v1469
        %v1477 = vmul.f32 %v577, %v1469
        %v1478 = vmul.f32 %v582, %v1469
        %v1479 = vmul.f32 %v587, %v1469
        %v1480 = vmul.f32 %v592, %v1469
        %v1481 = vmul.f32 %v597, %v1469
        %v1482 = vmul.f32 %v602, %v1469
        %v1483 = vmul.f32 %v607, %v1469
        %v1484 = vmul.f32 %v612, %v1469
        %v1485 = vmul.f32 %v617, %v1469
        %v1486 = vmul.f32 %v622, %v1469
        %v1487 = vmul.f32 %v627, %v1469
        %v1488 = vmul.f32 %v632, %v1469
        %v1489 = vmul.f32 %v637, %v1469
        %v1490 = vmul.f32 %v642, %v1469
        %v1491 = vmul.f32 %v647, %v1469
        %v1492 = vmul.f32 %v652, %v1469
        %v1493 = vmul.f32 %v657, %v1469
        %v1494 = vmul.f32 %v662, %v1469
        %v1495 = vmul.f32 %v667, %v1469
        %v1496 = vmul.f32 %v672, %v1469
        %v1497 = vmul.f32 %v677, %v1469
        %v1498 = vmul.f32 %v682, %v1469
        %v1499 = vmul.f32 %v687, %v1469
        %v1500 = vmul.f32 %v692, %v1469
        %v1501 = vmul.f32 %v697, %v1469
        %v1502 = vmul.f32 %v702, %v1469
        %v1503 = vmul.f32 %v707, %v1469
        %v1504 = vmul.f32 %v712, %v1469
        %v1505 = vmul.f32 %v1236, %v1469
        %v1506 = vmul.f32 %v1241, %v1469
        %v1507 = vmul.f32 %v1466, %v1469
        %vm1545 = vcmask 1044480
        %v1546 = vrot.slane %v1471, 3
        %v1547 = vrot.slane %v1472, 3
        %v1548 = vsel %vm1545, %v1546, %v1547
        %v1549 = vrot.slane %v1473, 3
        %v1550 = vsel %vm1545, %v1547, %v1549
        %v1551 = vrot.slane %v1474, 3
        %v1552 = vsel %vm1545, %v1549, %v1551
        %v1553 = vrot.slane %v1475, 3
        %v1554 = vsel %vm1545, %v1551, %v1553
        %v1555 = vrot.slane %v1476, 3
        %v1556 = vsel %vm1545, %v1553, %v1555
        %v1557 = vrot.slane %v1477, 3
        %v1558 = vsel %vm1545, %v1555, %v1557
        %v1559 = vrot.slane %v1478, 3
        %v1560 = vsel %vm1545, %v1557, %v1559
        %v1561 = vrot.slane %v1479, 3
        %v1562 = vsel %vm1545, %v1559, %v1561
        %v1563 = vrot.slane %v1480, 3
        %v1564 = vsel %vm1545, %v1561, %v1563
        %v1565 = vrot.slane %v1481, 3
        %v1566 = vsel %vm1545, %v1563, %v1565
        %v1567 = vrot.slane %v1482, 3
        %v1568 = vsel %vm1545, %v1565, %v1567
        %v1569 = vrot.slane %v1483, 3
        %v1570 = vsel %vm1545, %v1567, %v1569
        %v1571 = vrot.slane %v1484, 3
        %v1572 = vsel %vm1545, %v1569, %v1571
        %v1573 = vrot.slane %v1485, 3
        %v1574 = vsel %vm1545, %v1571, %v1573
        %v1575 = vrot.slane %v1486, 3
        %v1576 = vsel %vm1545, %v1573, %v1575
        %v1577 = vrot.slane %v1487, 3
        %v1578 = vsel %vm1545, %v1575, %v1577
        %v1579 = vrot.slane %v1488, 3
        %v1580 = vsel %vm1545, %v1577, %v1579
        %v1581 = vrot.slane %v1489, 3
        %v1582 = vsel %vm1545, %v1579, %v1581
        %v1583 = vrot.slane %v1490, 3
        %v1584 = vsel %vm1545, %v1581, %v1583
        %v1585 = vrot.slane %v1491, 3
        %v1586 = vsel %vm1545, %v1583, %v1585
        %v1587 = vrot.slane %v1492, 3
        %v1588 = vsel %vm1545, %v1585, %v1587
        %v1589 = vrot.slane %v1493, 3
        %v1590 = vsel %vm1545, %v1587, %v1589
        %v1591 = vrot.slane %v1494, 3
        %v1592 = vsel %vm1545, %v1589, %v1591
        %v1593 = vrot.slane %v1495, 3
        %v1594 = vsel %vm1545, %v1591, %v1593
        %v1595 = vrot.slane %v1496, 3
        %v1596 = vsel %vm1545, %v1593, %v1595
        %v1597 = vrot.slane %v1497, 3
        %v1598 = vsel %vm1545, %v1595, %v1597
        %v1599 = vrot.slane %v1498, 3
        %v1600 = vsel %vm1545, %v1597, %v1599
        %v1601 = vrot.slane %v1499, 3
        %v1602 = vsel %vm1545, %v1599, %v1601
        %v1603 = vrot.slane %v1500, 3
        %v1604 = vsel %vm1545, %v1601, %v1603
        %v1605 = vrot.slane %v1501, 3
        %v1606 = vsel %vm1545, %v1603, %v1605
        %v1607 = vrot.slane %v1502, 3
        %v1608 = vsel %vm1545, %v1605, %v1607
        %v1609 = vrot.slane %v1503, 3
        %v1610 = vsel %vm1545, %v1607, %v1609
        %v1611 = vrot.slane %v1504, 3
        %v1612 = vsel %vm1545, %v1609, %v1611
        %v1613 = vrot.slane %v1505, 3
        %v1614 = vsel %vm1545, %v1611, %v1613
        %v1615 = vrot.slane %v1506, 3
        %v1616 = vsel %vm1545, %v1613, %v1615
        %v1617 = vrot.slane %v1507, 3
        %v1618 = vsel %vm1545, %v1615, %v1617
        %v1655 = vadd.f32 %v1425, %v1548
        %v1656 = vadd.f32 %v1426, %v1550
        %v1657 = vadd.f32 %v1427, %v1552
        %v1658 = vadd.f32 %v1428, %v1554
        %v1659 = vadd.f32 %v1429, %v1556
        %v1660 = vadd.f32 %v1430, %v1558
        %v1661 = vadd.f32 %v1431, %v1560
        %v1662 = vadd.f32 %v1432, %v1562
        %v1663 = vadd.f32 %v1433, %v1564
        %v1664 = vadd.f32 %v1434, %v1566
        %v1665 = vadd.f32 %v1435, %v1568
        %v1666 = vadd.f32 %v1436, %v1570
        %v1667 = vadd.f32 %v1437, %v1572
        %v1668 = vadd.f32 %v1438, %v1574
        %v1669 = vadd.f32 %v1439, %v1576
        %v1670 = vadd.f32 %v1440, %v1578
        %v1671 = vadd.f32 %v1441, %v1580
        %v1672 = vadd.f32 %v1442, %v1582
        %v1673 = vadd.f32 %v1443, %v1584
        %v1674 = vadd.f32 %v1444, %v1586
        %v1675 = vadd.f32 %v1445, %v1588
        %v1676 = vadd.f32 %v1446, %v1590
        %v1677 = vadd.f32 %v1447, %v1592
        %v1678 = vadd.f32 %v1448, %v1594
        %v1679 = vadd.f32 %v1449, %v1596
        %v1680 = vadd.f32 %v1450, %v1598
        %v1681 = vadd.f32 %v1451, %v1600
        %v1682 = vadd.f32 %v1452, %v1602
        %v1683 = vadd.f32 %v1453, %v1604
        %v1684 = vadd.f32 %v1454, %v1606
        %v1685 = vadd.f32 %v1455, %v1608
        %v1686 = vadd.f32 %v1456, %v1610
        %v1687 = vadd.f32 %v1457, %v1612
        %v1688 = vadd.f32 %v1458, %v1614
        %v1689 = vadd.f32 %v1459, %v1616
        %v1690 = vadd.f32 %v1460, %v1618
        %s1691 = scalar_lea.vmem %s1, 5
        %v1692 = vld [vmem:[%s1691] sm:$0x1]
        %v1694 = vperm.slane %v1692, 0
        %v1696 = vmul.f32 %v547, %v1694
        %v1697 = vmul.f32 %v552, %v1694
        %v1698 = vmul.f32 %v557, %v1694
        %v1699 = vmul.f32 %v562, %v1694
        %v1700 = vmul.f32 %v567, %v1694
        %v1701 = vmul.f32 %v572, %v1694
        %v1702 = vmul.f32 %v577, %v1694
        %v1703 = vmul.f32 %v582, %v1694
        %v1704 = vmul.f32 %v587, %v1694
        %v1705 = vmul.f32 %v592, %v1694
        %v1706 = vmul.f32 %v597, %v1694
        %v1707 = vmul.f32 %v602, %v1694
        %v1708 = vmul.f32 %v607, %v1694
        %v1709 = vmul.f32 %v612, %v1694
        %v1710 = vmul.f32 %v617, %v1694
        %v1711 = vmul.f32 %v622, %v1694
        %v1712 = vmul.f32 %v627, %v1694
        %v1713 = vmul.f32 %v632, %v1694
        %v1714 = vmul.f32 %v637, %v1694
        %v1715 = vmul.f32 %v642, %v1694
        %v1716 = vmul.f32 %v647, %v1694
        %v1717 = vmul.f32 %v652, %v1694
        %v1718 = vmul.f32 %v657, %v1694
        %v1719 = vmul.f32 %v662, %v1694
        %v1720 = vmul.f32 %v667, %v1694
        %v1721 = vmul.f32 %v672, %v1694
        %v1722 = vmul.f32 %v677, %v1694
        %v1723 = vmul.f32 %v682, %v1694
        %v1724 = vmul.f32 %v687, %v1694
        %v1725 = vmul.f32 %v692, %v1694
        %v1726 = vmul.f32 %v697, %v1694
        %v1727 = vmul.f32 %v702, %v1694
        %v1728 = vmul.f32 %v707, %v1694
        %v1729 = vmul.f32 %v712, %v1694
        %v1730 = vmul.f32 %v1236, %v1694
        %v1731 = vmul.f32 %v1241, %v1694
        %v1732 = vmul.f32 %v1466, %v1694
        %vm1770 = vcmask 1043456
        %v1771 = vrot.slane %v1696, 4
        %v1772 = vrot.slane %v1697, 4
        %v1773 = vsel %vm1770, %v1771, %v1772
        %v1774 = vrot.slane %v1698, 4
        %v1775 = vsel %vm1770, %v1772, %v1774
        %v1776 = vrot.slane %v1699, 4
        %v1777 = vsel %vm1770, %v1774, %v1776
        %v1778 = vrot.slane %v1700, 4
        %v1779 = vsel %vm1770, %v1776, %v1778
        %v1780 = vrot.slane %v1701, 4
        %v1781 = vsel %vm1770, %v1778, %v1780
        %v1782 = vrot.slane %v1702, 4
        %v1783 = vsel %vm1770, %v1780, %v1782
        %v1784 = vrot.slane %v1703, 4
        %v1785 = vsel %vm1770, %v1782, %v1784
        %v1786 = vrot.slane %v1704, 4
        %v1787 = vsel %vm1770, %v1784, %v1786
        %v1788 = vrot.slane %v1705, 4
        %v1789 = vsel %vm1770, %v1786, %v1788
        %v1790 = vrot.slane %v1706, 4
        %v1791 = vsel %vm1770, %v1788, %v1790
        %v1792 = vrot.slane %v1707, 4
        %v1793 = vsel %vm1770, %v1790, %v1792
        %v1794 = vrot.slane %v1708, 4
        %v1795 = vsel %vm1770, %v1792, %v1794
        %v1796 = vrot.slane %v1709, 4
        %v1797 = vsel %vm1770, %v1794, %v1796
        %v1798 = vrot.slane %v1710, 4
        %v1799 = vsel %vm1770, %v1796, %v1798
        %v1800 = vrot.slane %v1711, 4
        %v1801 = vsel %vm1770, %v1798, %v1800
        %v1802 = vrot.slane %v1712, 4
        %v1803 = vsel %vm1770, %v1800, %v1802
        %v1804 = vrot.slane %v1713, 4
        %v1805 = vsel %vm1770, %v1802, %v1804
        %v1806 = vrot.slane %v1714, 4
        %v1807 = vsel %vm1770, %v1804, %v1806
        %v1808 = vrot.slane %v1715, 4
        %v1809 = vsel %vm1770, %v1806, %v1808
        %v1810 = vrot.slane %v1716, 4
        %v1811 = vsel %vm1770, %v1808, %v1810
        %v1812 = vrot.slane %v1717, 4
        %v1813 = vsel %vm1770, %v1810, %v1812
        %v1814 = vrot.slane %v1718, 4
        %v1815 = vsel %vm1770, %v1812, %v1814
        %v1816 = vrot.slane %v1719, 4
        %v1817 = vsel %vm1770, %v1814, %v1816
        %v1818 = vrot.slane %v1720, 4
        %v1819 = vsel %vm1770, %v1816, %v1818
        %v1820 = vrot.slane %v1721, 4
        %v1821 = vsel %vm1770, %v1818, %v1820
        %v1822 = vrot.slane %v1722, 4
        %v1823 = vsel %vm1770, %v1820, %v1822
        %v1824 = vrot.slane %v1723, 4
        %v1825 = vsel %vm1770, %v1822, %v1824
        %v1826 = vrot.slane %v1724, 4
        %v1827 = vsel %vm1770, %v1824, %v1826
        %v1828 = vrot.slane %v1725, 4
        %v1829 = vsel %vm1770, %v1826, %v1828
        %v1830 = vrot.slane %v1726, 4
        %v1831 = vsel %vm1770, %v1828, %v1830
        %v1832 = vrot.slane %v1727, 4
        %v1833 = vsel %vm1770, %v1830, %v1832
        %v1834 = vrot.slane %v1728, 4
        %v1835 = vsel %vm1770, %v1832, %v1834
        %v1836 = vrot.slane %v1729, 4
        %v1837 = vsel %vm1770, %v1834, %v1836
        %v1838 = vrot.slane %v1730, 4
        %v1839 = vsel %vm1770, %v1836, %v1838
        %v1840 = vrot.slane %v1731, 4
        %v1841 = vsel %vm1770, %v1838, %v1840
        %v1842 = vrot.slane %v1732, 4
        %v1843 = vsel %vm1770, %v1840, %v1842
        %v1880 = vadd.f32 %v1655, %v1773
        %v1881 = vadd.f32 %v1656, %v1775
        %v1882 = vadd.f32 %v1657, %v1777
        %v1883 = vadd.f32 %v1658, %v1779
        %v1884 = vadd.f32 %v1659, %v1781
        %v1885 = vadd.f32 %v1660, %v1783
        %v1886 = vadd.f32 %v1661, %v1785
        %v1887 = vadd.f32 %v1662, %v1787
        %v1888 = vadd.f32 %v1663, %v1789
        %v1889 = vadd.f32 %v1664, %v1791
        %v1890 = vadd.f32 %v1665, %v1793
        %v1891 = vadd.f32 %v1666, %v1795
        %v1892 = vadd.f32 %v1667, %v1797
        %v1893 = vadd.f32 %v1668, %v1799
        %v1894 = vadd.f32 %v1669, %v1801
        %v1895 = vadd.f32 %v1670, %v1803
        %v1896 = vadd.f32 %v1671, %v1805
        %v1897 = vadd.f32 %v1672, %v1807
        %v1898 = vadd.f32 %v1673, %v1809
        %v1899 = vadd.f32 %v1674, %v1811
        %v1900 = vadd.f32 %v1675, %v1813
        %v1901 = vadd.f32 %v1676, %v1815
        %v1902 = vadd.f32 %v1677, %v1817
        %v1903 = vadd.f32 %v1678, %v1819
        %v1904 = vadd.f32 %v1679, %v1821
        %v1905 = vadd.f32 %v1680, %v1823
        %v1906 = vadd.f32 %v1681, %v1825
        %v1907 = vadd.f32 %v1682, %v1827
        %v1908 = vadd.f32 %v1683, %v1829
        %v1909 = vadd.f32 %v1684, %v1831
        %v1910 = vadd.f32 %v1685, %v1833
        %v1911 = vadd.f32 %v1686, %v1835
        %v1912 = vadd.f32 %v1687, %v1837
        %v1913 = vadd.f32 %v1688, %v1839
        %v1914 = vadd.f32 %v1689, %v1841
        %v1915 = vadd.f32 %v1690, %v1843
        %s1916 = scalar_lea.vmem %s1, 6
        %v1917 = vld [vmem:[%s1916] sm:$0x1]
        %1919 = vset.pattern.permute.xlu0 0
        %1920 = vperm.xlu0 %1919, %v531
        %v1921 = vpop.permute.xlu0 %1920
        %1924 = vset.pattern.permute.xlu0 0
        %1925 = vperm.xlu0 %1924, %v532
        %v1926 = vpop.permute.xlu0 %1925
        %v1929 = vperm.slane %v1917, 0
        %v1931 = vmul.f32 %v557, %v1929
        %v1932 = vmul.f32 %v562, %v1929
        %v1933 = vmul.f32 %v567, %v1929
        %v1934 = vmul.f32 %v572, %v1929
        %v1935 = vmul.f32 %v577, %v1929
        %v1936 = vmul.f32 %v582, %v1929
        %v1937 = vmul.f32 %v587, %v1929
        %v1938 = vmul.f32 %v592, %v1929
        %v1939 = vmul.f32 %v597, %v1929
        %v1940 = vmul.f32 %v602, %v1929
        %v1941 = vmul.f32 %v607, %v1929
        %v1942 = vmul.f32 %v612, %v1929
        %v1943 = vmul.f32 %v617, %v1929
        %v1944 = vmul.f32 %v622, %v1929
        %v1945 = vmul.f32 %v627, %v1929
        %v1946 = vmul.f32 %v632, %v1929
        %v1947 = vmul.f32 %v637, %v1929
        %v1948 = vmul.f32 %v642, %v1929
        %v1949 = vmul.f32 %v647, %v1929
        %v1950 = vmul.f32 %v652, %v1929
        %v1951 = vmul.f32 %v657, %v1929
        %v1952 = vmul.f32 %v662, %v1929
        %v1953 = vmul.f32 %v667, %v1929
        %v1954 = vmul.f32 %v672, %v1929
        %v1955 = vmul.f32 %v677, %v1929
        %v1956 = vmul.f32 %v682, %v1929
        %v1957 = vmul.f32 %v687, %v1929
        %v1958 = vmul.f32 %v692, %v1929
        %v1959 = vmul.f32 %v697, %v1929
        %v1960 = vmul.f32 %v702, %v1929
        %v1961 = vmul.f32 %v707, %v1929
        %v1962 = vmul.f32 %v712, %v1929
        %v1963 = vmul.f32 %v1236, %v1929
        %v1964 = vmul.f32 %v1241, %v1929
        %v1965 = vmul.f32 %v1466, %v1929
        %v1966 = vmul.f32 %v1921, %v1929
        %v1967 = vmul.f32 %v1926, %v1929
        %v2005 = vrot.slane %v1931, 4
        %v2006 = vrot.slane %v1932, 4
        %v2007 = vsel %vm1770, %v2005, %v2006
        %v2008 = vrot.slane %v1933, 4
        %v2009 = vsel %vm1770, %v2006, %v2008
        %v2010 = vrot.slane %v1934, 4
        %v2011 = vsel %vm1770, %v2008, %v2010
        %v2012 = vrot.slane %v1935, 4
        %v2013 = vsel %vm1770, %v2010, %v2012
        %v2014 = vrot.slane %v1936, 4
        %v2015 = vsel %vm1770, %v2012, %v2014
        %v2016 = vrot.slane %v1937, 4
        %v2017 = vsel %vm1770, %v2014, %v2016
        %v2018 = vrot.slane %v1938, 4
        %v2019 = vsel %vm1770, %v2016, %v2018
        %v2020 = vrot.slane %v1939, 4
        %v2021 = vsel %vm1770, %v2018, %v2020
        %v2022 = vrot.slane %v1940, 4
        %v2023 = vsel %vm1770, %v2020, %v2022
        %v2024 = vrot.slane %v1941, 4
        %v2025 = vsel %vm1770, %v2022, %v2024
        %v2026 = vrot.slane %v1942, 4
        %v2027 = vsel %vm1770, %v2024, %v2026
        %v2028 = vrot.slane %v1943, 4
        %v2029 = vsel %vm1770, %v2026, %v2028
        %v2030 = vrot.slane %v1944, 4
        %v2031 = vsel %vm1770, %v2028, %v2030
        %v2032 = vrot.slane %v1945, 4
        %v2033 = vsel %vm1770, %v2030, %v2032
        %v2034 = vrot.slane %v1946, 4
        %v2035 = vsel %vm1770, %v2032, %v2034
        %v2036 = vrot.slane %v1947, 4
        %v2037 = vsel %vm1770, %v2034, %v2036
        %v2038 = vrot.slane %v1948, 4
        %v2039 = vsel %vm1770, %v2036, %v2038
        %v2040 = vrot.slane %v1949, 4
        %v2041 = vsel %vm1770, %v2038, %v2040
        %v2042 = vrot.slane %v1950, 4
        %v2043 = vsel %vm1770, %v2040, %v2042
        %v2044 = vrot.slane %v1951, 4
        %v2045 = vsel %vm1770, %v2042, %v2044
        %v2046 = vrot.slane %v1952, 4
        %v2047 = vsel %vm1770, %v2044, %v2046
        %v2048 = vrot.slane %v1953, 4
        %v2049 = vsel %vm1770, %v2046, %v2048
        %v2050 = vrot.slane %v1954, 4
        %v2051 = vsel %vm1770, %v2048, %v2050
        %v2052 = vrot.slane %v1955, 4
        %v2053 = vsel %vm1770, %v2050, %v2052
        %v2054 = vrot.slane %v1956, 4
        %v2055 = vsel %vm1770, %v2052, %v2054
        %v2056 = vrot.slane %v1957, 4
        %v2057 = vsel %vm1770, %v2054, %v2056
        %v2058 = vrot.slane %v1958, 4
        %v2059 = vsel %vm1770, %v2056, %v2058
        %v2060 = vrot.slane %v1959, 4
        %v2061 = vsel %vm1770, %v2058, %v2060
        %v2062 = vrot.slane %v1960, 4
        %v2063 = vsel %vm1770, %v2060, %v2062
        %v2064 = vrot.slane %v1961, 4
        %v2065 = vsel %vm1770, %v2062, %v2064
        %v2066 = vrot.slane %v1962, 4
        %v2067 = vsel %vm1770, %v2064, %v2066
        %v2068 = vrot.slane %v1963, 4
        %v2069 = vsel %vm1770, %v2066, %v2068
        %v2070 = vrot.slane %v1964, 4
        %v2071 = vsel %vm1770, %v2068, %v2070
        %v2072 = vrot.slane %v1965, 4
        %v2073 = vsel %vm1770, %v2070, %v2072
        %v2074 = vrot.slane %v1966, 4
        %v2075 = vsel %vm1770, %v2072, %v2074
        %v2076 = vrot.slane %v1967, 4
        %v2077 = vsel %vm1770, %v2074, %v2076
        %v2114 = vadd.f32 %v1880, %v2007
        %v2115 = vadd.f32 %v1881, %v2009
        %v2116 = vadd.f32 %v1882, %v2011
        %v2117 = vadd.f32 %v1883, %v2013
        %v2118 = vadd.f32 %v1884, %v2015
        %v2119 = vadd.f32 %v1885, %v2017
        %v2120 = vadd.f32 %v1886, %v2019
        %v2121 = vadd.f32 %v1887, %v2021
        %v2122 = vadd.f32 %v1888, %v2023
        %v2123 = vadd.f32 %v1889, %v2025
        %v2124 = vadd.f32 %v1890, %v2027
        %v2125 = vadd.f32 %v1891, %v2029
        %v2126 = vadd.f32 %v1892, %v2031
        %v2127 = vadd.f32 %v1893, %v2033
        %v2128 = vadd.f32 %v1894, %v2035
        %v2129 = vadd.f32 %v1895, %v2037
        %v2130 = vadd.f32 %v1896, %v2039
        %v2131 = vadd.f32 %v1897, %v2041
        %v2132 = vadd.f32 %v1898, %v2043
        %v2133 = vadd.f32 %v1899, %v2045
        %v2134 = vadd.f32 %v1900, %v2047
        %v2135 = vadd.f32 %v1901, %v2049
        %v2136 = vadd.f32 %v1902, %v2051
        %v2137 = vadd.f32 %v1903, %v2053
        %v2138 = vadd.f32 %v1904, %v2055
        %v2139 = vadd.f32 %v1905, %v2057
        %v2140 = vadd.f32 %v1906, %v2059
        %v2141 = vadd.f32 %v1907, %v2061
        %v2142 = vadd.f32 %v1908, %v2063
        %v2143 = vadd.f32 %v1909, %v2065
        %v2144 = vadd.f32 %v1910, %v2067
        %v2145 = vadd.f32 %v1911, %v2069
        %v2146 = vadd.f32 %v1912, %v2071
        %v2147 = vadd.f32 %v1913, %v2073
        %v2148 = vadd.f32 %v1914, %v2075
        %v2149 = vadd.f32 %v1915, %v2077
        %s2150 = scalar_lea.vmem %s1, 7
        %v2151 = vld [vmem:[%s2150] sm:$0x1]
        %v2153 = vperm.slane %v2151, 0
        %v2155 = vmul.f32 %v557, %v2153
        %v2156 = vmul.f32 %v562, %v2153
        %v2157 = vmul.f32 %v567, %v2153
        %v2158 = vmul.f32 %v572, %v2153
        %v2159 = vmul.f32 %v577, %v2153
        %v2160 = vmul.f32 %v582, %v2153
        %v2161 = vmul.f32 %v587, %v2153
        %v2162 = vmul.f32 %v592, %v2153
        %v2163 = vmul.f32 %v597, %v2153
        %v2164 = vmul.f32 %v602, %v2153
        %v2165 = vmul.f32 %v607, %v2153
        %v2166 = vmul.f32 %v612, %v2153
        %v2167 = vmul.f32 %v617, %v2153
        %v2168 = vmul.f32 %v622, %v2153
        %v2169 = vmul.f32 %v627, %v2153
        %v2170 = vmul.f32 %v632, %v2153
        %v2171 = vmul.f32 %v637, %v2153
        %v2172 = vmul.f32 %v642, %v2153
        %v2173 = vmul.f32 %v647, %v2153
        %v2174 = vmul.f32 %v652, %v2153
        %v2175 = vmul.f32 %v657, %v2153
        %v2176 = vmul.f32 %v662, %v2153
        %v2177 = vmul.f32 %v667, %v2153
        %v2178 = vmul.f32 %v672, %v2153
        %v2179 = vmul.f32 %v677, %v2153
        %v2180 = vmul.f32 %v682, %v2153
        %v2181 = vmul.f32 %v687, %v2153
        %v2182 = vmul.f32 %v692, %v2153
        %v2183 = vmul.f32 %v697, %v2153
        %v2184 = vmul.f32 %v702, %v2153
        %v2185 = vmul.f32 %v707, %v2153
        %v2186 = vmul.f32 %v712, %v2153
        %v2187 = vmul.f32 %v1236, %v2153
        %v2188 = vmul.f32 %v1241, %v2153
        %v2189 = vmul.f32 %v1466, %v2153
        %v2190 = vmul.f32 %v1921, %v2153
        %v2191 = vmul.f32 %v1926, %v2153
        %vm2229 = vcmask 1042432
        %v2230 = vrot.slane %v2155, 5
        %v2231 = vrot.slane %v2156, 5
        %v2232 = vsel %vm2229, %v2230, %v2231
        %v2233 = vrot.slane %v2157, 5
        %v2234 = vsel %vm2229, %v2231, %v2233
        %v2235 = vrot.slane %v2158, 5
        %v2236 = vsel %vm2229, %v2233, %v2235
        %v2237 = vrot.slane %v2159, 5
        %v2238 = vsel %vm2229, %v2235, %v2237
        %v2239 = vrot.slane %v2160, 5
        %v2240 = vsel %vm2229, %v2237, %v2239
        %v2241 = vrot.slane %v2161, 5
        %v2242 = vsel %vm2229, %v2239, %v2241
        %v2243 = vrot.slane %v2162, 5
        %v2244 = vsel %vm2229, %v2241, %v2243
        %v2245 = vrot.slane %v2163, 5
        %v2246 = vsel %vm2229, %v2243, %v2245
        %v2247 = vrot.slane %v2164, 5
        %v2248 = vsel %vm2229, %v2245, %v2247
        %v2249 = vrot.slane %v2165, 5
        %v2250 = vsel %vm2229, %v2247, %v2249
        %v2251 = vrot.slane %v2166, 5
        %v2252 = vsel %vm2229, %v2249, %v2251
        %v2253 = vrot.slane %v2167, 5
        %v2254 = vsel %vm2229, %v2251, %v2253
        %v2255 = vrot.slane %v2168, 5
        %v2256 = vsel %vm2229, %v2253, %v2255
        %v2257 = vrot.slane %v2169, 5
        %v2258 = vsel %vm2229, %v2255, %v2257
        %v2259 = vrot.slane %v2170, 5
        %v2260 = vsel %vm2229, %v2257, %v2259
        %v2261 = vrot.slane %v2171, 5
        %v2262 = vsel %vm2229, %v2259, %v2261
        %v2263 = vrot.slane %v2172, 5
        %v2264 = vsel %vm2229, %v2261, %v2263
        %v2265 = vrot.slane %v2173, 5
        %v2266 = vsel %vm2229, %v2263, %v2265
        %v2267 = vrot.slane %v2174, 5
        %v2268 = vsel %vm2229, %v2265, %v2267
        %v2269 = vrot.slane %v2175, 5
        %v2270 = vsel %vm2229, %v2267, %v2269
        %v2271 = vrot.slane %v2176, 5
        %v2272 = vsel %vm2229, %v2269, %v2271
        %v2273 = vrot.slane %v2177, 5
        %v2274 = vsel %vm2229, %v2271, %v2273
        %v2275 = vrot.slane %v2178, 5
        %v2276 = vsel %vm2229, %v2273, %v2275
        %v2277 = vrot.slane %v2179, 5
        %v2278 = vsel %vm2229, %v2275, %v2277
        %v2279 = vrot.slane %v2180, 5
        %v2280 = vsel %vm2229, %v2277, %v2279
        %v2281 = vrot.slane %v2181, 5
        %v2282 = vsel %vm2229, %v2279, %v2281
        %v2283 = vrot.slane %v2182, 5
        %v2284 = vsel %vm2229, %v2281, %v2283
        %v2285 = vrot.slane %v2183, 5
        %v2286 = vsel %vm2229, %v2283, %v2285
        %v2287 = vrot.slane %v2184, 5
        %v2288 = vsel %vm2229, %v2285, %v2287
        %v2289 = vrot.slane %v2185, 5
        %v2290 = vsel %vm2229, %v2287, %v2289
        %v2291 = vrot.slane %v2186, 5
        %v2292 = vsel %vm2229, %v2289, %v2291
        %v2293 = vrot.slane %v2187, 5
        %v2294 = vsel %vm2229, %v2291, %v2293
        %v2295 = vrot.slane %v2188, 5
        %v2296 = vsel %vm2229, %v2293, %v2295
        %v2297 = vrot.slane %v2189, 5
        %v2298 = vsel %vm2229, %v2295, %v2297
        %v2299 = vrot.slane %v2190, 5
        %v2300 = vsel %vm2229, %v2297, %v2299
        %v2301 = vrot.slane %v2191, 5
        %v2302 = vsel %vm2229, %v2299, %v2301
        %v2339 = vadd.f32 %v2114, %v2232
        %v2340 = vadd.f32 %v2115, %v2234
        %v2341 = vadd.f32 %v2116, %v2236
        %v2342 = vadd.f32 %v2117, %v2238
        %v2343 = vadd.f32 %v2118, %v2240
        %v2344 = vadd.f32 %v2119, %v2242
        %v2345 = vadd.f32 %v2120, %v2244
        %v2346 = vadd.f32 %v2121, %v2246
        %v2347 = vadd.f32 %v2122, %v2248
        %v2348 = vadd.f32 %v2123, %v2250
        %v2349 = vadd.f32 %v2124, %v2252
        %v2350 = vadd.f32 %v2125, %v2254
        %v2351 = vadd.f32 %v2126, %v2256
        %v2352 = vadd.f32 %v2127, %v2258
        %v2353 = vadd.f32 %v2128, %v2260
        %v2354 = vadd.f32 %v2129, %v2262
        %v2355 = vadd.f32 %v2130, %v2264
        %v2356 = vadd.f32 %v2131, %v2266
        %v2357 = vadd.f32 %v2132, %v2268
        %v2358 = vadd.f32 %v2133, %v2270
        %v2359 = vadd.f32 %v2134, %v2272
        %v2360 = vadd.f32 %v2135, %v2274
        %v2361 = vadd.f32 %v2136, %v2276
        %v2362 = vadd.f32 %v2137, %v2278
        %v2363 = vadd.f32 %v2138, %v2280
        %v2364 = vadd.f32 %v2139, %v2282
        %v2365 = vadd.f32 %v2140, %v2284
        %v2366 = vadd.f32 %v2141, %v2286
        %v2367 = vadd.f32 %v2142, %v2288
        %v2368 = vadd.f32 %v2143, %v2290
        %v2369 = vadd.f32 %v2144, %v2292
        %v2370 = vadd.f32 %v2145, %v2294
        %v2371 = vadd.f32 %v2146, %v2296
        %v2372 = vadd.f32 %v2147, %v2298
        %v2373 = vadd.f32 %v2148, %v2300
        %v2374 = vadd.f32 %v2149, %v2302
        %s2375 = scalar_lea.vmem %s1, 8
        %v2376 = vld [vmem:[%s2375] sm:$0x1]
        %v2378 = vperm.slane %v2376, 0
        %v2380 = vmul.f32 %v557, %v2378
        %v2381 = vmul.f32 %v562, %v2378
        %v2382 = vmul.f32 %v567, %v2378
        %v2383 = vmul.f32 %v572, %v2378
        %v2384 = vmul.f32 %v577, %v2378
        %v2385 = vmul.f32 %v582, %v2378
        %v2386 = vmul.f32 %v587, %v2378
        %v2387 = vmul.f32 %v592, %v2378
        %v2388 = vmul.f32 %v597, %v2378
        %v2389 = vmul.f32 %v602, %v2378
        %v2390 = vmul.f32 %v607, %v2378
        %v2391 = vmul.f32 %v612, %v2378
        %v2392 = vmul.f32 %v617, %v2378
        %v2393 = vmul.f32 %v622, %v2378
        %v2394 = vmul.f32 %v627, %v2378
        %v2395 = vmul.f32 %v632, %v2378
        %v2396 = vmul.f32 %v637, %v2378
        %v2397 = vmul.f32 %v642, %v2378
        %v2398 = vmul.f32 %v647, %v2378
        %v2399 = vmul.f32 %v652, %v2378
        %v2400 = vmul.f32 %v657, %v2378
        %v2401 = vmul.f32 %v662, %v2378
        %v2402 = vmul.f32 %v667, %v2378
        %v2403 = vmul.f32 %v672, %v2378
        %v2404 = vmul.f32 %v677, %v2378
        %v2405 = vmul.f32 %v682, %v2378
        %v2406 = vmul.f32 %v687, %v2378
        %v2407 = vmul.f32 %v692, %v2378
        %v2408 = vmul.f32 %v697, %v2378
        %v2409 = vmul.f32 %v702, %v2378
        %v2410 = vmul.f32 %v707, %v2378
        %v2411 = vmul.f32 %v712, %v2378
        %v2412 = vmul.f32 %v1236, %v2378
        %v2413 = vmul.f32 %v1241, %v2378
        %v2414 = vmul.f32 %v1466, %v2378
        %v2415 = vmul.f32 %v1921, %v2378
        %v2416 = vmul.f32 %v1926, %v2378
        %vm2454 = vcmask 1041408
        %v2455 = vrot.slane %v2380, 6
        %v2456 = vrot.slane %v2381, 6
        %v2457 = vsel %vm2454, %v2455, %v2456
        %v2458 = vrot.slane %v2382, 6
        %v2459 = vsel %vm2454, %v2456, %v2458
        %v2460 = vrot.slane %v2383, 6
        %v2461 = vsel %vm2454, %v2458, %v2460
        %v2462 = vrot.slane %v2384, 6
        %v2463 = vsel %vm2454, %v2460, %v2462
        %v2464 = vrot.slane %v2385, 6
        %v2465 = vsel %vm2454, %v2462, %v2464
        %v2466 = vrot.slane %v2386, 6
        %v2467 = vsel %vm2454, %v2464, %v2466
        %v2468 = vrot.slane %v2387, 6
        %v2469 = vsel %vm2454, %v2466, %v2468
        %v2470 = vrot.slane %v2388, 6
        %v2471 = vsel %vm2454, %v2468, %v2470
        %v2472 = vrot.slane %v2389, 6
        %v2473 = vsel %vm2454, %v2470, %v2472
        %v2474 = vrot.slane %v2390, 6
        %v2475 = vsel %vm2454, %v2472, %v2474
        %v2476 = vrot.slane %v2391, 6
        %v2477 = vsel %vm2454, %v2474, %v2476
        %v2478 = vrot.slane %v2392, 6
        %v2479 = vsel %vm2454, %v2476, %v2478
        %v2480 = vrot.slane %v2393, 6
        %v2481 = vsel %vm2454, %v2478, %v2480
        %v2482 = vrot.slane %v2394, 6
        %v2483 = vsel %vm2454, %v2480, %v2482
        %v2484 = vrot.slane %v2395, 6
        %v2485 = vsel %vm2454, %v2482, %v2484
        %v2486 = vrot.slane %v2396, 6
        %v2487 = vsel %vm2454, %v2484, %v2486
        %v2488 = vrot.slane %v2397, 6
        %v2489 = vsel %vm2454, %v2486, %v2488
        %v2490 = vrot.slane %v2398, 6
        %v2491 = vsel %vm2454, %v2488, %v2490
        %v2492 = vrot.slane %v2399, 6
        %v2493 = vsel %vm2454, %v2490, %v2492
        %v2494 = vrot.slane %v2400, 6
        %v2495 = vsel %vm2454, %v2492, %v2494
        %v2496 = vrot.slane %v2401, 6
        %v2497 = vsel %vm2454, %v2494, %v2496
        %v2498 = vrot.slane %v2402, 6
        %v2499 = vsel %vm2454, %v2496, %v2498
        %v2500 = vrot.slane %v2403, 6
        %v2501 = vsel %vm2454, %v2498, %v2500
        %v2502 = vrot.slane %v2404, 6
        %v2503 = vsel %vm2454, %v2500, %v2502
        %v2504 = vrot.slane %v2405, 6
        %v2505 = vsel %vm2454, %v2502, %v2504
        %v2506 = vrot.slane %v2406, 6
        %v2507 = vsel %vm2454, %v2504, %v2506
        %v2508 = vrot.slane %v2407, 6
        %v2509 = vsel %vm2454, %v2506, %v2508
        %v2510 = vrot.slane %v2408, 6
        %v2511 = vsel %vm2454, %v2508, %v2510
        %v2512 = vrot.slane %v2409, 6
        %v2513 = vsel %vm2454, %v2510, %v2512
        %v2514 = vrot.slane %v2410, 6
        %v2515 = vsel %vm2454, %v2512, %v2514
        %v2516 = vrot.slane %v2411, 6
        %v2517 = vsel %vm2454, %v2514, %v2516
        %v2518 = vrot.slane %v2412, 6
        %v2519 = vsel %vm2454, %v2516, %v2518
        %v2520 = vrot.slane %v2413, 6
        %v2521 = vsel %vm2454, %v2518, %v2520
        %v2522 = vrot.slane %v2414, 6
        %v2523 = vsel %vm2454, %v2520, %v2522
        %v2524 = vrot.slane %v2415, 6
        %v2525 = vsel %vm2454, %v2522, %v2524
        %v2526 = vrot.slane %v2416, 6
        %v2527 = vsel %vm2454, %v2524, %v2526
        %v2564 = vadd.f32 %v2339, %v2457
        %v2565 = vadd.f32 %v2340, %v2459
        %v2566 = vadd.f32 %v2341, %v2461
        %v2567 = vadd.f32 %v2342, %v2463
        %v2568 = vadd.f32 %v2343, %v2465
        %v2569 = vadd.f32 %v2344, %v2467
        %v2570 = vadd.f32 %v2345, %v2469
        %v2571 = vadd.f32 %v2346, %v2471
        %v2572 = vadd.f32 %v2347, %v2473
        %v2573 = vadd.f32 %v2348, %v2475
        %v2574 = vadd.f32 %v2349, %v2477
        %v2575 = vadd.f32 %v2350, %v2479
        %v2576 = vadd.f32 %v2351, %v2481
        %v2577 = vadd.f32 %v2352, %v2483
        %v2578 = vadd.f32 %v2353, %v2485
        %v2579 = vadd.f32 %v2354, %v2487
        %v2580 = vadd.f32 %v2355, %v2489
        %v2581 = vadd.f32 %v2356, %v2491
        %v2582 = vadd.f32 %v2357, %v2493
        %v2583 = vadd.f32 %v2358, %v2495
        %v2584 = vadd.f32 %v2359, %v2497
        %v2585 = vadd.f32 %v2360, %v2499
        %v2586 = vadd.f32 %v2361, %v2501
        %v2587 = vadd.f32 %v2362, %v2503
        %v2588 = vadd.f32 %v2363, %v2505
        %v2589 = vadd.f32 %v2364, %v2507
        %v2590 = vadd.f32 %v2365, %v2509
        %v2591 = vadd.f32 %v2366, %v2511
        %v2592 = vadd.f32 %v2367, %v2513
        %v2593 = vadd.f32 %v2368, %v2515
        %v2594 = vadd.f32 %v2369, %v2517
        %v2595 = vadd.f32 %v2370, %v2519
        %v2596 = vadd.f32 %v2371, %v2521
        %v2597 = vadd.f32 %v2372, %v2523
        %v2598 = vadd.f32 %v2373, %v2525
        %v2599 = vadd.f32 %v2374, %v2527
        %v2600 = vld [vmem:[%s2] sm:$0x1]
        %v2602 = vperm.slane %v2600, 0
        %v2604 = vmul.f32 %v2564, %v2602
        %v2605 = vmul.f32 %v2565, %v2602
        %v2606 = vmul.f32 %v2566, %v2602
        %v2607 = vmul.f32 %v2567, %v2602
        %v2608 = vmul.f32 %v2568, %v2602
        %v2609 = vmul.f32 %v2569, %v2602
        %v2610 = vmul.f32 %v2570, %v2602
        %v2611 = vmul.f32 %v2571, %v2602
        %v2612 = vmul.f32 %v2572, %v2602
        %v2613 = vmul.f32 %v2573, %v2602
        %v2614 = vmul.f32 %v2574, %v2602
        %v2615 = vmul.f32 %v2575, %v2602
        %v2616 = vmul.f32 %v2576, %v2602
        %v2617 = vmul.f32 %v2577, %v2602
        %v2618 = vmul.f32 %v2578, %v2602
        %v2619 = vmul.f32 %v2579, %v2602
        %v2620 = vmul.f32 %v2580, %v2602
        %v2621 = vmul.f32 %v2581, %v2602
        %v2622 = vmul.f32 %v2582, %v2602
        %v2623 = vmul.f32 %v2583, %v2602
        %v2624 = vmul.f32 %v2584, %v2602
        %v2625 = vmul.f32 %v2585, %v2602
        %v2626 = vmul.f32 %v2586, %v2602
        %v2627 = vmul.f32 %v2587, %v2602
        %v2628 = vmul.f32 %v2588, %v2602
        %v2629 = vmul.f32 %v2589, %v2602
        %v2630 = vmul.f32 %v2590, %v2602
        %v2631 = vmul.f32 %v2591, %v2602
        %v2632 = vmul.f32 %v2592, %v2602
        %v2633 = vmul.f32 %v2593, %v2602
        %v2634 = vmul.f32 %v2594, %v2602
        %v2635 = vmul.f32 %v2595, %v2602
        %v2636 = vmul.f32 %v2596, %v2602
        %v2637 = vmul.f32 %v2597, %v2602
        %v2638 = vmul.f32 %v2598, %v2602
        %v2639 = vmul.f32 %v2599, %v2602
        %v2640 = vld [vmem:[%s3] sm:$0x1]
        %v2642 = vperm.slane %v2640, 0
        %v2644 = vadd.f32 %v2604, %v2642
        %v2645 = vadd.f32 %v2605, %v2642
        %v2646 = vadd.f32 %v2606, %v2642
        %v2647 = vadd.f32 %v2607, %v2642
        %v2648 = vadd.f32 %v2608, %v2642
        %v2649 = vadd.f32 %v2609, %v2642
        %v2650 = vadd.f32 %v2610, %v2642
        %v2651 = vadd.f32 %v2611, %v2642
        %v2652 = vadd.f32 %v2612, %v2642
        %v2653 = vadd.f32 %v2613, %v2642
        %v2654 = vadd.f32 %v2614, %v2642
        %v2655 = vadd.f32 %v2615, %v2642
        %v2656 = vadd.f32 %v2616, %v2642
        %v2657 = vadd.f32 %v2617, %v2642
        %v2658 = vadd.f32 %v2618, %v2642
        %v2659 = vadd.f32 %v2619, %v2642
        %v2660 = vadd.f32 %v2620, %v2642
        %v2661 = vadd.f32 %v2621, %v2642
        %v2662 = vadd.f32 %v2622, %v2642
        %v2663 = vadd.f32 %v2623, %v2642
        %v2664 = vadd.f32 %v2624, %v2642
        %v2665 = vadd.f32 %v2625, %v2642
        %v2666 = vadd.f32 %v2626, %v2642
        %v2667 = vadd.f32 %v2627, %v2642
        %v2668 = vadd.f32 %v2628, %v2642
        %v2669 = vadd.f32 %v2629, %v2642
        %v2670 = vadd.f32 %v2630, %v2642
        %v2671 = vadd.f32 %v2631, %v2642
        %v2672 = vadd.f32 %v2632, %v2642
        %v2673 = vadd.f32 %v2633, %v2642
        %v2674 = vadd.f32 %v2634, %v2642
        %v2675 = vadd.f32 %v2635, %v2642
        %v2676 = vadd.f32 %v2636, %v2642
        %v2677 = vadd.f32 %v2637, %v2642
        %v2678 = vadd.f32 %v2638, %v2642
        %v2679 = vadd.f32 %v2639, %v2642
        %v2680 = vmax.f32 %v2644, 0.0
        %v2681 = vmax.f32 %v2645, 0.0
        %v2682 = vmax.f32 %v2646, 0.0
        %v2683 = vmax.f32 %v2647, 0.0
        %v2684 = vmax.f32 %v2648, 0.0
        %v2685 = vmax.f32 %v2649, 0.0
        %v2686 = vmax.f32 %v2650, 0.0
        %v2687 = vmax.f32 %v2651, 0.0
        %v2688 = vmax.f32 %v2652, 0.0
        %v2689 = vmax.f32 %v2653, 0.0
        %v2690 = vmax.f32 %v2654, 0.0
        %v2691 = vmax.f32 %v2655, 0.0
        %v2692 = vmax.f32 %v2656, 0.0
        %v2693 = vmax.f32 %v2657, 0.0
        %v2694 = vmax.f32 %v2658, 0.0
        %v2695 = vmax.f32 %v2659, 0.0
        %v2696 = vmax.f32 %v2660, 0.0
        %v2697 = vmax.f32 %v2661, 0.0
        %v2698 = vmax.f32 %v2662, 0.0
        %v2699 = vmax.f32 %v2663, 0.0
        %v2700 = vmax.f32 %v2664, 0.0
        %v2701 = vmax.f32 %v2665, 0.0
        %v2702 = vmax.f32 %v2666, 0.0
        %v2703 = vmax.f32 %v2667, 0.0
        %v2704 = vmax.f32 %v2668, 0.0
        %v2705 = vmax.f32 %v2669, 0.0
        %v2706 = vmax.f32 %v2670, 0.0
        %v2707 = vmax.f32 %v2671, 0.0
        %v2708 = vmax.f32 %v2672, 0.0
        %v2709 = vmax.f32 %v2673, 0.0
        %v2710 = vmax.f32 %v2674, 0.0
        %v2711 = vmax.f32 %v2675, 0.0
        %v2712 = vmax.f32 %v2676, 0.0
        %v2713 = vmax.f32 %v2677, 0.0
        %v2714 = vmax.f32 %v2678, 0.0
        %v2715 = vmax.f32 %v2679, 0.0
        %v2716 = vld [vmem:[%s10] sm:$0xff]
        %v2717 = vld [vmem:[%s10 + $0x8] sm:$0xff]
        %v2718 = vld [vmem:[%s10 + $0x10] sm:$0xff]
        %v2719 = vld [vmem:[%s10 + $0x18] sm:$0xff]
        %v2720 = vld [vmem:[%s10 + $0x20] sm:$0xff]
        %v2721 = vld [vmem:[%s10 + $0x28] sm:$0xff]
        %v2722 = vld [vmem:[%s10 + $0x30] sm:$0xff]
        %v2723 = vld [vmem:[%s10 + $0x38] sm:$0xff]
        %v2724 = vld [vmem:[%s10 + $0x40] sm:$0xff]
        %v2725 = vld [vmem:[%s10 + $0x48] sm:$0xff]
        %v2726 = vld [vmem:[%s10 + $0x50] sm:$0xff]
        %v2727 = vld [vmem:[%s10 + $0x58] sm:$0xff]
        %v2728 = vld [vmem:[%s10 + $0x60] sm:$0xff]
        %v2729 = vld [vmem:[%s10 + $0x68] sm:$0xff]
        %v2730 = vld [vmem:[%s10 + $0x70] sm:$0xff]
        %v2731 = vld [vmem:[%s10 + $0x78] sm:$0xff]
        %v2732 = vld [vmem:[%s10 + $0x80] sm:$0xff]
        %v2733 = vld [vmem:[%s10 + $0x88] sm:$0xff]
        %v2734 = vld [vmem:[%s10 + $0x90] sm:$0xff]
        %v2735 = vld [vmem:[%s10 + $0x98] sm:$0xff]
        %v2736 = vld [vmem:[%s10 + $0xa0] sm:$0xff]
        %v2737 = vld [vmem:[%s10 + $0xa8] sm:$0xff]
        %v2738 = vld [vmem:[%s10 + $0xb0] sm:$0xff]
        %v2739 = vld [vmem:[%s10 + $0xb8] sm:$0xff]
        %v2740 = vld [vmem:[%s10 + $0xc0] sm:$0xff]
        %v2741 = vld [vmem:[%s10 + $0xc8] sm:$0xff]
        %v2742 = vld [vmem:[%s10 + $0xd0] sm:$0xff]
        %v2743 = vld [vmem:[%s10 + $0xd8] sm:$0xff]
        %v2744 = vld [vmem:[%s10 + $0xe0] sm:$0xff]
        %v2745 = vld [vmem:[%s10 + $0xe8] sm:$0xff]
        %v2746 = vld [vmem:[%s10 + $0xf0] sm:$0xff]
        %v2747 = vld [vmem:[%s10 + $0xf8] sm:$0xff]
        %v2748 = vld [vmem:[%s10 + $0x100] sm:$0xff]
        %v2749 = vld [vmem:[%s10 + $0x108] sm:$0xff]
        %v2750 = vld [vmem:[%s10 + $0x110] sm:$0xff]
        %v2751 = vld [vmem:[%s10 + $0x118] sm:$0xff]
        %v2752 = vld [vmem:[%s10 + $0x120] sm:$0xf]
        %v2753 = vld [vmem:[%s10 + $0x128] sm:$0xf]
        %v2754 = vld [vmem:[%s10 + $0x130] sm:$0xf]
        %v2789 = vrot.slane %v2680, 1
        %v2790 = vrot.slane %v2681, 1
        %v2791 = vsel %vm866, %v2789, %v2790
        %v2792 = vrot.slane %v2682, 1
        %v2793 = vsel %vm866, %v2790, %v2792
        %v2794 = vrot.slane %v2683, 1
        %v2795 = vsel %vm866, %v2792, %v2794
        %v2796 = vrot.slane %v2684, 1
        %v2797 = vsel %vm866, %v2794, %v2796
        %v2798 = vrot.slane %v2685, 1
        %v2799 = vsel %vm866, %v2796, %v2798
        %v2800 = vrot.slane %v2686, 1
        %v2801 = vsel %vm866, %v2798, %v2800
        %v2802 = vrot.slane %v2687, 1
        %v2803 = vsel %vm866, %v2800, %v2802
        %v2804 = vrot.slane %v2688, 1
        %v2805 = vsel %vm866, %v2802, %v2804
        %v2806 = vrot.slane %v2689, 1
        %v2807 = vsel %vm866, %v2804, %v2806
        %v2808 = vrot.slane %v2690, 1
        %v2809 = vsel %vm866, %v2806, %v2808
        %v2810 = vrot.slane %v2691, 1
        %v2811 = vsel %vm866, %v2808, %v2810
        %v2812 = vrot.slane %v2692, 1
        %v2813 = vsel %vm866, %v2810, %v2812
        %v2814 = vrot.slane %v2693, 1
        %v2815 = vsel %vm866, %v2812, %v2814
        %v2816 = vrot.slane %v2694, 1
        %v2817 = vsel %vm866, %v2814, %v2816
        %v2818 = vrot.slane %v2695, 1
        %v2819 = vsel %vm866, %v2816, %v2818
        %v2820 = vrot.slane %v2696, 1
        %v2821 = vsel %vm866, %v2818, %v2820
        %v2822 = vrot.slane %v2697, 1
        %v2823 = vsel %vm866, %v2820, %v2822
        %v2824 = vrot.slane %v2698, 1
        %v2825 = vsel %vm866, %v2822, %v2824
        %v2826 = vrot.slane %v2699, 1
        %v2827 = vsel %vm866, %v2824, %v2826
        %v2828 = vrot.slane %v2700, 1
        %v2829 = vsel %vm866, %v2826, %v2828
        %v2830 = vrot.slane %v2701, 1
        %v2831 = vsel %vm866, %v2828, %v2830
        %v2832 = vrot.slane %v2702, 1
        %v2833 = vsel %vm866, %v2830, %v2832
        %v2834 = vrot.slane %v2703, 1
        %v2835 = vsel %vm866, %v2832, %v2834
        %v2836 = vrot.slane %v2704, 1
        %v2837 = vsel %vm866, %v2834, %v2836
        %v2838 = vrot.slane %v2705, 1
        %v2839 = vsel %vm866, %v2836, %v2838
        %v2840 = vrot.slane %v2706, 1
        %v2841 = vsel %vm866, %v2838, %v2840
        %v2842 = vrot.slane %v2707, 1
        %v2843 = vsel %vm866, %v2840, %v2842
        %v2844 = vrot.slane %v2708, 1
        %v2845 = vsel %vm866, %v2842, %v2844
        %v2846 = vrot.slane %v2709, 1
        %v2847 = vsel %vm866, %v2844, %v2846
        %v2848 = vrot.slane %v2710, 1
        %v2849 = vsel %vm866, %v2846, %v2848
        %v2850 = vrot.slane %v2711, 1
        %v2851 = vsel %vm866, %v2848, %v2850
        %v2852 = vrot.slane %v2712, 1
        %v2853 = vsel %vm866, %v2850, %v2852
        %v2854 = vrot.slane %v2713, 1
        %v2855 = vsel %vm866, %v2852, %v2854
        %v2890 = vmax.f32 %v2680, %v2791
        %v2891 = vmax.f32 %v2681, %v2793
        %v2892 = vmax.f32 %v2682, %v2795
        %v2893 = vmax.f32 %v2683, %v2797
        %v2894 = vmax.f32 %v2684, %v2799
        %v2895 = vmax.f32 %v2685, %v2801
        %v2896 = vmax.f32 %v2686, %v2803
        %v2897 = vmax.f32 %v2687, %v2805
        %v2898 = vmax.f32 %v2688, %v2807
        %v2899 = vmax.f32 %v2689, %v2809
        %v2900 = vmax.f32 %v2690, %v2811
        %v2901 = vmax.f32 %v2691, %v2813
        %v2902 = vmax.f32 %v2692, %v2815
        %v2903 = vmax.f32 %v2693, %v2817
        %v2904 = vmax.f32 %v2694, %v2819
        %v2905 = vmax.f32 %v2695, %v2821
        %v2906 = vmax.f32 %v2696, %v2823
        %v2907 = vmax.f32 %v2697, %v2825
        %v2908 = vmax.f32 %v2698, %v2827
        %v2909 = vmax.f32 %v2699, %v2829
        %v2910 = vmax.f32 %v2700, %v2831
        %v2911 = vmax.f32 %v2701, %v2833
        %v2912 = vmax.f32 %v2702, %v2835
        %v2913 = vmax.f32 %v2703, %v2837
        %v2914 = vmax.f32 %v2704, %v2839
        %v2915 = vmax.f32 %v2705, %v2841
        %v2916 = vmax.f32 %v2706, %v2843
        %v2917 = vmax.f32 %v2707, %v2845
        %v2918 = vmax.f32 %v2708, %v2847
        %v2919 = vmax.f32 %v2709, %v2849
        %v2920 = vmax.f32 %v2710, %v2851
        %v2921 = vmax.f32 %v2711, %v2853
        %v2922 = vmax.f32 %v2712, %v2855
        %v2923 = vmax.f32 %v2713, %v2854
        %v2926 = vrot.slane %v2714, 1
        %v2927 = vsel %vm866, %v2854, %v2926
        %v2928 = vrot.slane %v2715, 1
        %v2929 = vsel %vm866, %v2926, %v2928
        %v2933 = vmax.f32 %v2713, %v2927
        %v2934 = vmax.f32 %v2714, %v2929
        %v2935 = vmax.f32 %v2715, %v2928
        %v2970 = vrot.slane %v2892, 2
        %v2971 = vrot.slane %v2893, 2
        %v2972 = vsel %vm1087, %v2970, %v2971
        %v2973 = vrot.slane %v2894, 2
        %v2974 = vsel %vm1087, %v2971, %v2973
        %v2975 = vrot.slane %v2895, 2
        %v2976 = vsel %vm1087, %v2973, %v2975
        %v2977 = vrot.slane %v2896, 2
        %v2978 = vsel %vm1087, %v2975, %v2977
        %v2979 = vrot.slane %v2897, 2
        %v2980 = vsel %vm1087, %v2977, %v2979
        %v2981 = vrot.slane %v2898, 2
        %v2982 = vsel %vm1087, %v2979, %v2981
        %v2983 = vrot.slane %v2899, 2
        %v2984 = vsel %vm1087, %v2981, %v2983
        %v2985 = vrot.slane %v2900, 2
        %v2986 = vsel %vm1087, %v2983, %v2985
        %v2987 = vrot.slane %v2901, 2
        %v2988 = vsel %vm1087, %v2985, %v2987
        %v2989 = vrot.slane %v2902, 2
        %v2990 = vsel %vm1087, %v2987, %v2989
        %v2991 = vrot.slane %v2903, 2
        %v2992 = vsel %vm1087, %v2989, %v2991
        %v2993 = vrot.slane %v2904, 2
        %v2994 = vsel %vm1087, %v2991, %v2993
        %v2995 = vrot.slane %v2905, 2
        %v2996 = vsel %vm1087, %v2993, %v2995
        %v2997 = vrot.slane %v2906, 2
        %v2998 = vsel %vm1087, %v2995, %v2997
        %v2999 = vrot.slane %v2907, 2
        %v3000 = vsel %vm1087, %v2997, %v2999
        %v3001 = vrot.slane %v2908, 2
        %v3002 = vsel %vm1087, %v2999, %v3001
        %v3003 = vrot.slane %v2909, 2
        %v3004 = vsel %vm1087, %v3001, %v3003
        %v3005 = vrot.slane %v2910, 2
        %v3006 = vsel %vm1087, %v3003, %v3005
        %v3007 = vrot.slane %v2911, 2
        %v3008 = vsel %vm1087, %v3005, %v3007
        %v3009 = vrot.slane %v2912, 2
        %v3010 = vsel %vm1087, %v3007, %v3009
        %v3011 = vrot.slane %v2913, 2
        %v3012 = vsel %vm1087, %v3009, %v3011
        %v3013 = vrot.slane %v2914, 2
        %v3014 = vsel %vm1087, %v3011, %v3013
        %v3015 = vrot.slane %v2915, 2
        %v3016 = vsel %vm1087, %v3013, %v3015
        %v3017 = vrot.slane %v2916, 2
        %v3018 = vsel %vm1087, %v3015, %v3017
        %v3019 = vrot.slane %v2917, 2
        %v3020 = vsel %vm1087, %v3017, %v3019
        %v3021 = vrot.slane %v2918, 2
        %v3022 = vsel %vm1087, %v3019, %v3021
        %v3023 = vrot.slane %v2919, 2
        %v3024 = vsel %vm1087, %v3021, %v3023
        %v3025 = vrot.slane %v2920, 2
        %v3026 = vsel %vm1087, %v3023, %v3025
        %v3027 = vrot.slane %v2921, 2
        %v3028 = vsel %vm1087, %v3025, %v3027
        %v3029 = vrot.slane %v2922, 2
        %v3030 = vsel %vm1087, %v3027, %v3029
        %v3031 = vrot.slane %v2933, 2
        %v3032 = vsel %vm1087, %v3029, %v3031
        %v3033 = vrot.slane %v2934, 2
        %v3034 = vsel %vm1087, %v3031, %v3033
        %v3035 = vrot.slane %v2935, 2
        %v3036 = vsel %vm1087, %v3033, %v3035
        %v3071 = vmax.f32 %v2890, %v2972
        %v3072 = vmax.f32 %v2891, %v2974
        %v3073 = vmax.f32 %v2892, %v2976
        %v3074 = vmax.f32 %v2893, %v2978
        %v3075 = vmax.f32 %v2894, %v2980
        %v3076 = vmax.f32 %v2895, %v2982
        %v3077 = vmax.f32 %v2896, %v2984
        %v3078 = vmax.f32 %v2897, %v2986
        %v3079 = vmax.f32 %v2898, %v2988
        %v3080 = vmax.f32 %v2899, %v2990
        %v3081 = vmax.f32 %v2900, %v2992
        %v3082 = vmax.f32 %v2901, %v2994
        %v3083 = vmax.f32 %v2902, %v2996
        %v3084 = vmax.f32 %v2903, %v2998
        %v3085 = vmax.f32 %v2904, %v3000
        %v3086 = vmax.f32 %v2905, %v3002
        %v3087 = vmax.f32 %v2906, %v3004
        %v3088 = vmax.f32 %v2907, %v3006
        %v3089 = vmax.f32 %v2908, %v3008
        %v3090 = vmax.f32 %v2909, %v3010
        %v3091 = vmax.f32 %v2910, %v3012
        %v3092 = vmax.f32 %v2911, %v3014
        %v3093 = vmax.f32 %v2912, %v3016
        %v3094 = vmax.f32 %v2913, %v3018
        %v3095 = vmax.f32 %v2914, %v3020
        %v3096 = vmax.f32 %v2915, %v3022
        %v3097 = vmax.f32 %v2916, %v3024
        %v3098 = vmax.f32 %v2917, %v3026
        %v3099 = vmax.f32 %v2918, %v3028
        %v3100 = vmax.f32 %v2919, %v3030
        %v3101 = vmax.f32 %v2920, %v3032
        %v3102 = vmax.f32 %v2921, %v3034
        %v3103 = vmax.f32 %v2922, %v3036
        %v3104 = vmax.f32 %v2923, %v3035
        %vm3105 = vcmask 89088
        %v3107 = vsel %vm3105, %v2718, 0
        %v3110 = vsel %vm3105, %v2721, 0
        %v3113 = vsel %vm3105, %v2724, 0
        %v3116 = vsel %vm3105, %v2727, 0
        %v3119 = vsel %vm3105, %v2730, 0
        %v3122 = vsel %vm3105, %v2733, 0
        %v3125 = vsel %vm3105, %v2736, 0
        %v3128 = vsel %vm3105, %v2739, 0
        %v3131 = vsel %vm3105, %v2742, 0
        %v3134 = vsel %vm3105, %v2745, 0
        %v3137 = vsel %vm3105, %v2748, 0
        %v3140 = vsel %vm3105, %v2751, 0
        %v3143 = vsel %vm3105, %v2754, 0
        %v3146 = vsel %vm2229, %v3104, 0
        %3148 = vmatpush.msra.mxu0 %v3086
        %3149 = vmatpush.msra.mxu0 %v3085
        %3150 = vmatpush.msra.mxu0 %v3084
        %3151 = vmatpush.msra.mxu0 %v3083
        %3152 = vmatpush.msra.mxu0 %v3082
        %3153 = vmatpush.msra.mxu0 %v3081
        %3154 = vmatpush.msra.mxu0 %v3080
        %3155 = vmatpush.msra.mxu0 %v3079
        %3156 = vmatpush.msra.mxu0 %v3078
        %3157 = vmatpush.msra.mxu0 %v3077
        %3158 = vmatpush.msra.mxu0 %v3076
        %3159 = vmatpush.msra.mxu0 %v3075
        %3160 = vmatpush.msra.mxu0 %v3074
        %3161 = vmatpush.msra.mxu0 %v3073
        %3162 = vmatpush.msra.mxu0 %v3072
        %3163 = vmatpush.msra.mxu0 %v3071
        %3164 = vmatmul.f32.gmra.mxu0 %v2716
        %v3165 = vpop.f32.mrf.mxu0
        %v3166 = vadd.f32 0.0, %v3165
        %3167 = vmatmul.f32.gmra.mxu0 %v2719
        %v3168 = vpop.f32.mrf.mxu0
        %v3169 = vadd.f32 0.0, %v3168
        %3170 = vmatmul.f32.gmra.mxu0 %v2722
        %v3171 = vpop.f32.mrf.mxu0
        %v3172 = vadd.f32 0.0, %v3171
        %3173 = vmatmul.f32.gmra.mxu0 %v2725
        %v3174 = vpop.f32.mrf.mxu0
        %v3175 = vadd.f32 0.0, %v3174
        %3176 = vmatmul.f32.gmra.mxu0 %v2728
        %v3177 = vpop.f32.mrf.mxu0
        %v3178 = vadd.f32 0.0, %v3177
        %3179 = vmatmul.f32.gmra.mxu0 %v2731
        %v3180 = vpop.f32.mrf.mxu0
        %v3181 = vadd.f32 0.0, %v3180
        %3182 = vmatmul.f32.gmra.mxu0 %v2734
        %v3183 = vpop.f32.mrf.mxu0
        %v3184 = vadd.f32 0.0, %v3183
        %3185 = vmatmul.f32.gmra.mxu0 %v2737
        %v3186 = vpop.f32.mrf.mxu0
        %v3187 = vadd.f32 0.0, %v3186
        %3188 = vmatmul.f32.gmra.mxu0 %v2740
        %v3189 = vpop.f32.mrf.mxu0
        %v3190 = vadd.f32 0.0, %v3189
        %3191 = vmatmul.f32.gmra.mxu0 %v2743
        %v3192 = vpop.f32.mrf.mxu0
        %v3193 = vadd.f32 0.0, %v3192
        %3194 = vmatmul.f32.gmra.mxu0 %v2746
        %v3195 = vpop.f32.mrf.mxu0
        %v3196 = vadd.f32 0.0, %v3195
        %3197 = vmatmul.f32.gmra.mxu0 %v2749
        %v3198 = vpop.f32.mrf.mxu0
        %v3199 = vadd.f32 0.0, %v3198
        %3200 = vmatmul.f32.gmra.mxu0 %v2752
        %v3201 = vpop.f32.mrf.mxu0
        %v3202 = vadd.f32 0.0, %v3201
        %3203 = vdwg.mxu0
        %3204 = vmatpush.msra.mxu0 %v3102
        %3205 = vmatpush.msra.mxu0 %v3101
        %3206 = vmatpush.msra.mxu0 %v3100
        %3207 = vmatpush.msra.mxu0 %v3099
        %3208 = vmatpush.msra.mxu0 %v3098
        %3209 = vmatpush.msra.mxu0 %v3097
        %3210 = vmatpush.msra.mxu0 %v3096
        %3211 = vmatpush.msra.mxu0 %v3095
        %3212 = vmatpush.msra.mxu0 %v3094
        %3213 = vmatpush.msra.mxu0 %v3093
        %3214 = vmatpush.msra.mxu0 %v3092
        %3215 = vmatpush.msra.mxu0 %v3091
        %3216 = vmatpush.msra.mxu0 %v3090
        %3217 = vmatpush.msra.mxu0 %v3089
        %3218 = vmatpush.msra.mxu0 %v3088
        %3219 = vmatpush.msra.mxu0 %v3087
        %3220 = vmatmul.f32.gmra.mxu0 %v2717
        %v3221 = vpop.f32.mrf.mxu0
        %v3222 = vadd.f32 %v3166, %v3221
        %3223 = vmatmul.f32.gmra.mxu0 %v2720
        %v3224 = vpop.f32.mrf.mxu0
        %v3225 = vadd.f32 %v3169, %v3224
        %3226 = vmatmul.f32.gmra.mxu0 %v2723
        %v3227 = vpop.f32.mrf.mxu0
        %v3228 = vadd.f32 %v3172, %v3227
        %3229 = vmatmul.f32.gmra.mxu0 %v2726
        %v3230 = vpop.f32.mrf.mxu0
        %v3231 = vadd.f32 %v3175, %v3230
        %3232 = vmatmul.f32.gmra.mxu0 %v2729
        %v3233 = vpop.f32.mrf.mxu0
        %v3234 = vadd.f32 %v3178, %v3233
        %3235 = vmatmul.f32.gmra.mxu0 %v2732
        %v3236 = vpop.f32.mrf.mxu0
        %v3237 = vadd.f32 %v3181, %v3236
        %3238 = vmatmul.f32.gmra.mxu0 %v2735
        %v3239 = vpop.f32.mrf.mxu0
        %v3240 = vadd.f32 %v3184, %v3239
        %3241 = vmatmul.f32.gmra.mxu0 %v2738
        %v3242 = vpop.f32.mrf.mxu0
        %v3243 = vadd.f32 %v3187, %v3242
        %3244 = vmatmul.f32.gmra.mxu0 %v2741
        %v3245 = vpop.f32.mrf.mxu0
        %v3246 = vadd.f32 %v3190, %v3245
        %3247 = vmatmul.f32.gmra.mxu0 %v2744
        %v3248 = vpop.f32.mrf.mxu0
        %v3249 = vadd.f32 %v3193, %v3248
        %3250 = vmatmul.f32.gmra.mxu0 %v2747
        %v3251 = vpop.f32.mrf.mxu0
        %v3252 = vadd.f32 %v3196, %v3251
        %3253 = vmatmul.f32.gmra.mxu0 %v2750
        %v3254 = vpop.f32.mrf.mxu0
        %v3255 = vadd.f32 %v3199, %v3254
        %3256 = vmatmul.f32.gmra.mxu0 %v2753
        %v3257 = vpop.f32.mrf.mxu0
        %v3258 = vadd.f32 %v3202, %v3257
        %3259 = vdwg.mxu0
        %3260 = vmatpush.msra.mxu0 0.0
        %3261 = vmatpush.msra.mxu0 0.0
        %3262 = vmatpush.msra.mxu0 0.0
        %3263 = vmatpush.msra.mxu0 0.0
        %3264 = vmatpush.msra.mxu0 0.0
        %3265 = vmatpush.msra.mxu0 0.0
        %3266 = vmatpush.msra.mxu0 0.0
        %3267 = vmatpush.msra.mxu0 0.0
        %3268 = vmatpush.msra.mxu0 0.0
        %3269 = vmatpush.msra.mxu0 0.0
        %3270 = vmatpush.msra.mxu0 0.0
        %3271 = vmatpush.msra.mxu0 0.0
        %3272 = vmatpush.msra.mxu0 0.0
        %3273 = vmatpush.msra.mxu0 0.0
        %3274 = vmatpush.msra.mxu0 %v3146
        %3275 = vmatpush.msra.mxu0 %v3103
        %3276 = vmatmul.f32.gmra.mxu0 %v3107
        %v3277 = vpop.f32.mrf.mxu0
        %v3278 = vadd.f32 %v3222, %v3277
        %3279 = vmatmul.f32.gmra.mxu0 %v3110
        %v3280 = vpop.f32.mrf.mxu0
        %v3281 = vadd.f32 %v3225, %v3280
        %3282 = vmatmul.f32.gmra.mxu0 %v3113
        %v3283 = vpop.f32.mrf.mxu0
        %v3284 = vadd.f32 %v3228, %v3283
        %3285 = vmatmul.f32.gmra.mxu0 %v3116
        %v3286 = vpop.f32.mrf.mxu0
        %v3287 = vadd.f32 %v3231, %v3286
        %3288 = vmatmul.f32.gmra.mxu0 %v3119
        %v3289 = vpop.f32.mrf.mxu0
        %v3290 = vadd.f32 %v3234, %v3289
        %3291 = vmatmul.f32.gmra.mxu0 %v3122
        %v3292 = vpop.f32.mrf.mxu0
        %v3293 = vadd.f32 %v3237, %v3292
        %3294 = vmatmul.f32.gmra.mxu0 %v3125
        %v3295 = vpop.f32.mrf.mxu0
        %v3296 = vadd.f32 %v3240, %v3295
        %3297 = vmatmul.f32.gmra.mxu0 %v3128
        %v3298 = vpop.f32.mrf.mxu0
        %v3299 = vadd.f32 %v3243, %v3298
        %3300 = vmatmul.f32.gmra.mxu0 %v3131
        %v3301 = vpop.f32.mrf.mxu0
        %v3302 = vadd.f32 %v3246, %v3301
        %3303 = vmatmul.f32.gmra.mxu0 %v3134
        %v3304 = vpop.f32.mrf.mxu0
        %v3305 = vadd.f32 %v3249, %v3304
        %3306 = vmatmul.f32.gmra.mxu0 %v3137
        %v3307 = vpop.f32.mrf.mxu0
        %v3308 = vadd.f32 %v3252, %v3307
        %3309 = vmatmul.f32.gmra.mxu0 %v3140
        %v3310 = vpop.f32.mrf.mxu0
        %v3311 = vadd.f32 %v3255, %v3310
        %3312 = vmatmul.f32.gmra.mxu0 %v3143
        %v3313 = vpop.f32.mrf.mxu0
        %v3314 = vadd.f32 %v3258, %v3313
        %3315 = vdwg.mxu0
        %v3316 = vld [vmem:[%s4] sm:$0xff]
        %v3317 = vld [vmem:[%s4 + $0x8] sm:$0xff]
        %s3318 = scalar_lea.vmem %s4, 16
        %v3319 = vld [vmem:[%s3318] sm:$0xff]
        %v3320 = vld [vmem:[%s3318 + $0x8] sm:$0xff]
        %v3331 = vrot.slane %v3278, 1
        %v3332 = vrot.slane %v3281, 1
        %v3333 = vsel %vm866, %v3331, %v3332
        %v3334 = vrot.slane %v3284, 1
        %v3335 = vsel %vm866, %v3332, %v3334
        %v3336 = vrot.slane %v3287, 1
        %v3337 = vsel %vm866, %v3334, %v3336
        %v3338 = vrot.slane %v3290, 1
        %v3339 = vsel %vm866, %v3336, %v3338
        %v3340 = vrot.slane %v3293, 1
        %v3341 = vsel %vm866, %v3338, %v3340
        %v3342 = vrot.slane %v3296, 1
        %v3343 = vsel %vm866, %v3340, %v3342
        %v3344 = vrot.slane %v3299, 1
        %v3345 = vsel %vm866, %v3342, %v3344
        %v3346 = vrot.slane %v3302, 1
        %v3347 = vsel %vm866, %v3344, %v3346
        %v3348 = vrot.slane %v3305, 1
        %v3349 = vsel %vm866, %v3346, %v3348
        %vm3350 = vcmask 130048
        %v3351 = vsel %vm3350, %v3333, 0
        %v3353 = vsel %vm3350, %v3335, 0
        %v3355 = vsel %vm3350, %v3337, 0
        %v3357 = vsel %vm3350, %v3339, 0
        %v3359 = vsel %vm3350, %v3341, 0
        %v3361 = vsel %vm3350, %v3343, 0
        %v3363 = vsel %vm3350, %v3345, 0
        %v3365 = vsel %vm3350, %v3347, 0
        %v3367 = vsel %vm3350, %v3349, 0
        %v3369 = vsel %vm3350, %v3348, 0
        %3371 = vmatpush.msra.mxu0 0.0
        %3372 = vmatpush.msra.mxu0 0.0
        %3373 = vmatpush.msra.mxu0 0.0
        %3374 = vmatpush.msra.mxu0 0.0
        %3375 = vmatpush.msra.mxu0 0.0
        %3376 = vmatpush.msra.mxu0 0.0
        %3377 = vmatpush.msra.mxu0 0.0
        %3378 = vmatpush.msra.mxu0 0.0
        %3379 = vmatpush.msra.mxu0 0.0
        %3380 = vmatpush.msra.mxu0 0.0
        %3381 = vmatpush.msra.mxu0 0.0
        %3382 = vmatpush.msra.mxu0 0.0
        %3383 = vmatpush.msra.mxu0 0.0
        %3384 = vmatpush.msra.mxu0 0.0
        %3385 = vmatpush.msra.mxu0 %v3320
        %3386 = vmatpush.msra.mxu0 %v3319
        %3387 = vmatmul.f32.gmra.mxu0 %v3351
        %v3388 = vpop.f32.mrf.mxu0
        %v3389 = vadd.f32 0.0, %v3388
        %3390 = vmatmul.f32.gmra.mxu0 %v3353
        %v3391 = vpop.f32.mrf.mxu0
        %v3392 = vadd.f32 0.0, %v3391
        %3393 = vmatmul.f32.gmra.mxu0 %v3355
        %v3394 = vpop.f32.mrf.mxu0
        %v3395 = vadd.f32 0.0, %v3394
        %3396 = vmatmul.f32.gmra.mxu0 %v3357
        %v3397 = vpop.f32.mrf.mxu0
        %v3398 = vadd.f32 0.0, %v3397
        %3399 = vmatmul.f32.gmra.mxu0 %v3359
        %v3400 = vpop.f32.mrf.mxu0
        %v3401 = vadd.f32 0.0, %v3400
        %3402 = vmatmul.f32.gmra.mxu0 %v3361
        %v3403 = vpop.f32.mrf.mxu0
        %v3404 = vadd.f32 0.0, %v3403
        %3405 = vmatmul.f32.gmra.mxu0 %v3363
        %v3406 = vpop.f32.mrf.mxu0
        %v3407 = vadd.f32 0.0, %v3406
        %3408 = vmatmul.f32.gmra.mxu0 %v3365
        %v3409 = vpop.f32.mrf.mxu0
        %v3410 = vadd.f32 0.0, %v3409
        %3411 = vmatmul.f32.gmra.mxu0 %v3367
        %v3412 = vpop.f32.mrf.mxu0
        %v3413 = vadd.f32 0.0, %v3412
        %3414 = vmatmul.f32.gmra.mxu0 %v3369
        %v3415 = vpop.f32.mrf.mxu0
        %v3416 = vadd.f32 0.0, %v3415
        %3417 = vdwg.mxu0
        %v3418 = vsel %vm3350, %v3278, 0
        %v3420 = vsel %vm3350, %v3281, 0
        %v3422 = vsel %vm3350, %v3284, 0
        %v3424 = vsel %vm3350, %v3287, 0
        %v3426 = vsel %vm3350, %v3290, 0
        %v3428 = vsel %vm3350, %v3293, 0
        %v3430 = vsel %vm3350, %v3296, 0
        %v3432 = vsel %vm3350, %v3299, 0
        %v3434 = vsel %vm3350, %v3302, 0
        %v3436 = vsel %vm3350, %v3305, 0
        %3438 = vmatpush.msra.mxu0 0.0
        %3439 = vmatpush.msra.mxu0 0.0
        %3440 = vmatpush.msra.mxu0 0.0
        %3441 = vmatpush.msra.mxu0 0.0
        %3442 = vmatpush.msra.mxu0 0.0
        %3443 = vmatpush.msra.mxu0 0.0
        %3444 = vmatpush.msra.mxu0 0.0
        %3445 = vmatpush.msra.mxu0 0.0
        %3446 = vmatpush.msra.mxu0 0.0
        %3447 = vmatpush.msra.mxu0 0.0
        %3448 = vmatpush.msra.mxu0 0.0
        %3449 = vmatpush.msra.mxu0 0.0
        %3450 = vmatpush.msra.mxu0 0.0
        %3451 = vmatpush.msra.mxu0 0.0
        %3452 = vmatpush.msra.mxu0 %v3317
        %3453 = vmatpush.msra.mxu0 %v3316
        %3454 = vmatmul.f32.gmra.mxu0 %v3418
        %v3455 = vpop.f32.mrf.mxu0
        %v3456 = vadd.f32 %v3389, %v3455
        %3457 = vmatmul.f32.gmra.mxu0 %v3420
        %v3458 = vpop.f32.mrf.mxu0
        %v3459 = vadd.f32 %v3392, %v3458
        %3460 = vmatmul.f32.gmra.mxu0 %v3422
        %v3461 = vpop.f32.mrf.mxu0
        %v3462 = vadd.f32 %v3395, %v3461
        %3463 = vmatmul.f32.gmra.mxu0 %v3424
        %v3464 = vpop.f32.mrf.mxu0
        %v3465 = vadd.f32 %v3398, %v3464
        %3466 = vmatmul.f32.gmra.mxu0 %v3426
        %v3467 = vpop.f32.mrf.mxu0
        %v3468 = vadd.f32 %v3401, %v3467
        %3469 = vmatmul.f32.gmra.mxu0 %v3428
        %v3470 = vpop.f32.mrf.mxu0
        %v3471 = vadd.f32 %v3404, %v3470
        %3472 = vmatmul.f32.gmra.mxu0 %v3430
        %v3473 = vpop.f32.mrf.mxu0
        %v3474 = vadd.f32 %v3407, %v3473
        %3475 = vmatmul.f32.gmra.mxu0 %v3432
        %v3476 = vpop.f32.mrf.mxu0
        %v3477 = vadd.f32 %v3410, %v3476
        %3478 = vmatmul.f32.gmra.mxu0 %v3434
        %v3479 = vpop.f32.mrf.mxu0
        %v3480 = vadd.f32 %v3413, %v3479
        %3481 = vmatmul.f32.gmra.mxu0 %v3436
        %v3482 = vpop.f32.mrf.mxu0
        %v3483 = vadd.f32 %v3416, %v3482
        %3484 = vdwg.mxu0
        %s3485 = scalar_lea.vmem %s4, 32
        %v3486 = vld [vmem:[%s3485] sm:$0xff]
        %v3487 = vld [vmem:[%s3485 + $0x8] sm:$0xff]
        %v3488 = vrot.slane %v3278, 2
        %v3489 = vrot.slane %v3281, 2
        %v3490 = vsel %vm1087, %v3488, %v3489
        %v3491 = vrot.slane %v3284, 2
        %v3492 = vsel %vm1087, %v3489, %v3491
        %v3493 = vrot.slane %v3287, 2
        %v3494 = vsel %vm1087, %v3491, %v3493
        %v3495 = vrot.slane %v3290, 2
        %v3496 = vsel %vm1087, %v3493, %v3495
        %v3497 = vrot.slane %v3293, 2
        %v3498 = vsel %vm1087, %v3495, %v3497
        %v3499 = vrot.slane %v3296, 2
        %v3500 = vsel %vm1087, %v3497, %v3499
        %v3501 = vrot.slane %v3299, 2
        %v3502 = vsel %vm1087, %v3499, %v3501
        %v3503 = vrot.slane %v3302, 2
        %v3504 = vsel %vm1087, %v3501, %v3503
        %v3505 = vrot.slane %v3305, 2
        %v3506 = vsel %vm1087, %v3503, %v3505
        %v3507 = vsel %vm3350, %v3490, 0
        %v3509 = vsel %vm3350, %v3492, 0
        %v3511 = vsel %vm3350, %v3494, 0
        %v3513 = vsel %vm3350, %v3496, 0
        %v3515 = vsel %vm3350, %v3498, 0
        %v3517 = vsel %vm3350, %v3500, 0
        %v3519 = vsel %vm3350, %v3502, 0
        %v3521 = vsel %vm3350, %v3504, 0
        %v3523 = vsel %vm3350, %v3506, 0
        %v3525 = vsel %vm3350, %v3505, 0
        %3527 = vmatpush.msra.mxu0 0.0
        %3528 = vmatpush.msra.mxu0 0.0
        %3529 = vmatpush.msra.mxu0 0.0
        %3530 = vmatpush.msra.mxu0 0.0
        %3531 = vmatpush.msra.mxu0 0.0
        %3532 = vmatpush.msra.mxu0 0.0
        %3533 = vmatpush.msra.mxu0 0.0
        %3534 = vmatpush.msra.mxu0 0.0
        %3535 = vmatpush.msra.mxu0 0.0
        %3536 = vmatpush.msra.mxu0 0.0
        %3537 = vmatpush.msra.mxu0 0.0
        %3538 = vmatpush.msra.mxu0 0.0
        %3539 = vmatpush.msra.mxu0 0.0
        %3540 = vmatpush.msra.mxu0 0.0
        %3541 = vmatpush.msra.mxu0 %v3487
        %3542 = vmatpush.msra.mxu0 %v3486
        %3543 = vmatmul.f32.gmra.mxu0 %v3507
        %v3544 = vpop.f32.mrf.mxu0
        %v3545 = vadd.f32 0.0, %v3544
        %3546 = vmatmul.f32.gmra.mxu0 %v3509
        %v3547 = vpop.f32.mrf.mxu0
        %v3548 = vadd.f32 0.0, %v3547
        %3549 = vmatmul.f32.gmra.mxu0 %v3511
        %v3550 = vpop.f32.mrf.mxu0
        %v3551 = vadd.f32 0.0, %v3550
        %3552 = vmatmul.f32.gmra.mxu0 %v3513
        %v3553 = vpop.f32.mrf.mxu0
        %v3554 = vadd.f32 0.0, %v3553
        %3555 = vmatmul.f32.gmra.mxu0 %v3515
        %v3556 = vpop.f32.mrf.mxu0
        %v3557 = vadd.f32 0.0, %v3556
        %3558 = vmatmul.f32.gmra.mxu0 %v3517
        %v3559 = vpop.f32.mrf.mxu0
        %v3560 = vadd.f32 0.0, %v3559
        %3561 = vmatmul.f32.gmra.mxu0 %v3519
        %v3562 = vpop.f32.mrf.mxu0
        %v3563 = vadd.f32 0.0, %v3562
        %3564 = vmatmul.f32.gmra.mxu0 %v3521
        %v3565 = vpop.f32.mrf.mxu0
        %v3566 = vadd.f32 0.0, %v3565
        %3567 = vmatmul.f32.gmra.mxu0 %v3523
        %v3568 = vpop.f32.mrf.mxu0
        %v3569 = vadd.f32 0.0, %v3568
        %3570 = vmatmul.f32.gmra.mxu0 %v3525
        %v3571 = vpop.f32.mrf.mxu0
        %v3572 = vadd.f32 0.0, %v3571
        %3573 = vdwg.mxu0
        %v3574 = vadd.f32 %v3456, %v3545
        %v3575 = vadd.f32 %v3459, %v3548
        %v3576 = vadd.f32 %v3462, %v3551
        %v3577 = vadd.f32 %v3465, %v3554
        %v3578 = vadd.f32 %v3468, %v3557
        %v3579 = vadd.f32 %v3471, %v3560
        %v3580 = vadd.f32 %v3474, %v3563
        %v3581 = vadd.f32 %v3477, %v3566
        %v3582 = vadd.f32 %v3480, %v3569
        %v3583 = vadd.f32 %v3483, %v3572
        %s3584 = scalar_lea.vmem %s4, 48
        %v3585 = vld [vmem:[%s3584] sm:$0xff]
        %v3586 = vld [vmem:[%s3584 + $0x8] sm:$0xff]
        %v3588 = vrot.slane %v3308, 2
        %v3589 = vsel %vm1087, %v3505, %v3588
        %v3590 = vsel %vm3350, %v3589, 0
        %v3592 = vsel %vm3350, %v3588, 0
        %3594 = vmatpush.msra.mxu0 0.0
        %3595 = vmatpush.msra.mxu0 0.0
        %3596 = vmatpush.msra.mxu0 0.0
        %3597 = vmatpush.msra.mxu0 0.0
        %3598 = vmatpush.msra.mxu0 0.0
        %3599 = vmatpush.msra.mxu0 0.0
        %3600 = vmatpush.msra.mxu0 0.0
        %3601 = vmatpush.msra.mxu0 0.0
        %3602 = vmatpush.msra.mxu0 0.0
        %3603 = vmatpush.msra.mxu0 0.0
        %3604 = vmatpush.msra.mxu0 0.0
        %3605 = vmatpush.msra.mxu0 0.0
        %3606 = vmatpush.msra.mxu0 0.0
        %3607 = vmatpush.msra.mxu0 0.0
        %3608 = vmatpush.msra.mxu0 %v3586
        %3609 = vmatpush.msra.mxu0 %v3585
        %3610 = vmatmul.f32.gmra.mxu0 %v3509
        %v3611 = vpop.f32.mrf.mxu0
        %v3612 = vadd.f32 0.0, %v3611
        %3613 = vmatmul.f32.gmra.mxu0 %v3511
        %v3614 = vpop.f32.mrf.mxu0
        %v3615 = vadd.f32 0.0, %v3614
        %3616 = vmatmul.f32.gmra.mxu0 %v3513
        %v3617 = vpop.f32.mrf.mxu0
        %v3618 = vadd.f32 0.0, %v3617
        %3619 = vmatmul.f32.gmra.mxu0 %v3515
        %v3620 = vpop.f32.mrf.mxu0
        %v3621 = vadd.f32 0.0, %v3620
        %3622 = vmatmul.f32.gmra.mxu0 %v3517
        %v3623 = vpop.f32.mrf.mxu0
        %v3624 = vadd.f32 0.0, %v3623
        %3625 = vmatmul.f32.gmra.mxu0 %v3519
        %v3626 = vpop.f32.mrf.mxu0
        %v3627 = vadd.f32 0.0, %v3626
        %3628 = vmatmul.f32.gmra.mxu0 %v3521
        %v3629 = vpop.f32.mrf.mxu0
        %v3630 = vadd.f32 0.0, %v3629
        %3631 = vmatmul.f32.gmra.mxu0 %v3523
        %v3632 = vpop.f32.mrf.mxu0
        %v3633 = vadd.f32 0.0, %v3632
        %3634 = vmatmul.f32.gmra.mxu0 %v3590
        %v3635 = vpop.f32.mrf.mxu0
        %v3636 = vadd.f32 0.0, %v3635
        %3637 = vmatmul.f32.gmra.mxu0 %v3592
        %v3638 = vpop.f32.mrf.mxu0
        %v3639 = vadd.f32 0.0, %v3638
        %3640 = vdwg.mxu0
        %v3641 = vadd.f32 %v3574, %v3612
        %v3642 = vadd.f32 %v3575, %v3615
        %v3643 = vadd.f32 %v3576, %v3618
        %v3644 = vadd.f32 %v3577, %v3621
        %v3645 = vadd.f32 %v3578, %v3624
        %v3646 = vadd.f32 %v3579, %v3627
        %v3647 = vadd.f32 %v3580, %v3630
        %v3648 = vadd.f32 %v3581, %v3633
        %v3649 = vadd.f32 %v3582, %v3636
        %v3650 = vadd.f32 %v3583, %v3639
        %s3651 = scalar_lea.vmem %s4, 64
        %v3652 = vld [vmem:[%s3651] sm:$0xff]
        %v3653 = vld [vmem:[%s3651 + $0x8] sm:$0xff]
        %v3655 = vrot.slane %v3281, 3
        %v3656 = vrot.slane %v3284, 3
        %v3657 = vsel %vm1545, %v3655, %v3656
        %v3658 = vrot.slane %v3287, 3
        %v3659 = vsel %vm1545, %v3656, %v3658
        %v3660 = vrot.slane %v3290, 3
        %v3661 = vsel %vm1545, %v3658, %v3660
        %v3662 = vrot.slane %v3293, 3
        %v3663 = vsel %vm1545, %v3660, %v3662
        %v3664 = vrot.slane %v3296, 3
        %v3665 = vsel %vm1545, %v3662, %v3664
        %v3666 = vrot.slane %v3299, 3
        %v3667 = vsel %vm1545, %v3664, %v3666
        %v3668 = vrot.slane %v3302, 3
        %v3669 = vsel %vm1545, %v3666, %v3668
        %v3670 = vrot.slane %v3305, 3
        %v3671 = vsel %vm1545, %v3668, %v3670
        %v3672 = vrot.slane %v3308, 3
        %v3673 = vsel %vm1545, %v3670, %v3672
        %v3674 = vrot.slane %v3311, 3
        %v3675 = vsel %vm1545, %v3672, %v3674
        %v3676 = vsel %vm3350, %v3657, 0
        %v3678 = vsel %vm3350, %v3659, 0
        %v3680 = vsel %vm3350, %v3661, 0
        %v3682 = vsel %vm3350, %v3663, 0
        %v3684 = vsel %vm3350, %v3665, 0
        %v3686 = vsel %vm3350, %v3667, 0
        %v3688 = vsel %vm3350, %v3669, 0
        %v3690 = vsel %vm3350, %v3671, 0
        %v3692 = vsel %vm3350, %v3673, 0
        %v3694 = vsel %vm3350, %v3675, 0
        %3696 = vmatpush.msra.mxu0 0.0
        %3697 = vmatpush.msra.mxu0 0.0
        %3698 = vmatpush.msra.mxu0 0.0
        %3699 = vmatpush.msra.mxu0 0.0
        %3700 = vmatpush.msra.mxu0 0.0
        %3701 = vmatpush.msra.mxu0 0.0
        %3702 = vmatpush.msra.mxu0 0.0
        %3703 = vmatpush.msra.mxu0 0.0
        %3704 = vmatpush.msra.mxu0 0.0
        %3705 = vmatpush.msra.mxu0 0.0
        %3706 = vmatpush.msra.mxu0 0.0
        %3707 = vmatpush.msra.mxu0 0.0
        %3708 = vmatpush.msra.mxu0 0.0
        %3709 = vmatpush.msra.mxu0 0.0
        %3710 = vmatpush.msra.mxu0 %v3653
        %3711 = vmatpush.msra.mxu0 %v3652
        %3712 = vmatmul.f32.gmra.mxu0 %v3676
        %v3713 = vpop.f32.mrf.mxu0
        %v3714 = vadd.f32 0.0, %v3713
        %3715 = vmatmul.f32.gmra.mxu0 %v3678
        %v3716 = vpop.f32.mrf.mxu0
        %v3717 = vadd.f32 0.0, %v3716
        %3718 = vmatmul.f32.gmra.mxu0 %v3680
        %v3719 = vpop.f32.mrf.mxu0
        %v3720 = vadd.f32 0.0, %v3719
        %3721 = vmatmul.f32.gmra.mxu0 %v3682
        %v3722 = vpop.f32.mrf.mxu0
        %v3723 = vadd.f32 0.0, %v3722
        %3724 = vmatmul.f32.gmra.mxu0 %v3684
        %v3725 = vpop.f32.mrf.mxu0
        %v3726 = vadd.f32 0.0, %v3725
        %3727 = vmatmul.f32.gmra.mxu0 %v3686
        %v3728 = vpop.f32.mrf.mxu0
        %v3729 = vadd.f32 0.0, %v3728
        %3730 = vmatmul.f32.gmra.mxu0 %v3688
        %v3731 = vpop.f32.mrf.mxu0
        %v3732 = vadd.f32 0.0, %v3731
        %3733 = vmatmul.f32.gmra.mxu0 %v3690
        %v3734 = vpop.f32.mrf.mxu0
        %v3735 = vadd.f32 0.0, %v3734
        %3736 = vmatmul.f32.gmra.mxu0 %v3692
        %v3737 = vpop.f32.mrf.mxu0
        %v3738 = vadd.f32 0.0, %v3737
        %3739 = vmatmul.f32.gmra.mxu0 %v3694
        %v3740 = vpop.f32.mrf.mxu0
        %v3741 = vadd.f32 0.0, %v3740
        %3742 = vdwg.mxu0
        %v3743 = vadd.f32 %v3641, %v3714
        %v3744 = vadd.f32 %v3642, %v3717
        %v3745 = vadd.f32 %v3643, %v3720
        %v3746 = vadd.f32 %v3644, %v3723
        %v3747 = vadd.f32 %v3645, %v3726
        %v3748 = vadd.f32 %v3646, %v3729
        %v3749 = vadd.f32 %v3647, %v3732
        %v3750 = vadd.f32 %v3648, %v3735
        %v3751 = vadd.f32 %v3649, %v3738
        %v3752 = vadd.f32 %v3650, %v3741
        %s3753 = scalar_lea.vmem %s4, 80
        %v3754 = vld [vmem:[%s3753] sm:$0xff]
        %v3755 = vld [vmem:[%s3753 + $0x8] sm:$0xff]
        %v3756 = vrot.slane %v3281, 4
        %v3757 = vrot.slane %v3284, 4
        %v3758 = vsel %vm1770, %v3756, %v3757
        %v3759 = vrot.slane %v3287, 4
        %v3760 = vsel %vm1770, %v3757, %v3759
        %v3761 = vrot.slane %v3290, 4
        %v3762 = vsel %vm1770, %v3759, %v3761
        %v3763 = vrot.slane %v3293, 4
        %v3764 = vsel %vm1770, %v3761, %v3763
        %v3765 = vrot.slane %v3296, 4
        %v3766 = vsel %vm1770, %v3763, %v3765
        %v3767 = vrot.slane %v3299, 4
        %v3768 = vsel %vm1770, %v3765, %v3767
        %v3769 = vrot.slane %v3302, 4
        %v3770 = vsel %vm1770, %v3767, %v3769
        %v3771 = vrot.slane %v3305, 4
        %v3772 = vsel %vm1770, %v3769, %v3771
        %v3773 = vrot.slane %v3308, 4
        %v3774 = vsel %vm1770, %v3771, %v3773
        %v3775 = vrot.slane %v3311, 4
        %v3776 = vsel %vm1770, %v3773, %v3775
        %v3777 = vsel %vm3350, %v3758, 0
        %v3779 = vsel %vm3350, %v3760, 0
        %v3781 = vsel %vm3350, %v3762, 0
        %v3783 = vsel %vm3350, %v3764, 0
        %v3785 = vsel %vm3350, %v3766, 0
        %v3787 = vsel %vm3350, %v3768, 0
        %v3789 = vsel %vm3350, %v3770, 0
        %v3791 = vsel %vm3350, %v3772, 0
        %v3793 = vsel %vm3350, %v3774, 0
        %v3795 = vsel %vm3350, %v3776, 0
        %3797 = vmatpush.msra.mxu0 0.0
        %3798 = vmatpush.msra.mxu0 0.0
        %3799 = vmatpush.msra.mxu0 0.0
        %3800 = vmatpush.msra.mxu0 0.0
        %3801 = vmatpush.msra.mxu0 0.0
        %3802 = vmatpush.msra.mxu0 0.0
        %3803 = vmatpush.msra.mxu0 0.0
        %3804 = vmatpush.msra.mxu0 0.0
        %3805 = vmatpush.msra.mxu0 0.0
        %3806 = vmatpush.msra.mxu0 0.0
        %3807 = vmatpush.msra.mxu0 0.0
        %3808 = vmatpush.msra.mxu0 0.0
        %3809 = vmatpush.msra.mxu0 0.0
        %3810 = vmatpush.msra.mxu0 0.0
        %3811 = vmatpush.msra.mxu0 %v3755
        %3812 = vmatpush.msra.mxu0 %v3754
        %3813 = vmatmul.f32.gmra.mxu0 %v3777
        %v3814 = vpop.f32.mrf.mxu0
        %v3815 = vadd.f32 0.0, %v3814
        %3816 = vmatmul.f32.gmra.mxu0 %v3779
        %v3817 = vpop.f32.mrf.mxu0
        %v3818 = vadd.f32 0.0, %v3817
        %3819 = vmatmul.f32.gmra.mxu0 %v3781
        %v3820 = vpop.f32.mrf.mxu0
        %v3821 = vadd.f32 0.0, %v3820
        %3822 = vmatmul.f32.gmra.mxu0 %v3783
        %v3823 = vpop.f32.mrf.mxu0
        %v3824 = vadd.f32 0.0, %v3823
        %3825 = vmatmul.f32.gmra.mxu0 %v3785
        %v3826 = vpop.f32.mrf.mxu0
        %v3827 = vadd.f32 0.0, %v3826
        %3828 = vmatmul.f32.gmra.mxu0 %v3787
        %v3829 = vpop.f32.mrf.mxu0
        %v3830 = vadd.f32 0.0, %v3829
        %3831 = vmatmul.f32.gmra.mxu0 %v3789
        %v3832 = vpop.f32.mrf.mxu0
        %v3833 = vadd.f32 0.0, %v3832
        %3834 = vmatmul.f32.gmra.mxu0 %v3791
        %v3835 = vpop.f32.mrf.mxu0
        %v3836 = vadd.f32 0.0, %v3835
        %3837 = vmatmul.f32.gmra.mxu0 %v3793
        %v3838 = vpop.f32.mrf.mxu0
        %v3839 = vadd.f32 0.0, %v3838
        %3840 = vmatmul.f32.gmra.mxu0 %v3795
        %v3841 = vpop.f32.mrf.mxu0
        %v3842 = vadd.f32 0.0, %v3841
        %3843 = vdwg.mxu0
        %v3844 = vadd.f32 %v3743, %v3815
        %v3845 = vadd.f32 %v3744, %v3818
        %v3846 = vadd.f32 %v3745, %v3821
        %v3847 = vadd.f32 %v3746, %v3824
        %v3848 = vadd.f32 %v3747, %v3827
        %v3849 = vadd.f32 %v3748, %v3830
        %v3850 = vadd.f32 %v3749, %v3833
        %v3851 = vadd.f32 %v3750, %v3836
        %v3852 = vadd.f32 %v3751, %v3839
        %v3853 = vadd.f32 %v3752, %v3842
        %s3854 = scalar_lea.vmem %s4, 96
        %v3855 = vld [vmem:[%s3854] sm:$0xff]
        %v3856 = vld [vmem:[%s3854 + $0x8] sm:$0xff]
        %v3858 = vrot.slane %v3314, 4
        %v3859 = vsel %vm1770, %v3775, %v3858
        %v3860 = vsel %vm3350, %v3859, 0
        %3862 = vmatpush.msra.mxu0 0.0
        %3863 = vmatpush.msra.mxu0 0.0
        %3864 = vmatpush.msra.mxu0 0.0
        %3865 = vmatpush.msra.mxu0 0.0
        %3866 = vmatpush.msra.mxu0 0.0
        %3867 = vmatpush.msra.mxu0 0.0
        %3868 = vmatpush.msra.mxu0 0.0
        %3869 = vmatpush.msra.mxu0 0.0
        %3870 = vmatpush.msra.mxu0 0.0
        %3871 = vmatpush.msra.mxu0 0.0
        %3872 = vmatpush.msra.mxu0 0.0
        %3873 = vmatpush.msra.mxu0 0.0
        %3874 = vmatpush.msra.mxu0 0.0
        %3875 = vmatpush.msra.mxu0 0.0
        %3876 = vmatpush.msra.mxu0 %v3856
        %3877 = vmatpush.msra.mxu0 %v3855
        %3878 = vmatmul.f32.gmra.mxu0 %v3779
        %v3879 = vpop.f32.mrf.mxu0
        %v3880 = vadd.f32 0.0, %v3879
        %3881 = vmatmul.f32.gmra.mxu0 %v3781
        %v3882 = vpop.f32.mrf.mxu0
        %v3883 = vadd.f32 0.0, %v3882
        %3884 = vmatmul.f32.gmra.mxu0 %v3783
        %v3885 = vpop.f32.mrf.mxu0
        %v3886 = vadd.f32 0.0, %v3885
        %3887 = vmatmul.f32.gmra.mxu0 %v3785
        %v3888 = vpop.f32.mrf.mxu0
        %v3889 = vadd.f32 0.0, %v3888
        %3890 = vmatmul.f32.gmra.mxu0 %v3787
        %v3891 = vpop.f32.mrf.mxu0
        %v3892 = vadd.f32 0.0, %v3891
        %3893 = vmatmul.f32.gmra.mxu0 %v3789
        %v3894 = vpop.f32.mrf.mxu0
        %v3895 = vadd.f32 0.0, %v3894
        %3896 = vmatmul.f32.gmra.mxu0 %v3791
        %v3897 = vpop.f32.mrf.mxu0
        %v3898 = vadd.f32 0.0, %v3897
        %3899 = vmatmul.f32.gmra.mxu0 %v3793
        %v3900 = vpop.f32.mrf.mxu0
        %v3901 = vadd.f32 0.0, %v3900
        %3902 = vmatmul.f32.gmra.mxu0 %v3795
        %v3903 = vpop.f32.mrf.mxu0
        %v3904 = vadd.f32 0.0, %v3903
        %3905 = vmatmul.f32.gmra.mxu0 %v3860
        %v3906 = vpop.f32.mrf.mxu0
        %v3907 = vadd.f32 0.0, %v3906
        %3908 = vdwg.mxu0
        %v3909 = vadd.f32 %v3844, %v3880
        %v3910 = vadd.f32 %v3845, %v3883
        %v3911 = vadd.f32 %v3846, %v3886
        %v3912 = vadd.f32 %v3847, %v3889
        %v3913 = vadd.f32 %v3848, %v3892
        %v3914 = vadd.f32 %v3849, %v3895
        %v3915 = vadd.f32 %v3850, %v3898
        %v3916 = vadd.f32 %v3851, %v3901
        %v3917 = vadd.f32 %v3852, %v3904
        %v3918 = vadd.f32 %v3853, %v3907
        %s3919 = scalar_lea.vmem %s4, 112
        %v3920 = vld [vmem:[%s3919] sm:$0xff]
        %v3921 = vld [vmem:[%s3919 + $0x8] sm:$0xff]
        %v3922 = vrot.slane %v3284, 5
        %v3923 = vrot.slane %v3287, 5
        %v3924 = vsel %vm2229, %v3922, %v3923
        %v3925 = vrot.slane %v3290, 5
        %v3926 = vsel %vm2229, %v3923, %v3925
        %v3927 = vrot.slane %v3293, 5
        %v3928 = vsel %vm2229, %v3925, %v3927
        %v3929 = vrot.slane %v3296, 5
        %v3930 = vsel %vm2229, %v3927, %v3929
        %v3931 = vrot.slane %v3299, 5
        %v3932 = vsel %vm2229, %v3929, %v3931
        %v3933 = vrot.slane %v3302, 5
        %v3934 = vsel %vm2229, %v3931, %v3933
        %v3935 = vrot.slane %v3305, 5
        %v3936 = vsel %vm2229, %v3933, %v3935
        %v3937 = vrot.slane %v3308, 5
        %v3938 = vsel %vm2229, %v3935, %v3937
        %v3939 = vrot.slane %v3311, 5
        %v3940 = vsel %vm2229, %v3937, %v3939
        %v3941 = vrot.slane %v3314, 5
        %v3942 = vsel %vm2229, %v3939, %v3941
        %v3943 = vsel %vm3350, %v3924, 0
        %v3945 = vsel %vm3350, %v3926, 0
        %v3947 = vsel %vm3350, %v3928, 0
        %v3949 = vsel %vm3350, %v3930, 0
        %v3951 = vsel %vm3350, %v3932, 0
        %v3953 = vsel %vm3350, %v3934, 0
        %v3955 = vsel %vm3350, %v3936, 0
        %v3957 = vsel %vm3350, %v3938, 0
        %v3959 = vsel %vm3350, %v3940, 0
        %v3961 = vsel %vm3350, %v3942, 0
        %3963 = vmatpush.msra.mxu0 0.0
        %3964 = vmatpush.msra.mxu0 0.0
        %3965 = vmatpush.msra.mxu0 0.0
        %3966 = vmatpush.msra.mxu0 0.0
        %3967 = vmatpush.msra.mxu0 0.0
        %3968 = vmatpush.msra.mxu0 0.0
        %3969 = vmatpush.msra.mxu0 0.0
        %3970 = vmatpush.msra.mxu0 0.0
        %3971 = vmatpush.msra.mxu0 0.0
        %3972 = vmatpush.msra.mxu0 0.0
        %3973 = vmatpush.msra.mxu0 0.0
        %3974 = vmatpush.msra.mxu0 0.0
        %3975 = vmatpush.msra.mxu0 0.0
        %3976 = vmatpush.msra.mxu0 0.0
        %3977 = vmatpush.msra.mxu0 %v3921
        %3978 = vmatpush.msra.mxu0 %v3920
        %3979 = vmatmul.f32.gmra.mxu0 %v3943
        %v3980 = vpop.f32.mrf.mxu0
        %v3981 = vadd.f32 0.0, %v3980
        %3982 = vmatmul.f32.gmra.mxu0 %v3945
        %v3983 = vpop.f32.mrf.mxu0
        %v3984 = vadd.f32 0.0, %v3983
        %3985 = vmatmul.f32.gmra.mxu0 %v3947
        %v3986 = vpop.f32.mrf.mxu0
        %v3987 = vadd.f32 0.0, %v3986
        %3988 = vmatmul.f32.gmra.mxu0 %v3949
        %v3989 = vpop.f32.mrf.mxu0
        %v3990 = vadd.f32 0.0, %v3989
        %3991 = vmatmul.f32.gmra.mxu0 %v3951
        %v3992 = vpop.f32.mrf.mxu0
        %v3993 = vadd.f32 0.0, %v3992
        %3994 = vmatmul.f32.gmra.mxu0 %v3953
        %v3995 = vpop.f32.mrf.mxu0
        %v3996 = vadd.f32 0.0, %v3995
        %3997 = vmatmul.f32.gmra.mxu0 %v3955
        %v3998 = vpop.f32.mrf.mxu0
        %v3999 = vadd.f32 0.0, %v3998
        %4000 = vmatmul.f32.gmra.mxu0 %v3957
        %v4001 = vpop.f32.mrf.mxu0
        %v4002 = vadd.f32 0.0, %v4001
        %4003 = vmatmul.f32.gmra.mxu0 %v3959
        %v4004 = vpop.f32.mrf.mxu0
        %v4005 = vadd.f32 0.0, %v4004
        %4006 = vmatmul.f32.gmra.mxu0 %v3961
        %v4007 = vpop.f32.mrf.mxu0
        %v4008 = vadd.f32 0.0, %v4007
        %4009 = vdwg.mxu0
        %v4010 = vadd.f32 %v3909, %v3981
        %v4011 = vadd.f32 %v3910, %v3984
        %v4012 = vadd.f32 %v3911, %v3987
        %v4013 = vadd.f32 %v3912, %v3990
        %v4014 = vadd.f32 %v3913, %v3993
        %v4015 = vadd.f32 %v3914, %v3996
        %v4016 = vadd.f32 %v3915, %v3999
        %v4017 = vadd.f32 %v3916, %v4002
        %v4018 = vadd.f32 %v3917, %v4005
        %v4019 = vadd.f32 %v3918, %v4008
        %s4020 = scalar_lea.vmem %s4, 128
        %v4021 = vld [vmem:[%s4020] sm:$0xff]
        %v4022 = vld [vmem:[%s4020 + $0x8] sm:$0xff]
        %v4023 = vrot.slane %v3284, 6
        %v4024 = vrot.slane %v3287, 6
        %v4025 = vsel %vm2454, %v4023, %v4024
        %v4026 = vrot.slane %v3290, 6
        %v4027 = vsel %vm2454, %v4024, %v4026
        %v4028 = vrot.slane %v3293, 6
        %v4029 = vsel %vm2454, %v4026, %v4028
        %v4030 = vrot.slane %v3296, 6
        %v4031 = vsel %vm2454, %v4028, %v4030
        %v4032 = vrot.slane %v3299, 6
        %v4033 = vsel %vm2454, %v4030, %v4032
        %v4034 = vrot.slane %v3302, 6
        %v4035 = vsel %vm2454, %v4032, %v4034
        %v4036 = vrot.slane %v3305, 6
        %v4037 = vsel %vm2454, %v4034, %v4036
        %v4038 = vrot.slane %v3308, 6
        %v4039 = vsel %vm2454, %v4036, %v4038
        %v4040 = vrot.slane %v3311, 6
        %v4041 = vsel %vm2454, %v4038, %v4040
        %v4042 = vrot.slane %v3314, 6
        %v4043 = vsel %vm2454, %v4040, %v4042
        %v4044 = vsel %vm3350, %v4025, 0
        %v4046 = vsel %vm3350, %v4027, 0
        %v4048 = vsel %vm3350, %v4029, 0
        %v4050 = vsel %vm3350, %v4031, 0
        %v4052 = vsel %vm3350, %v4033, 0
        %v4054 = vsel %vm3350, %v4035, 0
        %v4056 = vsel %vm3350, %v4037, 0
        %v4058 = vsel %vm3350, %v4039, 0
        %v4060 = vsel %vm3350, %v4041, 0
        %v4062 = vsel %vm3350, %v4043, 0
        %4064 = vmatpush.msra.mxu0 0.0
        %4065 = vmatpush.msra.mxu0 0.0
        %4066 = vmatpush.msra.mxu0 0.0
        %4067 = vmatpush.msra.mxu0 0.0
        %4068 = vmatpush.msra.mxu0 0.0
        %4069 = vmatpush.msra.mxu0 0.0
        %4070 = vmatpush.msra.mxu0 0.0
        %4071 = vmatpush.msra.mxu0 0.0
        %4072 = vmatpush.msra.mxu0 0.0
        %4073 = vmatpush.msra.mxu0 0.0
        %4074 = vmatpush.msra.mxu0 0.0
        %4075 = vmatpush.msra.mxu0 0.0
        %4076 = vmatpush.msra.mxu0 0.0
        %4077 = vmatpush.msra.mxu0 0.0
        %4078 = vmatpush.msra.mxu0 %v4022
        %4079 = vmatpush.msra.mxu0 %v4021
        %4080 = vmatmul.f32.gmra.mxu0 %v4044
        %v4081 = vpop.f32.mrf.mxu0
        %v4082 = vadd.f32 0.0, %v4081
        %4083 = vmatmul.f32.gmra.mxu0 %v4046
        %v4084 = vpop.f32.mrf.mxu0
        %v4085 = vadd.f32 0.0, %v4084
        %4086 = vmatmul.f32.gmra.mxu0 %v4048
        %v4087 = vpop.f32.mrf.mxu0
        %v4088 = vadd.f32 0.0, %v4087
        %4089 = vmatmul.f32.gmra.mxu0 %v4050
        %v4090 = vpop.f32.mrf.mxu0
        %v4091 = vadd.f32 0.0, %v4090
        %4092 = vmatmul.f32.gmra.mxu0 %v4052
        %v4093 = vpop.f32.mrf.mxu0
        %v4094 = vadd.f32 0.0, %v4093
        %4095 = vmatmul.f32.gmra.mxu0 %v4054
        %v4096 = vpop.f32.mrf.mxu0
        %v4097 = vadd.f32 0.0, %v4096
        %4098 = vmatmul.f32.gmra.mxu0 %v4056
        %v4099 = vpop.f32.mrf.mxu0
        %v4100 = vadd.f32 0.0, %v4099
        %4101 = vmatmul.f32.gmra.mxu0 %v4058
        %v4102 = vpop.f32.mrf.mxu0
        %v4103 = vadd.f32 0.0, %v4102
        %4104 = vmatmul.f32.gmra.mxu0 %v4060
        %v4105 = vpop.f32.mrf.mxu0
        %v4106 = vadd.f32 0.0, %v4105
        %4107 = vmatmul.f32.gmra.mxu0 %v4062
        %v4108 = vpop.f32.mrf.mxu0
        %v4109 = vadd.f32 0.0, %v4108
        %4110 = vdwg.mxu0
        %v4111 = vadd.f32 %v4010, %v4082
        %v4112 = vadd.f32 %v4011, %v4085
        %v4113 = vadd.f32 %v4012, %v4088
        %v4114 = vadd.f32 %v4013, %v4091
        %v4115 = vadd.f32 %v4014, %v4094
        %v4116 = vadd.f32 %v4015, %v4097
        %v4117 = vadd.f32 %v4016, %v4100
        %v4118 = vadd.f32 %v4017, %v4103
        %v4119 = vadd.f32 %v4018, %v4106
        %v4120 = vadd.f32 %v4019, %v4109
        %v4121 = vld [vmem:[%s5] sm:$0x1]
        %v4123 = vperm.slane %v4121, 0
        %v4125 = vmul.f32 %v4111, %v4123
        %v4126 = vmul.f32 %v4112, %v4123
        %v4127 = vmul.f32 %v4113, %v4123
        %v4128 = vmul.f32 %v4114, %v4123
        %v4129 = vmul.f32 %v4115, %v4123
        %v4130 = vmul.f32 %v4116, %v4123
        %v4131 = vmul.f32 %v4117, %v4123
        %v4132 = vmul.f32 %v4118, %v4123
        %v4133 = vmul.f32 %v4119, %v4123
        %v4134 = vmul.f32 %v4120, %v4123
        %v4135 = vld [vmem:[%s6] sm:$0x1]
        %v4137 = vperm.slane %v4135, 0
        %v4139 = vadd.f32 %v4125, %v4137
        %v4140 = vadd.f32 %v4126, %v4137
        %v4141 = vadd.f32 %v4127, %v4137
        %v4142 = vadd.f32 %v4128, %v4137
        %v4143 = vadd.f32 %v4129, %v4137
        %v4144 = vadd.f32 %v4130, %v4137
        %v4145 = vadd.f32 %v4131, %v4137
        %v4146 = vadd.f32 %v4132, %v4137
        %v4147 = vadd.f32 %v4133, %v4137
        %v4148 = vadd.f32 %v4134, %v4137
        %v4149 = vmax.f32 %v4139, 0.0
        %v4150 = vmax.f32 %v4140, 0.0
        %v4151 = vmax.f32 %v4141, 0.0
        %v4152 = vmax.f32 %v4142, 0.0
        %v4153 = vmax.f32 %v4143, 0.0
        %v4154 = vmax.f32 %v4144, 0.0
        %v4155 = vmax.f32 %v4145, 0.0
        %v4156 = vmax.f32 %v4146, 0.0
        %v4157 = vmax.f32 %v4147, 0.0
        %v4158 = vmax.f32 %v4148, 0.0
        %v4159 = vld [vmem:[%s11] sm:$0xff]
        %v4160 = vld [vmem:[%s11 + $0x8] sm:$0xff]
        %v4161 = vld [vmem:[%s11 + $0x10] sm:$0xff]
        %v4162 = vld [vmem:[%s11 + $0x18] sm:$0xff]
        %v4163 = vld [vmem:[%s11 + $0x20] sm:$0xf]
        %v4173 = vrot.slane %v4149, 1
        %v4174 = vrot.slane %v4150, 1
        %v4175 = vsel %vm866, %v4173, %v4174
        %v4176 = vrot.slane %v4151, 1
        %v4177 = vsel %vm866, %v4174, %v4176
        %v4178 = vrot.slane %v4152, 1
        %v4179 = vsel %vm866, %v4176, %v4178
        %v4180 = vrot.slane %v4153, 1
        %v4181 = vsel %vm866, %v4178, %v4180
        %v4182 = vrot.slane %v4154, 1
        %v4183 = vsel %vm866, %v4180, %v4182
        %v4184 = vrot.slane %v4155, 1
        %v4185 = vsel %vm866, %v4182, %v4184
        %v4186 = vrot.slane %v4156, 1
        %v4187 = vsel %vm866, %v4184, %v4186
        %v4188 = vrot.slane %v4157, 1
        %v4189 = vsel %vm866, %v4186, %v4188
        %v4199 = vmax.f32 %v4149, %v4175
        %v4200 = vmax.f32 %v4150, %v4177
        %v4201 = vmax.f32 %v4151, %v4179
        %v4202 = vmax.f32 %v4152, %v4181
        %v4203 = vmax.f32 %v4153, %v4183
        %v4204 = vmax.f32 %v4154, %v4185
        %v4205 = vmax.f32 %v4155, %v4187
        %v4206 = vmax.f32 %v4156, %v4189
        %v4207 = vmax.f32 %v4157, %v4188
        %v4209 = vrot.slane %v4158, 1
        %v4210 = vsel %vm866, %v4188, %v4209
        %v4213 = vmax.f32 %v4157, %v4210
        %v4214 = vmax.f32 %v4158, %v4209
        %v4224 = vrot.slane %v4200, 2
        %v4225 = vrot.slane %v4201, 2
        %v4226 = vsel %vm1087, %v4224, %v4225
        %v4227 = vrot.slane %v4202, 2
        %v4228 = vsel %vm1087, %v4225, %v4227
        %v4229 = vrot.slane %v4203, 2
        %v4230 = vsel %vm1087, %v4227, %v4229
        %v4231 = vrot.slane %v4204, 2
        %v4232 = vsel %vm1087, %v4229, %v4231
        %v4233 = vrot.slane %v4205, 2
        %v4234 = vsel %vm1087, %v4231, %v4233
        %v4235 = vrot.slane %v4206, 2
        %v4236 = vsel %vm1087, %v4233, %v4235
        %v4237 = vrot.slane %v4213, 2
        %v4238 = vsel %vm1087, %v4235, %v4237
        %v4239 = vrot.slane %v4214, 2
        %v4240 = vsel %vm1087, %v4237, %v4239
        %v4250 = vmax.f32 %v4199, %v4226
        %v4251 = vmax.f32 %v4200, %v4228
        %v4252 = vmax.f32 %v4201, %v4230
        %v4253 = vmax.f32 %v4202, %v4232
        %v4254 = vmax.f32 %v4203, %v4234
        %v4255 = vmax.f32 %v4204, %v4236
        %v4256 = vmax.f32 %v4205, %v4238
        %v4257 = vmax.f32 %v4206, %v4240
        %v4258 = vmax.f32 %v4207, %v4239
        %vm4259 = vcmask 547840
        %v4261 = vsel %vm4259, %v4159, 0
        %v4264 = vsel %vm4259, %v4160, 0
        %v4267 = vsel %vm4259, %v4161, 0
        %v4270 = vsel %vm4259, %v4162, 0
        %v4273 = vsel %vm4259, %v4163, 0
        %v4276 = vsel %vm2229, %v4258, 0
        %4278 = vmatpush.msra.mxu0 0.0
        %4279 = vmatpush.msra.mxu0 0.0
        %4280 = vmatpush.msra.mxu0 0.0
        %4281 = vmatpush.msra.mxu0 0.0
        %4282 = vmatpush.msra.mxu0 0.0
        %4283 = vmatpush.msra.mxu0 0.0
        %4284 = vmatpush.msra.mxu0 0.0
        %4285 = vmatpush.msra.mxu0 %v4276
        %4286 = vmatpush.msra.mxu0 %v4257
        %4287 = vmatpush.msra.mxu0 %v4256
        %4288 = vmatpush.msra.mxu0 %v4255
        %4289 = vmatpush.msra.mxu0 %v4254
        %4290 = vmatpush.msra.mxu0 %v4253
        %4291 = vmatpush.msra.mxu0 %v4252
        %4292 = vmatpush.msra.mxu0 %v4251
        %4293 = vmatpush.msra.mxu0 %v4250
        %4294 = vmatmul.f32.gmra.mxu0 %v4261
        %v4295 = vpop.f32.mrf.mxu0
        %v4296 = vadd.f32 0.0, %v4295
        %4297 = vmatmul.f32.gmra.mxu0 %v4264
        %v4298 = vpop.f32.mrf.mxu0
        %v4299 = vadd.f32 0.0, %v4298
        %4300 = vmatmul.f32.gmra.mxu0 %v4267
        %v4301 = vpop.f32.mrf.mxu0
        %v4302 = vadd.f32 0.0, %v4301
        %4303 = vmatmul.f32.gmra.mxu0 %v4270
        %v4304 = vpop.f32.mrf.mxu0
        %v4305 = vadd.f32 0.0, %v4304
        %4306 = vmatmul.f32.gmra.mxu0 %v4273
        %v4307 = vpop.f32.mrf.mxu0
        %v4308 = vadd.f32 0.0, %v4307
        %4309 = vdwg.mxu0
        %v4310 = vld [vmem:[%s7] sm:$0xff]
        %v4311 = vld [vmem:[%s7 + $0x8] sm:$0xff]
        %v4312 = vld [vmem:[%s7 + $0x10] sm:$0xff]
        %v4313 = vld [vmem:[%s7 + $0x18] sm:$0xff]
        %s4314 = scalar_lea.vmem %s7, 32
        %v4315 = vld [vmem:[%s4314] sm:$0xff]
        %v4316 = vld [vmem:[%s4314 + $0x8] sm:$0xff]
        %v4317 = vld [vmem:[%s4314 + $0x10] sm:$0xff]
        %v4318 = vld [vmem:[%s4314 + $0x18] sm:$0xff]
        %v4322 = vrot.slane %v4296, 1
        %v4323 = vrot.slane %v4299, 1
        %v4324 = vsel %vm866, %v4322, %v4323
        %v4325 = vrot.slane %v4302, 1
        %v4326 = vsel %vm866, %v4323, %v4325
        %vm4327 = vcmask 261120
        %v4328 = vsel %vm4327, %v4324, 0
        %v4330 = vsel %vm4327, %v4326, 0
        %v4332 = vsel %vm4327, %v4325, 0
        %4334 = vmatpush.msra.mxu0 0.0
        %4335 = vmatpush.msra.mxu0 0.0
        %4336 = vmatpush.msra.mxu0 0.0
        %4337 = vmatpush.msra.mxu0 0.0
        %4338 = vmatpush.msra.mxu0 0.0
        %4339 = vmatpush.msra.mxu0 0.0
        %4340 = vmatpush.msra.mxu0 0.0
        %4341 = vmatpush.msra.mxu0 0.0
        %4342 = vmatpush.msra.mxu0 0.0
        %4343 = vmatpush.msra.mxu0 0.0
        %4344 = vmatpush.msra.mxu0 0.0
        %4345 = vmatpush.msra.mxu0 0.0
        %4346 = vmatpush.msra.mxu0 %v4318
        %4347 = vmatpush.msra.mxu0 %v4317
        %4348 = vmatpush.msra.mxu0 %v4316
        %4349 = vmatpush.msra.mxu0 %v4315
        %4350 = vmatmul.f32.gmra.mxu0 %v4328
        %v4351 = vpop.f32.mrf.mxu0
        %v4352 = vadd.f32 0.0, %v4351
        %4353 = vmatmul.f32.gmra.mxu0 %v4330
        %v4354 = vpop.f32.mrf.mxu0
        %v4355 = vadd.f32 0.0, %v4354
        %4356 = vmatmul.f32.gmra.mxu0 %v4332
        %v4357 = vpop.f32.mrf.mxu0
        %v4358 = vadd.f32 0.0, %v4357
        %4359 = vdwg.mxu0
        %v4360 = vsel %vm4327, %v4296, 0
        %v4362 = vsel %vm4327, %v4299, 0
        %v4364 = vsel %vm4327, %v4302, 0
        %4366 = vmatpush.msra.mxu0 0.0
        %4367 = vmatpush.msra.mxu0 0.0
        %4368 = vmatpush.msra.mxu0 0.0
        %4369 = vmatpush.msra.mxu0 0.0
        %4370 = vmatpush.msra.mxu0 0.0
        %4371 = vmatpush.msra.mxu0 0.0
        %4372 = vmatpush.msra.mxu0 0.0
        %4373 = vmatpush.msra.mxu0 0.0
        %4374 = vmatpush.msra.mxu0 0.0
        %4375 = vmatpush.msra.mxu0 0.0
        %4376 = vmatpush.msra.mxu0 0.0
        %4377 = vmatpush.msra.mxu0 0.0
        %4378 = vmatpush.msra.mxu0 %v4313
        %4379 = vmatpush.msra.mxu0 %v4312
        %4380 = vmatpush.msra.mxu0 %v4311
        %4381 = vmatpush.msra.mxu0 %v4310
        %4382 = vmatmul.f32.gmra.mxu0 %v4360
        %v4383 = vpop.f32.mrf.mxu0
        %v4384 = vadd.f32 %v4352, %v4383
        %4385 = vmatmul.f32.gmra.mxu0 %v4362
        %v4386 = vpop.f32.mrf.mxu0
        %v4387 = vadd.f32 %v4355, %v4386
        %4388 = vmatmul.f32.gmra.mxu0 %v4364
        %v4389 = vpop.f32.mrf.mxu0
        %v4390 = vadd.f32 %v4358, %v4389
        %4391 = vdwg.mxu0
        %s4392 = scalar_lea.vmem %s7, 64
        %v4393 = vld [vmem:[%s4392] sm:$0xff]
        %v4394 = vld [vmem:[%s4392 + $0x8] sm:$0xff]
        %v4395 = vld [vmem:[%s4392 + $0x10] sm:$0xff]
        %v4396 = vld [vmem:[%s4392 + $0x18] sm:$0xff]
        %v4397 = vrot.slane %v4296, 2
        %v4398 = vrot.slane %v4299, 2
        %v4399 = vsel %vm1087, %v4397, %v4398
        %v4400 = vrot.slane %v4302, 2
        %v4401 = vsel %vm1087, %v4398, %v4400
        %v4402 = vsel %vm4327, %v4399, 0
        %v4404 = vsel %vm4327, %v4401, 0
        %v4406 = vsel %vm4327, %v4400, 0
        %4408 = vmatpush.msra.mxu0 0.0
        %4409 = vmatpush.msra.mxu0 0.0
        %4410 = vmatpush.msra.mxu0 0.0
        %4411 = vmatpush.msra.mxu0 0.0
        %4412 = vmatpush.msra.mxu0 0.0
        %4413 = vmatpush.msra.mxu0 0.0
        %4414 = vmatpush.msra.mxu0 0.0
        %4415 = vmatpush.msra.mxu0 0.0
        %4416 = vmatpush.msra.mxu0 0.0
        %4417 = vmatpush.msra.mxu0 0.0
        %4418 = vmatpush.msra.mxu0 0.0
        %4419 = vmatpush.msra.mxu0 0.0
        %4420 = vmatpush.msra.mxu0 %v4396
        %4421 = vmatpush.msra.mxu0 %v4395
        %4422 = vmatpush.msra.mxu0 %v4394
        %4423 = vmatpush.msra.mxu0 %v4393
        %4424 = vmatmul.f32.gmra.mxu0 %v4402
        %v4425 = vpop.f32.mrf.mxu0
        %v4426 = vadd.f32 0.0, %v4425
        %4427 = vmatmul.f32.gmra.mxu0 %v4404
        %v4428 = vpop.f32.mrf.mxu0
        %v4429 = vadd.f32 0.0, %v4428
        %4430 = vmatmul.f32.gmra.mxu0 %v4406
        %v4431 = vpop.f32.mrf.mxu0
        %v4432 = vadd.f32 0.0, %v4431
        %4433 = vdwg.mxu0
        %v4434 = vadd.f32 %v4384, %v4426
        %v4435 = vadd.f32 %v4387, %v4429
        %v4436 = vadd.f32 %v4390, %v4432
        %s4437 = scalar_lea.vmem %s7, 96
        %v4438 = vld [vmem:[%s4437] sm:$0xff]
        %v4439 = vld [vmem:[%s4437 + $0x8] sm:$0xff]
        %v4440 = vld [vmem:[%s4437 + $0x10] sm:$0xff]
        %v4441 = vld [vmem:[%s4437 + $0x18] sm:$0xff]
        %v4443 = vrot.slane %v4296, 6
        %v4444 = vrot.slane %v4299, 6
        %v4445 = vsel %vm2454, %v4443, %v4444
        %v4446 = vrot.slane %v4302, 6
        %v4447 = vsel %vm2454, %v4444, %v4446
        %v4448 = vrot.slane %v4305, 6
        %v4449 = vsel %vm2454, %v4446, %v4448
        %v4450 = vsel %vm4327, %v4445, 0
        %v4452 = vsel %vm4327, %v4447, 0
        %v4454 = vsel %vm4327, %v4449, 0
        %4456 = vmatpush.msra.mxu0 0.0
        %4457 = vmatpush.msra.mxu0 0.0
        %4458 = vmatpush.msra.mxu0 0.0
        %4459 = vmatpush.msra.mxu0 0.0
        %4460 = vmatpush.msra.mxu0 0.0
        %4461 = vmatpush.msra.mxu0 0.0
        %4462 = vmatpush.msra.mxu0 0.0
        %4463 = vmatpush.msra.mxu0 0.0
        %4464 = vmatpush.msra.mxu0 0.0
        %4465 = vmatpush.msra.mxu0 0.0
        %4466 = vmatpush.msra.mxu0 0.0
        %4467 = vmatpush.msra.mxu0 0.0
        %4468 = vmatpush.msra.mxu0 %v4441
        %4469 = vmatpush.msra.mxu0 %v4440
        %4470 = vmatpush.msra.mxu0 %v4439
        %4471 = vmatpush.msra.mxu0 %v4438
        %4472 = vmatmul.f32.gmra.mxu0 %v4450
        %v4473 = vpop.f32.mrf.mxu0
        %v4474 = vadd.f32 0.0, %v4473
        %4475 = vmatmul.f32.gmra.mxu0 %v4452
        %v4476 = vpop.f32.mrf.mxu0
        %v4477 = vadd.f32 0.0, %v4476
        %4478 = vmatmul.f32.gmra.mxu0 %v4454
        %v4479 = vpop.f32.mrf.mxu0
        %v4480 = vadd.f32 0.0, %v4479
        %4481 = vdwg.mxu0
        %v4482 = vadd.f32 %v4434, %v4474
        %v4483 = vadd.f32 %v4435, %v4477
        %v4484 = vadd.f32 %v4436, %v4480
        %s4485 = scalar_lea.vmem %s7, 128
        %v4486 = vld [vmem:[%s4485] sm:$0xff]
        %v4487 = vld [vmem:[%s4485 + $0x8] sm:$0xff]
        %v4488 = vld [vmem:[%s4485 + $0x10] sm:$0xff]
        %v4489 = vld [vmem:[%s4485 + $0x18] sm:$0xff]
        %vm4490 = vcmask 1040384
        %v4491 = vrot.slane %v4296, 7
        %v4492 = vrot.slane %v4299, 7
        %v4493 = vsel %vm4490, %v4491, %v4492
        %v4494 = vrot.slane %v4302, 7
        %v4495 = vsel %vm4490, %v4492, %v4494
        %v4496 = vrot.slane %v4305, 7
        %v4497 = vsel %vm4490, %v4494, %v4496
        %v4498 = vsel %vm4327, %v4493, 0
        %v4500 = vsel %vm4327, %v4495, 0
        %v4502 = vsel %vm4327, %v4497, 0
        %4504 = vmatpush.msra.mxu0 0.0
        %4505 = vmatpush.msra.mxu0 0.0
        %4506 = vmatpush.msra.mxu0 0.0
        %4507 = vmatpush.msra.mxu0 0.0
        %4508 = vmatpush.msra.mxu0 0.0
        %4509 = vmatpush.msra.mxu0 0.0
        %4510 = vmatpush.msra.mxu0 0.0
        %4511 = vmatpush.msra.mxu0 0.0
        %4512 = vmatpush.msra.mxu0 0.0
        %4513 = vmatpush.msra.mxu0 0.0
        %4514 = vmatpush.msra.mxu0 0.0
        %4515 = vmatpush.msra.mxu0 0.0
        %4516 = vmatpush.msra.mxu0 %v4489
        %4517 = vmatpush.msra.mxu0 %v4488
        %4518 = vmatpush.msra.mxu0 %v4487
        %4519 = vmatpush.msra.mxu0 %v4486
        %4520 = vmatmul.f32.gmra.mxu0 %v4498
        %v4521 = vpop.f32.mrf.mxu0
        %v4522 = vadd.f32 0.0, %v4521
        %4523 = vmatmul.f32.gmra.mxu0 %v4500
        %v4524 = vpop.f32.mrf.mxu0
        %v4525 = vadd.f32 0.0, %v4524
        %4526 = vmatmul.f32.gmra.mxu0 %v4502
        %v4527 = vpop.f32.mrf.mxu0
        %v4528 = vadd.f32 0.0, %v4527
        %4529 = vdwg.mxu0
        %v4530 = vadd.f32 %v4482, %v4522
        %v4531 = vadd.f32 %v4483, %v4525
        %v4532 = vadd.f32 %v4484, %v4528
        %s4533 = scalar_lea.vmem %s7, 160
        %v4534 = vld [vmem:[%s4533] sm:$0xff]
        %v4535 = vld [vmem:[%s4533 + $0x8] sm:$0xff]
        %v4536 = vld [vmem:[%s4533 + $0x10] sm:$0xff]
        %v4537 = vld [vmem:[%s4533 + $0x18] sm:$0xff]
        %v4538 = vsel %vm4327, %v4305, 0
        %4540 = vmatpush.msra.mxu0 0.0
        %4541 = vmatpush.msra.mxu0 0.0
        %4542 = vmatpush.msra.mxu0 0.0
        %4543 = vmatpush.msra.mxu0 0.0
        %4544 = vmatpush.msra.mxu0 0.0
        %4545 = vmatpush.msra.mxu0 0.0
        %4546 = vmatpush.msra.mxu0 0.0
        %4547 = vmatpush.msra.mxu0 0.0
        %4548 = vmatpush.msra.mxu0 0.0
        %4549 = vmatpush.msra.mxu0 0.0
        %4550 = vmatpush.msra.mxu0 0.0
        %4551 = vmatpush.msra.mxu0 0.0
        %4552 = vmatpush.msra.mxu0 %v4537
        %4553 = vmatpush.msra.mxu0 %v4536
        %4554 = vmatpush.msra.mxu0 %v4535
        %4555 = vmatpush.msra.mxu0 %v4534
        %4556 = vmatmul.f32.gmra.mxu0 %v4362
        %v4557 = vpop.f32.mrf.mxu0
        %v4558 = vadd.f32 0.0, %v4557
        %4559 = vmatmul.f32.gmra.mxu0 %v4364
        %v4560 = vpop.f32.mrf.mxu0
        %v4561 = vadd.f32 0.0, %v4560
        %4562 = vmatmul.f32.gmra.mxu0 %v4538
        %v4563 = vpop.f32.mrf.mxu0
        %v4564 = vadd.f32 0.0, %v4563
        %4565 = vdwg.mxu0
        %v4566 = vadd.f32 %v4530, %v4558
        %v4567 = vadd.f32 %v4531, %v4561
        %v4568 = vadd.f32 %v4532, %v4564
        %s4569 = scalar_lea.vmem %s7, 192
        %v4570 = vld [vmem:[%s4569] sm:$0xff]
        %v4571 = vld [vmem:[%s4569 + $0x8] sm:$0xff]
        %v4572 = vld [vmem:[%s4569 + $0x10] sm:$0xff]
        %v4573 = vld [vmem:[%s4569 + $0x18] sm:$0xff]
        %v4575 = vrot.slane %v4299, 4
        %v4576 = vrot.slane %v4302, 4
        %v4577 = vsel %vm1770, %v4575, %v4576
        %v4578 = vrot.slane %v4305, 4
        %v4579 = vsel %vm1770, %v4576, %v4578
        %v4580 = vrot.slane %v4308, 4
        %v4581 = vsel %vm1770, %v4578, %v4580
        %v4582 = vsel %vm4327, %v4577, 0
        %v4584 = vsel %vm4327, %v4579, 0
        %v4586 = vsel %vm4327, %v4581, 0
        %4588 = vmatpush.msra.mxu0 0.0
        %4589 = vmatpush.msra.mxu0 0.0
        %4590 = vmatpush.msra.mxu0 0.0
        %4591 = vmatpush.msra.mxu0 0.0
        %4592 = vmatpush.msra.mxu0 0.0
        %4593 = vmatpush.msra.mxu0 0.0
        %4594 = vmatpush.msra.mxu0 0.0
        %4595 = vmatpush.msra.mxu0 0.0
        %4596 = vmatpush.msra.mxu0 0.0
        %4597 = vmatpush.msra.mxu0 0.0
        %4598 = vmatpush.msra.mxu0 0.0
        %4599 = vmatpush.msra.mxu0 0.0
        %4600 = vmatpush.msra.mxu0 %v4573
        %4601 = vmatpush.msra.mxu0 %v4572
        %4602 = vmatpush.msra.mxu0 %v4571
        %4603 = vmatpush.msra.mxu0 %v4570
        %4604 = vmatmul.f32.gmra.mxu0 %v4582
        %v4605 = vpop.f32.mrf.mxu0
        %v4606 = vadd.f32 0.0, %v4605
        %4607 = vmatmul.f32.gmra.mxu0 %v4584
        %v4608 = vpop.f32.mrf.mxu0
        %v4609 = vadd.f32 0.0, %v4608
        %4610 = vmatmul.f32.gmra.mxu0 %v4586
        %v4611 = vpop.f32.mrf.mxu0
        %v4612 = vadd.f32 0.0, %v4611
        %4613 = vdwg.mxu0
        %v4614 = vadd.f32 %v4566, %v4606
        %v4615 = vadd.f32 %v4567, %v4609
        %v4616 = vadd.f32 %v4568, %v4612
        %s4617 = scalar_lea.vmem %s7, 224
        %v4618 = vld [vmem:[%s4617] sm:$0xff]
        %v4619 = vld [vmem:[%s4617 + $0x8] sm:$0xff]
        %v4620 = vld [vmem:[%s4617 + $0x10] sm:$0xff]
        %v4621 = vld [vmem:[%s4617 + $0x18] sm:$0xff]
        %v4622 = vrot.slane %v4299, 5
        %v4623 = vrot.slane %v4302, 5
        %v4624 = vsel %vm2229, %v4622, %v4623
        %v4625 = vrot.slane %v4305, 5
        %v4626 = vsel %vm2229, %v4623, %v4625
        %v4627 = vrot.slane %v4308, 5
        %v4628 = vsel %vm2229, %v4625, %v4627
        %v4629 = vsel %vm4327, %v4624, 0
        %v4631 = vsel %vm4327, %v4626, 0
        %v4633 = vsel %vm4327, %v4628, 0
        %4635 = vmatpush.msra.mxu0 0.0
        %4636 = vmatpush.msra.mxu0 0.0
        %4637 = vmatpush.msra.mxu0 0.0
        %4638 = vmatpush.msra.mxu0 0.0
        %4639 = vmatpush.msra.mxu0 0.0
        %4640 = vmatpush.msra.mxu0 0.0
        %4641 = vmatpush.msra.mxu0 0.0
        %4642 = vmatpush.msra.mxu0 0.0
        %4643 = vmatpush.msra.mxu0 0.0
        %4644 = vmatpush.msra.mxu0 0.0
        %4645 = vmatpush.msra.mxu0 0.0
        %4646 = vmatpush.msra.mxu0 0.0
        %4647 = vmatpush.msra.mxu0 %v4621
        %4648 = vmatpush.msra.mxu0 %v4620
        %4649 = vmatpush.msra.mxu0 %v4619
        %4650 = vmatpush.msra.mxu0 %v4618
        %4651 = vmatmul.f32.gmra.mxu0 %v4629
        %v4652 = vpop.f32.mrf.mxu0
        %v4653 = vadd.f32 0.0, %v4652
        %4654 = vmatmul.f32.gmra.mxu0 %v4631
        %v4655 = vpop.f32.mrf.mxu0
        %v4656 = vadd.f32 0.0, %v4655
        %4657 = vmatmul.f32.gmra.mxu0 %v4633
        %v4658 = vpop.f32.mrf.mxu0
        %v4659 = vadd.f32 0.0, %v4658
        %4660 = vdwg.mxu0
        %v4661 = vadd.f32 %v4614, %v4653
        %v4662 = vadd.f32 %v4615, %v4656
        %v4663 = vadd.f32 %v4616, %v4659
        %s4664 = scalar_lea.vmem %s7, 256
        %v4665 = vld [vmem:[%s4664] sm:$0xff]
        %v4666 = vld [vmem:[%s4664 + $0x8] sm:$0xff]
        %v4667 = vld [vmem:[%s4664 + $0x10] sm:$0xff]
        %v4668 = vld [vmem:[%s4664 + $0x18] sm:$0xff]
        %v4669 = vrot.slane %v4308, 6
        %v4670 = vsel %vm2454, %v4448, %v4669
        %v4671 = vsel %vm4327, %v4670, 0
        %4673 = vmatpush.msra.mxu0 0.0
        %4674 = vmatpush.msra.mxu0 0.0
        %4675 = vmatpush.msra.mxu0 0.0
        %4676 = vmatpush.msra.mxu0 0.0
        %4677 = vmatpush.msra.mxu0 0.0
        %4678 = vmatpush.msra.mxu0 0.0
        %4679 = vmatpush.msra.mxu0 0.0
        %4680 = vmatpush.msra.mxu0 0.0
        %4681 = vmatpush.msra.mxu0 0.0
        %4682 = vmatpush.msra.mxu0 0.0
        %4683 = vmatpush.msra.mxu0 0.0
        %4684 = vmatpush.msra.mxu0 0.0
        %4685 = vmatpush.msra.mxu0 %v4668
        %4686 = vmatpush.msra.mxu0 %v4667
        %4687 = vmatpush.msra.mxu0 %v4666
        %4688 = vmatpush.msra.mxu0 %v4665
        %4689 = vmatmul.f32.gmra.mxu0 %v4452
        %v4690 = vpop.f32.mrf.mxu0
        %v4691 = vadd.f32 0.0, %v4690
        %4692 = vmatmul.f32.gmra.mxu0 %v4454
        %v4693 = vpop.f32.mrf.mxu0
        %v4694 = vadd.f32 0.0, %v4693
        %4695 = vmatmul.f32.gmra.mxu0 %v4671
        %v4696 = vpop.f32.mrf.mxu0
        %v4697 = vadd.f32 0.0, %v4696
        %4698 = vdwg.mxu0
        %v4699 = vadd.f32 %v4661, %v4691
        %v4700 = vadd.f32 %v4662, %v4694
        %v4701 = vadd.f32 %v4663, %v4697
        %v4702 = vld [vmem:[%s8] sm:$0x1]
        %v4704 = vperm.slane %v4702, 0
        %v4706 = vmul.f32 %v4699, %v4704
        %v4707 = vmul.f32 %v4700, %v4704
        %v4708 = vmul.f32 %v4701, %v4704
        %v4709 = vld [vmem:[%s9] sm:$0x1]
        %v4711 = vperm.slane %v4709, 0
        %v4713 = vadd.f32 %v4706, %v4711
        %v4714 = vadd.f32 %v4707, %v4711
        %v4715 = vadd.f32 %v4708, %v4711
        %v4716 = vmax.f32 %v4713, 0.0
        %v4717 = vmax.f32 %v4714, 0.0
        %v4718 = vmax.f32 %v4715, 0.0
        %v4719 = vld [vmem:[%s12] sm:$0x1]
        %vm4720 = vcmask 179200
        %v4722 = vsel %vm4720, %v4719, 0
        %v4725 = vsel %vm1087, %v4718, 0
        %4727 = vmatpush.msra.mxu0 0.0
        %4728 = vmatpush.msra.mxu0 0.0
        %4729 = vmatpush.msra.mxu0 0.0
        %4730 = vmatpush.msra.mxu0 0.0
        %4731 = vmatpush.msra.mxu0 0.0
        %4732 = vmatpush.msra.mxu0 0.0
        %4733 = vmatpush.msra.mxu0 0.0
        %4734 = vmatpush.msra.mxu0 0.0
        %4735 = vmatpush.msra.mxu0 0.0
        %4736 = vmatpush.msra.mxu0 0.0
        %4737 = vmatpush.msra.mxu0 0.0
        %4738 = vmatpush.msra.mxu0 0.0
        %4739 = vmatpush.msra.mxu0 0.0
        %4740 = vmatpush.msra.mxu0 %v4725
        %4741 = vmatpush.msra.mxu0 %v4717
        %4742 = vmatpush.msra.mxu0 %v4716
        %4743 = vmatmul.f32.gmra.mxu0 %v4722
        %v4744 = vpop.f32.mrf.mxu0
        %v4745 = vadd.f32 0.0, %v4744
        %4746 = vdwg.mxu0
        %v4747 = vld [vmem:[%s13] sm:$0xff]
        %v4748 = vld [vmem:[%s13 + $0x8] sm:$0xff]
        %v4749 = vld [vmem:[%s13 + $0x10] sm:$0xff]
        %v4750 = vld [vmem:[%s13 + $0x18] sm:$0xff]
        %v4751 = vld [vmem:[%s13 + $0x20] sm:$0xff]
        %v4752 = vld [vmem:[%s13 + $0x28] sm:$0xff]
        %v4753 = vld [vmem:[%s13 + $0x30] sm:$0xff]
        %v4754 = vld [vmem:[%s13 + $0x38] sm:$0xff]
        %v4755 = vld [vmem:[%s14] sm:$0x1]
        %vm4756 = vcmask 523264
        %v4758 = vsel %vm4756, %v4745, 0
        %4760 = vmatpush.msra.mxu0 0.0
        %4761 = vmatpush.msra.mxu0 0.0
        %4762 = vmatpush.msra.mxu0 0.0
        %4763 = vmatpush.msra.mxu0 0.0
        %4764 = vmatpush.msra.mxu0 0.0
        %4765 = vmatpush.msra.mxu0 0.0
        %4766 = vmatpush.msra.mxu0 0.0
        %4767 = vmatpush.msra.mxu0 0.0
        %4768 = vmatpush.msra.mxu0 %v4754
        %4769 = vmatpush.msra.mxu0 %v4753
        %4770 = vmatpush.msra.mxu0 %v4752
        %4771 = vmatpush.msra.mxu0 %v4751
        %4772 = vmatpush.msra.mxu0 %v4750
        %4773 = vmatpush.msra.mxu0 %v4749
        %4774 = vmatpush.msra.mxu0 %v4748
        %4775 = vmatpush.msra.mxu0 %v4747
        %4776 = vmatmul.f32.gmra.mxu0 %v4758
        %v4777 = vpop.f32.mrf.mxu0
        %v4778 = vadd.f32 %v4755, %v4777
        %4779 = vdwg.mxu0
        %vm4780 = vcmask 8192
        %4781 = vst.msk [vmem:[%s486] sm:$0x1] %vm4780, %v4778
        %s4782 = sand.u32 %s357, 1
        %s4783 = scalar_lea.sflag [#allocation3], %s4782
        %s4784 = sand.u32 %s357, 1
        %s4785 = scalar_lea.vmem [#allocation2], %s4784
        // Predicated region
        $region81: #{simple_cnn_forward.1} parent=79 // pred_check
          %p4786 = pneg %p367
        $region82: #{simple_cnn_forward.1} parent=79 // pred_check_branch
          %4788 = sbr.rel (%p4786) target = $region84
        $region83: #{simple_cnn_forward.1} parent=79 // pred_region
          %4790 = vsyncadd %s4783, 0
          %s4791 = scalar_lea.hbm %s15, %s29
          %s4793 = sshll.u32 %s4785, 4
          %s4794 = int_to_ptr.vmem [resolvable:$true] %s4793
          %s4795 = sshll.u32 %s4791, 4
          %s4796 = int_to_ptr.hbm [resolvable:$true] %s4795
          %4798 = dma.vmem_to_hbm [thread:$0]  %s4794, 16, %s4796, %s4783
        $region84: #{simple_cnn_forward.1} parent=79 // pred_fallthru
          _
      $region80: #{simple_cnn_forward.1} parent=5 // pred_fallthru
        _
      %p4799 = scmp.le.s32.totalorder 2, %s24
      // Predicated region
      $region85: #{simple_cnn_forward.1} parent=5 // pred_check
        %p4800 = pneg %p4799
      $region86: #{simple_cnn_forward.1} parent=5 // pred_check_branch
        %4802 = sbr.rel (%p4800) target = $region88
      $region87: #{simple_cnn_forward.1} parent=5 // pred_region
        %s4803 = ssub.s32 %s24, 2
        // Predicated region
        $region89: #{simple_cnn_forward.1} parent=87 // pred_check
          %p4804 = pneg %p373
        $region90: #{simple_cnn_forward.1} parent=87 // pred_check_branch
          %4806 = sbr.rel (%p4804) target = $region92
        $region91: #{simple_cnn_forward.1} parent=87 // pred_region
          %s4807 = sand.u32 %s358, 1
          %s4808 = scalar_lea.sflag [#allocation3], %s4807
          %s4809 = sand.u32 %s358, 1
          %s4810 = scalar_lea.vmem [#allocation2], %s4809
          %4812 = dma.done %s4808, 16
        $region92: #{simple_cnn_forward.1} parent=87 // pred_fallthru
          _
      $region88: #{simple_cnn_forward.1} parent=5 // pred_fallthru
        _
    $region6: #{simple_cnn_forward.1} parent=1 // loop_footer
      %s28 = sadd.s32 1, %s24
    $region7: #{simple_cnn_forward.1} parent=1 // loop_footer_branch
      %23 = sbr.rel target = $region3
    $region8: #{simple_cnn_forward.1} parent=1 // loop_exit
      _
    %4813 = vsyncpa [#allocation3], 1
    %s4814 = scalar_lea.sflag [#allocation3], 1
    %4815 = vsyncpa %s4814, 1

</llo_original>
